<compile_context>
chip_gen: v6e
topology: v6e:2x2x1
jax: 0.10.0
libtpu: 0.0.40
codegen_flags: <defaults>
</compile_context>

<pallas_src>
import functools

import jax
import jax.numpy as jnp
from jax import lax
from jax.experimental import pallas as pl
from jax.experimental.pallas import tpu as pltpu


_PAD = 128                      # one lane tile of zero halo on each side of H*W
_TAPS = tuple((dy, dx) for dy in (-1, 0, 1) for dx in (-1, 0, 1))


def _dense_layer_kernel(*args, H, W, n_chunks, c_mid, fuse_taps, compute_dtype):
    """Fused BN1+ReLU + 1x1conv(+BN2 folded) + ReLU + 3x3conv for ONE batch element.

    args = x_0..x_{k-1}, s1_0.., b1_0.., w1s_0.., b2, w2t, o, tpad[, slab]
      x_i   : (1, c_i, H*W)   input chunk, channels on sublanes, pixels on lanes
      s1/b1 : (c_i, 1)        folded BN1 scale / bias for that chunk (f32)
      w1s_i : (Cmid, c_i)     1x1 conv weight chunk with BN2 scale pre-folded
      b2    : (Cmid, 1)       folded BN2 bias (f32)
      w2t   : (Cout, 9*Cmid)  3x3 conv weight, taps flattened on K
      o     : (1, Cout, H*W)  output (lane-dense, NCHW-major), f32
      tpad  : (Cmid, H*W+2*_PAD) VMEM staging buffer with zero halo
      slab  : (9*Cmid, H*W)   VMEM tap slab (only when fuse_taps)
    """
    HW = H * W
    x_refs = args[0:n_chunks]
    s1_refs = args[n_chunks:2 * n_chunks]
    b1_refs = args[2 * n_chunks:3 * n_chunks]
    w1s_refs = args[3 * n_chunks:4 * n_chunks]
    b2_ref, w2t_ref, o_ref, tpad_ref = args[4 * n_chunks:4 * n_chunks + 4]
    slab_ref = args[4 * n_chunks + 4] if fuse_taps else None

    # ---- BN1 (folded) + ReLU + 1x1 conv, accumulated per dense-block chunk ----
    acc = jnp.zeros((c_mid, HW), jnp.float32)
    for i in range(n_chunks):
        x = x_refs[i][0]                                           # (c_i, HW)
        h = jnp.maximum(x * s1_refs[i][...] + b1_refs[i][...], 0.0)   # f32 VPU math
        acc = acc + jnp.dot(w1s_refs[i][...], h.astype(compute_dtype),
                            preferred_element_type=jnp.float32)
    # BN2 (scale folded into w1s) bias + ReLU; cast once for the 3x3 stage.
    t = jnp.maximum(acc + b2_ref[...], 0.0).astype(compute_dtype)     # (Cmid, HW)

    # ---- 3x3 conv, padding=1 ----------------------------------------------
    # Stage t inside a zero-padded scratch: every tap becomes a shifted lane
    # window; row under/overflow reads the zero halo, so only the column masks
    # (dx = +-1) are needed.  (Halo is re-zeroed every step: with a "parallel"
    # batch axis each core owns its own scratch, so no init-once trick.)
    zeros_pad = jnp.zeros((c_mid, _PAD), compute_dtype)
    tpad_ref[:, :_PAD] = zeros_pad
    tpad_ref[:, _PAD:_PAD + HW] = t
    tpad_ref[:, _PAD + HW:] = zeros_pad

    col = lax.broadcasted_iota(jnp.int32, (1, HW), 1) % W
    col_mask = {-1: col >= 1, 0: None, 1: col <= W - 2}               # hoisted
    zero = jnp.zeros((), compute_dtype)

    def tap(dy, dx):
        start = _PAD + dy * W + dx
        shifted = tpad_ref[:, start:start + HW]                       # (Cmid, HW)
        m = col_mask[dx]
        return shifted if m is None else jnp.where(m, shifted, zero)

    if fuse_taps:
        # Single K = 9*Cmid matmul; taps staged in a VMEM slab via sliced
        # stores (no register-level concatenate copy).  MRF-friendly (v5e/v6e).
        for k, (dy, dx) in enumerate(_TAPS):
            slab_ref[k * c_mid:(k + 1) * c_mid, :] = tap(dy, dx)
        out = jnp.dot(w2t_ref[...], slab_ref[...],
                      preferred_element_type=jnp.float32)
    else:
        # Large Cmid (v7x / 64 MiB VMEM): nine accumulated dots, no 9*Cmid slab.
        out = jnp.zeros((o_ref.shape[1], HW), jnp.float32)
        for k, (dy, dx) in enumerate(_TAPS):
            out = out + jnp.dot(w2t_ref[:, k * c_mid:(k + 1) * c_mid], tap(dy, dx),
                                preferred_element_type=jnp.float32)

    o_ref[0] = out.astype(o_ref.dtype)


def dense_layer_forward(inputs, params, *, compute_dtype=jnp.bfloat16):
    """_DenseLayer forward. `inputs` is an NCHW tensor or a list of NCHW tensors
    (the torch.cat(dim=1) of a dense block). Returns NCHW float32."""
    if not isinstance(inputs, (list, tuple)):
        inputs = [inputs]
    N, _, H, W = inputs[0].shape
    HW = H * W
    assert W + 1 <= _PAD, "zero halo must cover a +/-1 row shift"
    chunk_channels = tuple(int(x.shape[1]) for x in inputs)
    c_in = sum(chunk_channels)
    c_mid = params['w1'].shape[0]
    c_out = params['w2'].shape[0]
    assert params['w1'].shape[1] == c_in

    s1 = params['s1'].reshape(c_in, 1)
    b1 = params['b1'].reshape(c_in, 1)
    # Fold BN2's scale into the 1x1 conv rows: bn2(W1 @ h) = (s2*W1) @ h + b2.
    w1s = params['w1'] * params['s2'][:, None]                      # (Cmid, Cin)
    b2 = params['b2'].reshape(c_mid, 1)
    # 3x3 weight: (Cout, Cmid, 3, 3) -> (Cout, ky, kx, Cmid) -> (Cout, 9*Cmid),
    # matching the (dy, dx, cmid) tap ordering in the kernel.
    w2t = jnp.transpose(params['w2'], (0, 2, 3, 1)).reshape(c_out, 9 * c_mid)
    w2t = w2t.astype(compute_dtype)

    # Per-chunk operands: no jnp.concatenate HBM round-trip for list inputs.
    xs, s1s, b1s, w1ss = [], [], [], []
    c0 = 0
    for x_i, ci in zip(inputs, chunk_channels):
        xs.append(x_i.reshape(N, ci, HW).astype(compute_dtype))     # NCHW: free reshape
        s1s.append(s1[c0:c0 + ci])
        b1s.append(b1[c0:c0 + ci])
        w1ss.append(w1s[:, c0:c0 + ci].astype(compute_dtype))
        c0 += ci

    n_chunks = len(inputs)
    # Small Cmid: one fused K=9*Cmid matmul via a VMEM slab (v5e/v6e friendly).
    # Cmid >= 128: nine accumulated dots (saves the 9*Cmid*HW slab; v7x friendly).
    fuse_taps = c_mid < 128

    in_specs = (
        [pl.BlockSpec((1, ci, HW), lambda n: (n, 0, 0)) for ci in chunk_channels]
        + [pl.BlockSpec((ci, 1), lambda n: (0, 0)) for ci in chunk_channels]
        + [pl.BlockSpec((ci, 1), lambda n: (0, 0)) for ci in chunk_channels]
        + [pl.BlockSpec((c_mid, ci), lambda n: (0, 0)) for ci in chunk_channels]
        + [pl.BlockSpec((c_mid, 1), lambda n: (0, 0)),
           pl.BlockSpec((c_out, 9 * c_mid), lambda n: (0, 0))]
    )

    scratch_shapes = [pltpu.VMEM((c_mid, HW + 2 * _PAD), compute_dtype)]
    if fuse_taps:
        scratch_shapes.append(pltpu.VMEM((9 * c_mid, HW), compute_dtype))

    # VMEM budget: double-buffered blocks + scratch + live intermediates + margin.
    csize = jnp.dtype(compute_dtype).itemsize
    block_bytes = (c_in * HW * csize + c_out * HW * 4
                   + (c_mid * c_in + 9 * c_mid * c_out) * csize
                   + (2 * c_in + c_mid) * 4)
    scratch_bytes = c_mid * (HW + 2 * _PAD) * csize
    if fuse_taps:
        scratch_bytes += 9 * c_mid * HW * csize
    live_bytes = (c_mid + c_out) * HW * 4 + 2 * c_mid * HW * csize
    vmem_limit = int(min(64 << 20,
                         max(32 << 20,
                             2 * block_bytes + scratch_bytes + live_bytes + (8 << 20))))

    out = pl.pallas_call(
        functools.partial(_dense_layer_kernel, H=H, W=W, n_chunks=n_chunks,
                          c_mid=c_mid, fuse_taps=fuse_taps,
                          compute_dtype=compute_dtype),
        out_shape=jax.ShapeDtypeStruct((N, c_out, HW), jnp.float32),
        grid_spec=pltpu.PrefetchScalarGridSpec(
            num_scalar_prefetch=0,
            grid=(N,),
            in_specs=in_specs,
            out_specs=pl.BlockSpec((1, c_out, HW), lambda n: (n, 0, 0)),
            scratch_shapes=scratch_shapes),
        compiler_params=pltpu.CompilerParams(
            dimension_semantics=("parallel",),
            vmem_limit_bytes=vmem_limit),
    )(*xs, *s1s, *b1s, *w1ss, b2, w2t)

    return out.reshape(N, c_out, H, W)                               # free reshape, NCHW


def make_params(key, num_input_features, growth_rate, bn_size):
    """Deterministic synthetic parameters in torch-style layouts (BN pre-folded)."""
    c_in = num_input_features
    c_mid = bn_size * growth_rate
    c_out = growth_rate
    ks = jax.random.split(key, 10)
    eps = 1e-5  # PyTorch BatchNorm2d default

    def bn_fold(kg, kb, km, kv, c):
        gamma = 1.0 + 0.1 * jax.random.normal(kg, (c,), jnp.float32)
        beta = 0.1 * jax.random.normal(kb, (c,), jnp.float32)
        running_mean = 0.1 * jax.random.normal(km, (c,), jnp.float32)
        running_var = jax.random.uniform(kv, (c,), jnp.float32, 0.5, 1.5)
        scale = gamma * jax.lax.rsqrt(running_var + eps)
        bias = beta - running_mean * scale
        return scale, bias

    s1, b1 = bn_fold(ks[0], ks[1], ks[2], ks[3], c_in)
    s2, b2 = bn_fold(ks[4], ks[5], ks[6], ks[7], c_mid)
    w1 = 0.1 * jax.random.normal(ks[8], (c_mid, c_in), jnp.float32)        # 1x1 conv
    w2 = 0.1 * jax.random.normal(ks[9], (c_out, c_mid, 3, 3), jnp.float32)  # 3x3 conv
    return dict(s1=s1, b1=b1, w1=w1, s2=s2, b2=b2, w2=w2)


def reference_forward(x_nchw, p):
    """Pure-JAX reference (same math, no Pallas) for correctness checking."""
    x = jnp.transpose(x_nchw, (0, 2, 3, 1))                    # NHWC
    h = jax.nn.relu(x * p['s1'] + p['b1'])
    bott = jnp.einsum('nhwc,mc->nhwm', h, p['w1'])
    t = jax.nn.relu(bott * p['s2'] + p['b2'])
    w2_hwio = jnp.transpose(p['w2'], (2, 3, 1, 0))             # (3,3,Cmid,Cout)
    out = lax.conv_general_dilated(
        t, w2_hwio, window_strides=(1, 1), padding='SAME',
        dimension_numbers=('NHWC', 'HWIO', 'NHWC'))
    return jnp.transpose(out, (0, 3, 1, 2))


if __name__ == "__main__":
    # Make the f32 reference and the f32 kernel path numerically comparable.
    jax.config.update("jax_default_matmul_precision", "highest")

    key = jax.random.PRNGKey(0)
    k1, k2, k3, kp1, kp2 = jax.random.split(key, 5)

    # --- Config A: _DenseLayer(8, growth_rate=8, bn_size=4, drop_rate=0.0),
    #     dense-block style LIST input (two 4-channel feature maps). -----------
    N, H, W = 2, 16, 16
    growth_rate, bn_size, num_input_features = 8, 4, 8
    xa = jax.random.normal(k1, (N, 4, H, W), jnp.float32)
    xb = jax.random.normal(k2, (N, 4, H, W), jnp.float32)
    params_a = make_params(kp1, num_input_features, growth_rate, bn_size)
    ref_a = reference_forward(jnp.concatenate([xa, xb], axis=1), params_a)

    # f32 compute path: tight check of the fused kernel math (slab matmul path).
    out_f32 = jax.block_until_ready(
        dense_layer_forward([xa, xb], params_a, compute_dtype=jnp.float32))
    assert out_f32.shape == (N, growth_rate, H, W), out_f32.shape
    assert bool(jnp.allclose(out_f32, ref_a, atol=5e-3, rtol=5e-3)), "f32 mismatch"

    # bf16 activation/weight path (the recommended fast path): looser tolerance.
    out_bf16 = jax.block_until_ready(
        dense_layer_forward([xa, xb], params_a, compute_dtype=jnp.bfloat16))
    rel_a = float(jnp.linalg.norm(out_bf16 - ref_a) / jnp.linalg.norm(ref_a))
    assert rel_a < 3e-2, f"bf16 mismatch (rel l2 = {rel_a})"

    # --- Config B: larger bottleneck (Cmid=128) exercises the 9-tap
    #     accumulation path (no 9*Cmid slab), single-tensor input. -------------
    xc = jax.random.normal(k3, (1, 64, H, W), jnp.float32)
    params_b = make_params(kp2, 64, 32, 4)
    ref_b = reference_forward(xc, params_b)
    out_b = jax.block_until_ready(
        dense_layer_forward(xc, params_b, compute_dtype=jnp.bfloat16))
    assert out_b.shape == (1, 32, H, W), out_b.shape
    rel_b = float(jnp.linalg.norm(out_b - ref_b) / jnp.linalg.norm(ref_b))
    assert rel_b < 3e-2, f"bf16 (tap-accum) mismatch (rel l2 = {rel_b})"

    print("KERNEL_OK")
</pallas_src>

<mosaic_0001>
module attributes {stable_mosaic.version = 11 : i64} {
  func.func @_dense_layer_kernel(%arg0: i32, %arg1: memref<1x4x256xf32, #tpu.memory_space<vmem>>, %arg2: memref<1x4x256xf32, #tpu.memory_space<vmem>>, %arg3: memref<4x1xf32, #tpu.memory_space<vmem>>, %arg4: memref<4x1xf32, #tpu.memory_space<vmem>>, %arg5: memref<4x1xf32, #tpu.memory_space<vmem>>, %arg6: memref<4x1xf32, #tpu.memory_space<vmem>>, %arg7: memref<32x4xf32, #tpu.memory_space<vmem>>, %arg8: memref<32x4xf32, #tpu.memory_space<vmem>>, %arg9: memref<32x1xf32, #tpu.memory_space<vmem>>, %arg10: memref<8x288xf32, #tpu.memory_space<vmem>>, %arg11: memref<1x8x256xf32, #tpu.memory_space<vmem>>, %arg12: memref<32x512xf32, #tpu.memory_space<vmem>>, %arg13: memref<288x256xf32, #tpu.memory_space<vmem>>) attributes {dimension_semantics = [#tpu.dimension_semantics<parallel>], iteration_bounds = array<i64: 2>, scalar_prefetch = 0 : i64, scratch_operands = 2 : i64, tpu.core_type = #tpu.core_type<tc>, window_params = [{transform_indices = @transform_0, window_bounds = array<i64: 1, 4, 256>}, {transform_indices = @transform_1, window_bounds = array<i64: 1, 4, 256>}, {pipeline_mode = #tpu.pipeline_mode<synchronous>, transform_indices = @transform_2, window_bounds = array<i64: 4, 1>}, {pipeline_mode = #tpu.pipeline_mode<synchronous>, transform_indices = @transform_3, window_bounds = array<i64: 4, 1>}, {pipeline_mode = #tpu.pipeline_mode<synchronous>, transform_indices = @transform_4, window_bounds = array<i64: 4, 1>}, {pipeline_mode = #tpu.pipeline_mode<synchronous>, transform_indices = @transform_5, window_bounds = array<i64: 4, 1>}, {pipeline_mode = #tpu.pipeline_mode<synchronous>, transform_indices = @transform_6, window_bounds = array<i64: 32, 4>}, {pipeline_mode = #tpu.pipeline_mode<synchronous>, transform_indices = @transform_7, window_bounds = array<i64: 32, 4>}, {pipeline_mode = #tpu.pipeline_mode<synchronous>, transform_indices = @transform_8, window_bounds = array<i64: 32, 1>}, {pipeline_mode = #tpu.pipeline_mode<synchronous>, transform_indices = @transform_9, window_bounds = array<i64: 8, 288>}, {transform_indices = @transform_10, window_bounds = array<i64: 1, 8, 256>}]} {
    %cst = arith.constant 0.000000e+00 : f32
    %0 = vector.broadcast %cst : f32 to vector<32x256xf32>
    %c0 = arith.constant 0 : index
    %c0_0 = arith.constant 0 : index
    %c0_1 = arith.constant 0 : index
    %1 = vector.load %arg1[%c0, %c0_0, %c0_1] : memref<1x4x256xf32, #tpu.memory_space<vmem>>, vector<1x4x256xf32>
    %2 = vector.shape_cast %1 : vector<1x4x256xf32> to vector<4x256xf32>
    %c0_2 = arith.constant 0 : index
    %c0_3 = arith.constant 0 : index
    %3 = vector.load %arg3[%c0_2, %c0_3] : memref<4x1xf32, #tpu.memory_space<vmem>>, vector<4x1xf32>
    %4 = vector.broadcast %3 : vector<4x1xf32> to vector<4x256xf32>
    %5 = arith.mulf %2, %4 : vector<4x256xf32>
    %c0_4 = arith.constant 0 : index
    %c0_5 = arith.constant 0 : index
    %6 = vector.load %arg5[%c0_4, %c0_5] : memref<4x1xf32, #tpu.memory_space<vmem>>, vector<4x1xf32>
    %7 = vector.broadcast %6 : vector<4x1xf32> to vector<4x256xf32>
    %8 = arith.addf %5, %7 : vector<4x256xf32>
    %cst_6 = arith.constant 0.000000e+00 : f32
    %9 = vector.broadcast %cst_6 : f32 to vector<4x256xf32>
    %10 = arith.maximumf %8, %9 : vector<4x256xf32>
    %c0_7 = arith.constant 0 : index
    %c0_8 = arith.constant 0 : index
    %11 = vector.load %arg7[%c0_7, %c0_8] : memref<32x4xf32, #tpu.memory_space<vmem>>, vector<32x4xf32>
    %cst_9 = arith.constant dense<0.000000e+00> : vector<32x256xf32>
    %12 = tpu.matmul %11, %10, %cst_9 {dimension_numbers = #tpu.dot_dimension_numbers<[1], [0], [0], [1], [0, 0, 1, 1], [], []>, precision = #tpu.contract_precision<fp32>} : vector<32x4xf32>, vector<4x256xf32>, vector<32x256xf32> -> vector<32x256xf32>
    %13 = arith.addf %0, %12 : vector<32x256xf32>
    %c0_10 = arith.constant 0 : index
    %c0_11 = arith.constant 0 : index
    %c0_12 = arith.constant 0 : index
    %14 = vector.load %arg2[%c0_10, %c0_11, %c0_12] : memref<1x4x256xf32, #tpu.memory_space<vmem>>, vector<1x4x256xf32>
    %15 = vector.shape_cast %14 : vector<1x4x256xf32> to vector<4x256xf32>
    %c0_13 = arith.constant 0 : index
    %c0_14 = arith.constant 0 : index
    %16 = vector.load %arg4[%c0_13, %c0_14] : memref<4x1xf32, #tpu.memory_space<vmem>>, vector<4x1xf32>
    %17 = vector.broadcast %16 : vector<4x1xf32> to vector<4x256xf32>
    %18 = arith.mulf %15, %17 : vector<4x256xf32>
    %c0_15 = arith.constant 0 : index
    %c0_16 = arith.constant 0 : index
    %19 = vector.load %arg6[%c0_15, %c0_16] : memref<4x1xf32, #tpu.memory_space<vmem>>, vector<4x1xf32>
    %20 = vector.broadcast %19 : vector<4x1xf32> to vector<4x256xf32>
    %21 = arith.addf %18, %20 : vector<4x256xf32>
    %cst_17 = arith.constant 0.000000e+00 : f32
    %22 = vector.broadcast %cst_17 : f32 to vector<4x256xf32>
    %23 = arith.maximumf %21, %22 : vector<4x256xf32>
    %c0_18 = arith.constant 0 : index
    %c0_19 = arith.constant 0 : index
    %24 = vector.load %arg8[%c0_18, %c0_19] : memref<32x4xf32, #tpu.memory_space<vmem>>, vector<32x4xf32>
    %cst_20 = arith.constant dense<0.000000e+00> : vector<32x256xf32>
    %25 = tpu.matmul %24, %23, %cst_20 {dimension_numbers = #tpu.dot_dimension_numbers<[1], [0], [0], [1], [0, 0, 1, 1], [], []>, precision = #tpu.contract_precision<fp32>} : vector<32x4xf32>, vector<4x256xf32>, vector<32x256xf32> -> vector<32x256xf32>
    %26 = arith.addf %13, %25 : vector<32x256xf32>
    %c0_21 = arith.constant 0 : index
    %c0_22 = arith.constant 0 : index
    %27 = vector.load %arg9[%c0_21, %c0_22] : memref<32x1xf32, #tpu.memory_space<vmem>>, vector<32x1xf32>
    %28 = vector.broadcast %27 : vector<32x1xf32> to vector<32x256xf32>
    %29 = arith.addf %26, %28 : vector<32x256xf32>
    %cst_23 = arith.constant 0.000000e+00 : f32
    %30 = vector.broadcast %cst_23 : f32 to vector<32x256xf32>
    %31 = arith.maximumf %29, %30 : vector<32x256xf32>
    %cst_24 = arith.constant 0.000000e+00 : f32
    %32 = vector.broadcast %cst_24 : f32 to vector<32x128xf32>
    %c0_25 = arith.constant 0 : index
    %c0_26 = arith.constant 0 : index
    %33 = vector.load %arg12[%c0_25, %c0_26] : memref<32x512xf32, #tpu.memory_space<vmem>>, vector<32x128xf32>
    tpu.vector_store %arg12[%c0_25, %c0_26], %32 {strides = array<i32>} : memref<32x512xf32, #tpu.memory_space<vmem>>, vector<32x128xf32>,
    %c0_27 = arith.constant 0 : index
    %c128 = arith.constant 128 : index
    %34 = vector.load %arg12[%c0_27, %c128] : memref<32x512xf32, #tpu.memory_space<vmem>>, vector<32x256xf32>
    tpu.vector_store %arg12[%c0_27, %c128], %31 {strides = array<i32>} : memref<32x512xf32, #tpu.memory_space<vmem>>, vector<32x256xf32>,
    %c0_28 = arith.constant 0 : index
    %c384 = arith.constant 384 : index
    %35 = vector.load %arg12[%c0_28, %c384] : memref<32x512xf32, #tpu.memory_space<vmem>>, vector<32x128xf32>
    tpu.vector_store %arg12[%c0_28, %c384], %32 {strides = array<i32>} : memref<32x512xf32, #tpu.memory_space<vmem>>, vector<32x128xf32>,
    %36 = tpu.iota {dimensions = array<i32: 1>} : vector<1x256xi32>
    %c16_i32 = arith.constant 16 : i32
    %c0_i32 = arith.constant 0 : i32
    %37 = arith.cmpi eq, %c16_i32, %c0_i32 : i32
    %c1_i32 = arith.constant 1 : i32
    %38 = arith.select %37, %c1_i32, %c16_i32 : i32
    %39 = vector.broadcast %38 : i32 to vector<1x256xi32>
    %40 = arith.remsi %36, %39 : vector<1x256xi32>
    %c0_i32_29 = arith.constant 0 : i32
    %41 = vector.broadcast %c0_i32_29 : i32 to vector<1x256xi32>
    %42 = arith.cmpi ne, %40, %41 : vector<1x256xi32>
    %c0_i32_30 = arith.constant 0 : i32
    %43 = vector.broadcast %c0_i32_30 : i32 to vector<1x256xi32>
    %44 = arith.cmpi slt, %40, %43 : vector<1x256xi32>
    %c0_i32_31 = arith.constant 0 : i32
    %45 = arith.cmpi slt, %38, %c0_i32_31 : i32
    %46 = vector.broadcast %45 : i1 to vector<1x256xi1>
    %47 = vector.broadcast %46 : vector<1x256xi1> to vector<1x256xi1>
    %48 = arith.xori %44, %47 : vector<1x256xi1>
    %49 = arith.andi %48, %42 : vector<1x256xi1>
    %50 = vector.broadcast %38 : i32 to vector<1x256xi32>
    %51 = arith.addi %40, %50 : vector<1x256xi32>
    %52 = arith.select %49, %51, %40 : vector<1x256xi1>, vector<1x256xi32>
    %c1_i32_32 = arith.constant 1 : i32
    %53 = vector.broadcast %c1_i32_32 : i32 to vector<1x256xi32>
    %54 = arith.cmpi sge, %52, %53 : vector<1x256xi32>
    %c14_i32 = arith.constant 14 : i32
    %55 = vector.broadcast %c14_i32 : i32 to vector<1x256xi32>
    %56 = arith.cmpi sle, %52, %55 : vector<1x256xi32>
    %c0_33 = arith.constant 0 : index
    %c111 = arith.constant 111 : index
    %57 = vector.load %arg12[%c0_33, %c111] : memref<32x512xf32, #tpu.memory_space<vmem>>, vector<32x256xf32>
    %cst_34 = arith.constant 0.000000e+00 : f32
    %58 = vector.shape_cast %54 : vector<1x256xi1> to vector<1x256xi1>
    %59 = vector.broadcast %58 : vector<1x256xi1> to vector<32x256xi1>
    %60 = vector.broadcast %cst_34 : f32 to vector<32x256xf32>
    %61 = arith.select %59, %57, %60 : vector<32x256xi1>, vector<32x256xf32>
    %c0_35 = arith.constant 0 : index
    %c0_36 = arith.constant 0 : index
    %62 = vector.load %arg13[%c0_35, %c0_36] : memref<288x256xf32, #tpu.memory_space<vmem>>, vector<32x256xf32>
    tpu.vector_store %arg13[%c0_35, %c0_36], %61 {strides = array<i32>} : memref<288x256xf32, #tpu.memory_space<vmem>>, vector<32x256xf32>,
    %c0_37 = arith.constant 0 : index
    %c112 = arith.constant 112 : index
    %63 = vector.load %arg12[%c0_37, %c112] : memref<32x512xf32, #tpu.memory_space<vmem>>, vector<32x256xf32>
    %c32 = arith.constant 32 : index
    %c0_38 = arith.constant 0 : index
    %64 = vector.load %arg13[%c32, %c0_38] : memref<288x256xf32, #tpu.memory_space<vmem>>, vector<32x256xf32>
    tpu.vector_store %arg13[%c32, %c0_38], %63 {strides = array<i32>} : memref<288x256xf32, #tpu.memory_space<vmem>>, vector<32x256xf32>,
    %c0_39 = arith.constant 0 : index
    %c113 = arith.constant 113 : index
    %65 = vector.load %arg12[%c0_39, %c113] : memref<32x512xf32, #tpu.memory_space<vmem>>, vector<32x256xf32>
    %cst_40 = arith.constant 0.000000e+00 : f32
    %66 = vector.shape_cast %56 : vector<1x256xi1> to vector<1x256xi1>
    %67 = vector.broadcast %66 : vector<1x256xi1> to vector<32x256xi1>
    %68 = vector.broadcast %cst_40 : f32 to vector<32x256xf32>
    %69 = arith.select %67, %65, %68 : vector<32x256xi1>, vector<32x256xf32>
    %c64 = arith.constant 64 : index
    %c0_41 = arith.constant 0 : index
    %70 = vector.load %arg13[%c64, %c0_41] : memref<288x256xf32, #tpu.memory_space<vmem>>, vector<32x256xf32>
    tpu.vector_store %arg13[%c64, %c0_41], %69 {strides = array<i32>} : memref<288x256xf32, #tpu.memory_space<vmem>>, vector<32x256xf32>,
    %c0_42 = arith.constant 0 : index
    %c127 = arith.constant 127 : index
    %71 = vector.load %arg12[%c0_42, %c127] : memref<32x512xf32, #tpu.memory_space<vmem>>, vector<32x256xf32>
    %cst_43 = arith.constant 0.000000e+00 : f32
    %72 = vector.shape_cast %54 : vector<1x256xi1> to vector<1x256xi1>
    %73 = vector.broadcast %72 : vector<1x256xi1> to vector<32x256xi1>
    %74 = vector.broadcast %cst_43 : f32 to vector<32x256xf32>
    %75 = arith.select %73, %71, %74 : vector<32x256xi1>, vector<32x256xf32>
    %c96 = arith.constant 96 : index
    %c0_44 = arith.constant 0 : index
    %76 = vector.load %arg13[%c96, %c0_44] : memref<288x256xf32, #tpu.memory_space<vmem>>, vector<32x256xf32>
    tpu.vector_store %arg13[%c96, %c0_44], %75 {strides = array<i32>} : memref<288x256xf32, #tpu.memory_space<vmem>>, vector<32x256xf32>,
    %c0_45 = arith.constant 0 : index
    %c128_46 = arith.constant 128 : index
    %77 = vector.load %arg12[%c0_45, %c128_46] : memref<32x512xf32, #tpu.memory_space<vmem>>, vector<32x256xf32>
    %c128_47 = arith.constant 128 : index
    %c0_48 = arith.constant 0 : index
    %78 = vector.load %arg13[%c128_47, %c0_48] : memref<288x256xf32, #tpu.memory_space<vmem>>, vector<32x256xf32>
    tpu.vector_store %arg13[%c128_47, %c0_48], %77 {strides = array<i32>} : memref<288x256xf32, #tpu.memory_space<vmem>>, vector<32x256xf32>,
    %c0_49 = arith.constant 0 : index
    %c129 = arith.constant 129 : index
    %79 = vector.load %arg12[%c0_49, %c129] : memref<32x512xf32, #tpu.memory_space<vmem>>, vector<32x256xf32>
    %cst_50 = arith.constant 0.000000e+00 : f32
    %80 = vector.shape_cast %56 : vector<1x256xi1> to vector<1x256xi1>
    %81 = vector.broadcast %80 : vector<1x256xi1> to vector<32x256xi1>
    %82 = vector.broadcast %cst_50 : f32 to vector<32x256xf32>
    %83 = arith.select %81, %79, %82 : vector<32x256xi1>, vector<32x256xf32>
    %c160 = arith.constant 160 : index
    %c0_51 = arith.constant 0 : index
    %84 = vector.load %arg13[%c160, %c0_51] : memref<288x256xf32, #tpu.memory_space<vmem>>, vector<32x256xf32>
    tpu.vector_store %arg13[%c160, %c0_51], %83 {strides = array<i32>} : memref<288x256xf32, #tpu.memory_space<vmem>>, vector<32x256xf32>,
    %c0_52 = arith.constant 0 : index
    %c143 = arith.constant 143 : index
    %85 = vector.load %arg12[%c0_52, %c143] : memref<32x512xf32, #tpu.memory_space<vmem>>, vector<32x256xf32>
    %cst_53 = arith.constant 0.000000e+00 : f32
    %86 = vector.shape_cast %54 : vector<1x256xi1> to vector<1x256xi1>
    %87 = vector.broadcast %86 : vector<1x256xi1> to vector<32x256xi1>
    %88 = vector.broadcast %cst_53 : f32 to vector<32x256xf32>
    %89 = arith.select %87, %85, %88 : vector<32x256xi1>, vector<32x256xf32>
    %c192 = arith.constant 192 : index
    %c0_54 = arith.constant 0 : index
    %90 = vector.load %arg13[%c192, %c0_54] : memref<288x256xf32, #tpu.memory_space<vmem>>, vector<32x256xf32>
    tpu.vector_store %arg13[%c192, %c0_54], %89 {strides = array<i32>} : memref<288x256xf32, #tpu.memory_space<vmem>>, vector<32x256xf32>,
    %c0_55 = arith.constant 0 : index
    %c144 = arith.constant 144 : index
    %91 = vector.load %arg12[%c0_55, %c144] : memref<32x512xf32, #tpu.memory_space<vmem>>, vector<32x256xf32>
    %c224 = arith.constant 224 : index
    %c0_56 = arith.constant 0 : index
    %92 = vector.load %arg13[%c224, %c0_56] : memref<288x256xf32, #tpu.memory_space<vmem>>, vector<32x256xf32>
    tpu.vector_store %arg13[%c224, %c0_56], %91 {strides = array<i32>} : memref<288x256xf32, #tpu.memory_space<vmem>>, vector<32x256xf32>,
    %c0_57 = arith.constant 0 : index
    %c145 = arith.constant 145 : index
    %93 = vector.load %arg12[%c0_57, %c145] : memref<32x512xf32, #tpu.memory_space<vmem>>, vector<32x256xf32>
    %cst_58 = arith.constant 0.000000e+00 : f32
    %94 = vector.shape_cast %56 : vector<1x256xi1> to vector<1x256xi1>
    %95 = vector.broadcast %94 : vector<1x256xi1> to vector<32x256xi1>
    %96 = vector.broadcast %cst_58 : f32 to vector<32x256xf32>
    %97 = arith.select %95, %93, %96 : vector<32x256xi1>, vector<32x256xf32>
    %c256 = arith.constant 256 : index
    %c0_59 = arith.constant 0 : index
    %98 = vector.load %arg13[%c256, %c0_59] : memref<288x256xf32, #tpu.memory_space<vmem>>, vector<32x256xf32>
    tpu.vector_store %arg13[%c256, %c0_59], %97 {strides = array<i32>} : memref<288x256xf32, #tpu.memory_space<vmem>>, vector<32x256xf32>,
    %c0_60 = arith.constant 0 : index
    %c0_61 = arith.constant 0 : index
    %99 = vector.load %arg10[%c0_60, %c0_61] : memref<8x288xf32, #tpu.memory_space<vmem>>, vector<8x288xf32>
    %c0_62 = arith.constant 0 : index
    %c0_63 = arith.constant 0 : index
    %100 = vector.load %arg13[%c0_62, %c0_63] : memref<288x256xf32, #tpu.memory_space<vmem>>, vector<288x256xf32>
    %cst_64 = arith.constant dense<0.000000e+00> : vector<8x256xf32>
    %101 = tpu.matmul %99, %100, %cst_64 {dimension_numbers = #tpu.dot_dimension_numbers<[1], [0], [0], [1], [0, 0, 1, 1], [], []>, precision = #tpu.contract_precision<fp32>} : vector<8x288xf32>, vector<288x256xf32>, vector<8x256xf32> -> vector<8x256xf32>
    %c0_65 = arith.constant 0 : index
    %c0_66 = arith.constant 0 : index
    %c0_67 = arith.constant 0 : index
    %102 = vector.load %arg11[%c0_65, %c0_66, %c0_67] : memref<1x8x256xf32, #tpu.memory_space<vmem>>, vector<1x8x256xf32>
    %103 = vector.shape_cast %102 : vector<1x8x256xf32> to vector<8x256xf32>
    %104 = vector.shape_cast %101 : vector<8x256xf32> to vector<1x8x256xf32>
    tpu.vector_store %arg11[%c0_65, %c0_66, %c0_67], %104 {strides = array<i32>} : memref<1x8x256xf32, #tpu.memory_space<vmem>>, vector<1x8x256xf32>,
    return
  }
  func.func @transform_0(%arg0: i32) -> (i32, i32, i32) {
    %c0_i32 = arith.constant 0 : i32
    %c0_i32_0 = arith.constant 0 : i32
    %c0_i32_1 = arith.constant 0 : i32
    return %arg0, %c0_i32, %c0_i32_0 : i32, i32, i32
  }
  func.func @transform_1(%arg0: i32) -> (i32, i32, i32) {
    %c0_i32 = arith.constant 0 : i32
    %c0_i32_0 = arith.constant 0 : i32
    %c0_i32_1 = arith.constant 0 : i32
    return %arg0, %c0_i32, %c0_i32_0 : i32, i32, i32
  }
  func.func @transform_2(%arg0: i32) -> (i32, i32) {
    %c0_i32 = arith.constant 0 : i32
    %c0_i32_0 = arith.constant 0 : i32
    %c0_i32_1 = arith.constant 0 : i32
    return %c0_i32, %c0_i32_0 : i32, i32
  }
  func.func @transform_3(%arg0: i32) -> (i32, i32) {
    %c0_i32 = arith.constant 0 : i32
    %c0_i32_0 = arith.constant 0 : i32
    %c0_i32_1 = arith.constant 0 : i32
    return %c0_i32, %c0_i32_0 : i32, i32
  }
  func.func @transform_4(%arg0: i32) -> (i32, i32) {
    %c0_i32 = arith.constant 0 : i32
    %c0_i32_0 = arith.constant 0 : i32
    %c0_i32_1 = arith.constant 0 : i32
    return %c0_i32, %c0_i32_0 : i32, i32
  }
  func.func @transform_5(%arg0: i32) -> (i32, i32) {
    %c0_i32 = arith.constant 0 : i32
    %c0_i32_0 = arith.constant 0 : i32
    %c0_i32_1 = arith.constant 0 : i32
    return %c0_i32, %c0_i32_0 : i32, i32
  }
  func.func @transform_6(%arg0: i32) -> (i32, i32) {
    %c0_i32 = arith.constant 0 : i32
    %c0_i32_0 = arith.constant 0 : i32
    %c0_i32_1 = arith.constant 0 : i32
    return %c0_i32, %c0_i32_0 : i32, i32
  }
  func.func @transform_7(%arg0: i32) -> (i32, i32) {
    %c0_i32 = arith.constant 0 : i32
    %c0_i32_0 = arith.constant 0 : i32
    %c0_i32_1 = arith.constant 0 : i32
    return %c0_i32, %c0_i32_0 : i32, i32
  }
  func.func @transform_8(%arg0: i32) -> (i32, i32) {
    %c0_i32 = arith.constant 0 : i32
    %c0_i32_0 = arith.constant 0 : i32
    %c0_i32_1 = arith.constant 0 : i32
    return %c0_i32, %c0_i32_0 : i32, i32
  }
  func.func @transform_9(%arg0: i32) -> (i32, i32) {
    %c0_i32 = arith.constant 0 : i32
    %c0_i32_0 = arith.constant 0 : i32
    %c0_i32_1 = arith.constant 0 : i32
    return %c0_i32, %c0_i32_0 : i32, i32
  }
  func.func @transform_10(%arg0: i32) -> (i32, i32, i32) {
    %c0_i32 = arith.constant 0 : i32
    %c0_i32_0 = arith.constant 0 : i32
    %c0_i32_1 = arith.constant 0 : i32
    return %arg0, %c0_i32, %c0_i32_0 : i32, i32, i32
  }
}

</mosaic_0001>

<llo_original>
// kernel: tpu_custom_call.1
$region0: #{tpu_custom_call.1}
  #allocation0 [shape = 'u32[]', space=smem, size = 0x4, offset = 0x4, fixed_abs, tag = 'smem constant byte address 0x4 - core index']
  #allocation1 [shape = 'u32[144,128]{1,0:T(1,128)}', space=vmem, size = 0x12000, scoped, tag = 'internal scratch']
  #allocation2 [shape = 'f32[32,512]{1,0:T(8,128)}', space=vmem, size = 0x10000, scoped, tag = 'scratch operand']
  #allocation3 [shape = 'f32[288,256]{1,0:T(8,128)}', space=vmem, size = 0x48000, scoped, tag = 'scratch operand']
  %s0 = inlined_call_operand.vmem [shape: f32[2,4,256], index: 0, kind: input, shape index: {}]
  %s1 = inlined_call_operand.vmem [shape: f32[2,4,256], index: 1, kind: input, shape index: {}]
  %s2 = inlined_call_operand.vmem [shape: f32[4,1], index: 2, kind: input, shape index: {}]
  %s3 = inlined_call_operand.vmem [shape: f32[4,1], index: 3, kind: input, shape index: {}]
  %s4 = inlined_call_operand.vmem [shape: f32[4,1], index: 4, kind: input, shape index: {}]
  %s5 = inlined_call_operand.vmem [shape: f32[4,1], index: 5, kind: input, shape index: {}]
  %s6 = inlined_call_operand.vmem [shape: f32[32,4], index: 6, kind: input, shape index: {}]
  %s7 = inlined_call_operand.vmem [shape: f32[32,4], index: 7, kind: input, shape index: {}]
  %s8 = inlined_call_operand.vmem [shape: f32[32,1], index: 8, kind: input, shape index: {}]
  %s9 = inlined_call_operand.vmem [shape: f32[8,288], index: 9, kind: input, shape index: {}]
  %s10 = inlined_call_operand.hbm [shape: f32[2,8,256], index: 10, kind: output, shape index: {}]
  %s11 = sld [smem:[#allocation0]]
  $region73: #{tpu_custom_call.1} parent=0
    _
  %s13 = ssub.s32 1, %s11
  %s14 = scalar_select 0, %s13, %s11
  $region1: #{tpu_custom_call.1} parent=0
    #allocation4 [shape = 'u8[16384]{0}', space=vmem, size = 0x4000, scoped, tag = 'output window, operand 0']
    #allocation5 [shape = 's32[2]{0}', space=sflag, size = 0x8, scoped, tag = 'scoped memory for tpu_custom_call.1']
    %15 = vsyncpa [#allocation5], 0
    %s16 = scalar_lea.sflag [#allocation5], 1
    %17 = vsyncpa %s16, 0
    loop: start=0, step=1, limit=4
    $region2: #{tpu_custom_call.1} parent=1 // loop_pre_header
      _
    $region3: #{tpu_custom_call.1} parent=1 // loop_header
      %s19 = sphi 0, %s23
      %p20 = scmp.ge.s32.totalorder %s19, 4
      %s29 = sphi 0, %s31
      %s32 = sphi 0, %s29
      %s33 = sphi 0, %s32
      %s49 = sphi 0, %s33
      %s55 = sphi 0, %s57
      %s58 = sphi 0, %s55
      %s59 = sphi 0, %s58
      %s75 = sphi 0, %s59
      %s79 = sphi 0, %s79
      %s81 = sphi 0, %s79
      %s82 = sphi 0, %s81
      %s96 = sphi 0, %s82
      %s100 = sphi 0, %s100
      %s102 = sphi 0, %s100
      %s103 = sphi 0, %s102
      %s117 = sphi 0, %s103
      %s121 = sphi 0, %s121
      %s123 = sphi 0, %s121
      %s124 = sphi 0, %s123
      %s138 = sphi 0, %s124
      %s142 = sphi 0, %s142
      %s144 = sphi 0, %s142
      %s145 = sphi 0, %s144
      %s159 = sphi 0, %s145
      %s163 = sphi 0, %s163
      %s165 = sphi 0, %s163
      %s166 = sphi 0, %s165
      %s180 = sphi 0, %s166
      %s184 = sphi 0, %s184
      %s186 = sphi 0, %s184
      %s187 = sphi 0, %s186
      %s201 = sphi 0, %s187
      %s205 = sphi 0, %s205
      %s207 = sphi 0, %s205
      %s208 = sphi 0, %s207
      %s222 = sphi 0, %s208
      %s226 = sphi 0, %s226
      %s228 = sphi 0, %s226
      %s229 = sphi 0, %s228
      %s243 = sphi 0, %s229
      %s249 = sphi 0, %s251
      %s252 = sphi 0, %s249
      %s253 = sphi 0, %s252
      %s269 = sphi 0, %s253
    $region4: #{tpu_custom_call.1} parent=1 // loop_header_branch
      %22 = sbr.rel (%p20) target = $region8
    $region5: #{tpu_custom_call.1} parent=1 // loop_body
      %s24 = ssub.s32 %s19, 1
      %s25 = ssub.s32 %s19, 2
      %s26 = sadd.s32 %s19, 1
      %s27 = ssub.s32 %s19, %s26
      %p28 = scmp.eq.s32.totalorder %s27, 0
      %s30 = sadd.s32 %s29, 1
      %s31 = scalar_select %p28, %s29, %s30
      %p34 = pneg %p28
      %p35 = scmp.eq.s32.totalorder %s19, 1
      %p36 = por %p34, %p35
      %p37 = scmp.ne.s32.totalorder %s29, %s32
      %p38 = scmp.eq.s32.totalorder %s19, 0
      %p39 = por %p37, %p38
      %p40 = scmp.ne.s32.totalorder %s29, %s32
      %p41 = scmp.eq.s32.totalorder %s24, 1
      %p42 = por %p40, %p41
      %p43 = scmp.ne.s32.totalorder %s32, %s33
      %p44 = scmp.eq.s32.totalorder %s24, 0
      %p45 = por %p43, %p44
      %p46 = scmp.ne.s32.totalorder %s32, %s33
      %p47 = scmp.eq.s32.totalorder %s25, 1
      %p48 = por %p46, %p47
      %p50 = scmp.ne.s32.totalorder %s33, %s49
      %p51 = scmp.eq.s32.totalorder %s25, 0
      %p52 = por %p50, %p51
      %s53 = ssub.s32 %s19, %s26
      %p54 = scmp.eq.s32.totalorder %s53, 0
      %s56 = sadd.s32 %s55, 1
      %s57 = scalar_select %p54, %s55, %s56
      %p60 = pneg %p54
      %p61 = scmp.eq.s32.totalorder %s19, 1
      %p62 = por %p60, %p61
      %p63 = scmp.ne.s32.totalorder %s55, %s58
      %p64 = scmp.eq.s32.totalorder %s19, 0
      %p65 = por %p63, %p64
      %p66 = scmp.ne.s32.totalorder %s55, %s58
      %p67 = scmp.eq.s32.totalorder %s24, 1
      %p68 = por %p66, %p67
      %p69 = scmp.ne.s32.totalorder %s58, %s59
      %p70 = scmp.eq.s32.totalorder %s24, 0
      %p71 = por %p69, %p70
      %p72 = scmp.ne.s32.totalorder %s58, %s59
      %p73 = scmp.eq.s32.totalorder %s25, 1
      %p74 = por %p72, %p73
      %p76 = scmp.ne.s32.totalorder %s59, %s75
      %p77 = scmp.eq.s32.totalorder %s25, 0
      %p78 = por %p76, %p77
      %s80 = sadd.s32 %s79, 1
      %p83 = scmp.eq.s32.totalorder %s19, 1
      %p84 = scmp.ne.s32.totalorder %s79, %s81
      %p85 = scmp.eq.s32.totalorder %s19, 0
      %p86 = por %p84, %p85
      %p87 = scmp.ne.s32.totalorder %s79, %s81
      %p88 = scmp.eq.s32.totalorder %s24, 1
      %p89 = por %p87, %p88
      %p90 = scmp.ne.s32.totalorder %s81, %s82
      %p91 = scmp.eq.s32.totalorder %s24, 0
      %p92 = por %p90, %p91
      %p93 = scmp.ne.s32.totalorder %s81, %s82
      %p94 = scmp.eq.s32.totalorder %s25, 1
      %p95 = por %p93, %p94
      %p97 = scmp.ne.s32.totalorder %s82, %s96
      %p98 = scmp.eq.s32.totalorder %s25, 0
      %p99 = por %p97, %p98
      %s101 = sadd.s32 %s100, 1
      %p104 = scmp.eq.s32.totalorder %s19, 1
      %p105 = scmp.ne.s32.totalorder %s100, %s102
      %p106 = scmp.eq.s32.totalorder %s19, 0
      %p107 = por %p105, %p106
      %p108 = scmp.ne.s32.totalorder %s100, %s102
      %p109 = scmp.eq.s32.totalorder %s24, 1
      %p110 = por %p108, %p109
      %p111 = scmp.ne.s32.totalorder %s102, %s103
      %p112 = scmp.eq.s32.totalorder %s24, 0
      %p113 = por %p111, %p112
      %p114 = scmp.ne.s32.totalorder %s102, %s103
      %p115 = scmp.eq.s32.totalorder %s25, 1
      %p116 = por %p114, %p115
      %p118 = scmp.ne.s32.totalorder %s103, %s117
      %p119 = scmp.eq.s32.totalorder %s25, 0
      %p120 = por %p118, %p119
      %s122 = sadd.s32 %s121, 1
      %p125 = scmp.eq.s32.totalorder %s19, 1
      %p126 = scmp.ne.s32.totalorder %s121, %s123
      %p127 = scmp.eq.s32.totalorder %s19, 0
      %p128 = por %p126, %p127
      %p129 = scmp.ne.s32.totalorder %s121, %s123
      %p130 = scmp.eq.s32.totalorder %s24, 1
      %p131 = por %p129, %p130
      %p132 = scmp.ne.s32.totalorder %s123, %s124
      %p133 = scmp.eq.s32.totalorder %s24, 0
      %p134 = por %p132, %p133
      %p135 = scmp.ne.s32.totalorder %s123, %s124
      %p136 = scmp.eq.s32.totalorder %s25, 1
      %p137 = por %p135, %p136
      %p139 = scmp.ne.s32.totalorder %s124, %s138
      %p140 = scmp.eq.s32.totalorder %s25, 0
      %p141 = por %p139, %p140
      %s143 = sadd.s32 %s142, 1
      %p146 = scmp.eq.s32.totalorder %s19, 1
      %p147 = scmp.ne.s32.totalorder %s142, %s144
      %p148 = scmp.eq.s32.totalorder %s19, 0
      %p149 = por %p147, %p148
      %p150 = scmp.ne.s32.totalorder %s142, %s144
      %p151 = scmp.eq.s32.totalorder %s24, 1
      %p152 = por %p150, %p151
      %p153 = scmp.ne.s32.totalorder %s144, %s145
      %p154 = scmp.eq.s32.totalorder %s24, 0
      %p155 = por %p153, %p154
      %p156 = scmp.ne.s32.totalorder %s144, %s145
      %p157 = scmp.eq.s32.totalorder %s25, 1
      %p158 = por %p156, %p157
      %p160 = scmp.ne.s32.totalorder %s145, %s159
      %p161 = scmp.eq.s32.totalorder %s25, 0
      %p162 = por %p160, %p161
      %s164 = sadd.s32 %s163, 1
      %p167 = scmp.eq.s32.totalorder %s19, 1
      %p168 = scmp.ne.s32.totalorder %s163, %s165
      %p169 = scmp.eq.s32.totalorder %s19, 0
      %p170 = por %p168, %p169
      %p171 = scmp.ne.s32.totalorder %s163, %s165
      %p172 = scmp.eq.s32.totalorder %s24, 1
      %p173 = por %p171, %p172
      %p174 = scmp.ne.s32.totalorder %s165, %s166
      %p175 = scmp.eq.s32.totalorder %s24, 0
      %p176 = por %p174, %p175
      %p177 = scmp.ne.s32.totalorder %s165, %s166
      %p178 = scmp.eq.s32.totalorder %s25, 1
      %p179 = por %p177, %p178
      %p181 = scmp.ne.s32.totalorder %s166, %s180
      %p182 = scmp.eq.s32.totalorder %s25, 0
      %p183 = por %p181, %p182
      %s185 = sadd.s32 %s184, 1
      %p188 = scmp.eq.s32.totalorder %s19, 1
      %p189 = scmp.ne.s32.totalorder %s184, %s186
      %p190 = scmp.eq.s32.totalorder %s19, 0
      %p191 = por %p189, %p190
      %p192 = scmp.ne.s32.totalorder %s184, %s186
      %p193 = scmp.eq.s32.totalorder %s24, 1
      %p194 = por %p192, %p193
      %p195 = scmp.ne.s32.totalorder %s186, %s187
      %p196 = scmp.eq.s32.totalorder %s24, 0
      %p197 = por %p195, %p196
      %p198 = scmp.ne.s32.totalorder %s186, %s187
      %p199 = scmp.eq.s32.totalorder %s25, 1
      %p200 = por %p198, %p199
      %p202 = scmp.ne.s32.totalorder %s187, %s201
      %p203 = scmp.eq.s32.totalorder %s25, 0
      %p204 = por %p202, %p203
      %s206 = sadd.s32 %s205, 1
      %p209 = scmp.eq.s32.totalorder %s19, 1
      %p210 = scmp.ne.s32.totalorder %s205, %s207
      %p211 = scmp.eq.s32.totalorder %s19, 0
      %p212 = por %p210, %p211
      %p213 = scmp.ne.s32.totalorder %s205, %s207
      %p214 = scmp.eq.s32.totalorder %s24, 1
      %p215 = por %p213, %p214
      %p216 = scmp.ne.s32.totalorder %s207, %s208
      %p217 = scmp.eq.s32.totalorder %s24, 0
      %p218 = por %p216, %p217
      %p219 = scmp.ne.s32.totalorder %s207, %s208
      %p220 = scmp.eq.s32.totalorder %s25, 1
      %p221 = por %p219, %p220
      %p223 = scmp.ne.s32.totalorder %s208, %s222
      %p224 = scmp.eq.s32.totalorder %s25, 0
      %p225 = por %p223, %p224
      %s227 = sadd.s32 %s226, 1
      %p230 = scmp.eq.s32.totalorder %s19, 1
      %p231 = scmp.ne.s32.totalorder %s226, %s228
      %p232 = scmp.eq.s32.totalorder %s19, 0
      %p233 = por %p231, %p232
      %p234 = scmp.ne.s32.totalorder %s226, %s228
      %p235 = scmp.eq.s32.totalorder %s24, 1
      %p236 = por %p234, %p235
      %p237 = scmp.ne.s32.totalorder %s228, %s229
      %p238 = scmp.eq.s32.totalorder %s24, 0
      %p239 = por %p237, %p238
      %p240 = scmp.ne.s32.totalorder %s228, %s229
      %p241 = scmp.eq.s32.totalorder %s25, 1
      %p242 = por %p240, %p241
      %p244 = scmp.ne.s32.totalorder %s229, %s243
      %p245 = scmp.eq.s32.totalorder %s25, 0
      %p246 = por %p244, %p245
      %s247 = ssub.s32 %s19, %s26
      %p248 = scmp.eq.s32.totalorder %s247, 0
      %s250 = sadd.s32 %s249, 1
      %s251 = scalar_select %p248, %s249, %s250
      %p254 = pneg %p248
      %p255 = scmp.eq.s32.totalorder %s19, 1
      %p256 = por %p254, %p255
      %p257 = scmp.ne.s32.totalorder %s249, %s252
      %p258 = scmp.eq.s32.totalorder %s19, 0
      %p259 = por %p257, %p258
      %p260 = scmp.ne.s32.totalorder %s249, %s252
      %p261 = scmp.eq.s32.totalorder %s24, 1
      %p262 = por %p260, %p261
      %p263 = scmp.ne.s32.totalorder %s252, %s253
      %p264 = scmp.eq.s32.totalorder %s24, 0
      %p265 = por %p263, %p264
      %p266 = scmp.ne.s32.totalorder %s252, %s253
      %p267 = scmp.eq.s32.totalorder %s25, 1
      %p268 = por %p266, %p267
      %p270 = scmp.ne.s32.totalorder %s253, %s269
      %p271 = scmp.eq.s32.totalorder %s25, 0
      %p272 = por %p270, %p271
      %p273 = scmp.le.s32.totalorder 1, %s19
      %p274 = scmp.lt.s32.totalorder %s19, 3
      %p275 = pnand %p273, %p274
      %p276 = pneg %p275
      // Predicated region
      $region9: #{tpu_custom_call.1} parent=5 // pred_check
        _
      $region10: #{tpu_custom_call.1} parent=5 // pred_check_branch
        %278 = sbr.rel (%p275) target = $region12
      $region11: #{tpu_custom_call.1} parent=5 // pred_region
        %s279 = ssub.s32 %s19, 1
        // Predicated region
        $region13: #{tpu_custom_call.1} parent=11 // pred_check
          %p280 = pneg %p92
        $region14: #{tpu_custom_call.1} parent=11 // pred_check_branch
          %282 = sbr.rel (%p280) target = $region16
        $region15: #{tpu_custom_call.1} parent=11 // pred_region
          _
        $region16: #{tpu_custom_call.1} parent=11 // pred_fallthru
          _
        // Predicated region
        $region17: #{tpu_custom_call.1} parent=11 // pred_check
          %p283 = pneg %p113
        $region18: #{tpu_custom_call.1} parent=11 // pred_check_branch
          %285 = sbr.rel (%p283) target = $region20
        $region19: #{tpu_custom_call.1} parent=11 // pred_region
          _
        $region20: #{tpu_custom_call.1} parent=11 // pred_fallthru
          _
        // Predicated region
        $region21: #{tpu_custom_call.1} parent=11 // pred_check
          %p286 = pneg %p134
        $region22: #{tpu_custom_call.1} parent=11 // pred_check_branch
          %288 = sbr.rel (%p286) target = $region24
        $region23: #{tpu_custom_call.1} parent=11 // pred_region
          _
        $region24: #{tpu_custom_call.1} parent=11 // pred_fallthru
          _
        // Predicated region
        $region25: #{tpu_custom_call.1} parent=11 // pred_check
          %p289 = pneg %p155
        $region26: #{tpu_custom_call.1} parent=11 // pred_check_branch
          %291 = sbr.rel (%p289) target = $region28
        $region27: #{tpu_custom_call.1} parent=11 // pred_region
          _
        $region28: #{tpu_custom_call.1} parent=11 // pred_fallthru
          _
        // Predicated region
        $region29: #{tpu_custom_call.1} parent=11 // pred_check
          %p292 = pneg %p176
        $region30: #{tpu_custom_call.1} parent=11 // pred_check_branch
          %294 = sbr.rel (%p292) target = $region32
        $region31: #{tpu_custom_call.1} parent=11 // pred_region
          _
        $region32: #{tpu_custom_call.1} parent=11 // pred_fallthru
          _
        // Predicated region
        $region33: #{tpu_custom_call.1} parent=11 // pred_check
          %p295 = pneg %p197
        $region34: #{tpu_custom_call.1} parent=11 // pred_check_branch
          %297 = sbr.rel (%p295) target = $region36
        $region35: #{tpu_custom_call.1} parent=11 // pred_region
          _
        $region36: #{tpu_custom_call.1} parent=11 // pred_fallthru
          _
        // Predicated region
        $region37: #{tpu_custom_call.1} parent=11 // pred_check
          %p298 = pneg %p218
        $region38: #{tpu_custom_call.1} parent=11 // pred_check_branch
          %300 = sbr.rel (%p298) target = $region40
        $region39: #{tpu_custom_call.1} parent=11 // pred_region
          _
        $region40: #{tpu_custom_call.1} parent=11 // pred_fallthru
          _
        // Predicated region
        $region41: #{tpu_custom_call.1} parent=11 // pred_check
          %p301 = pneg %p239
        $region42: #{tpu_custom_call.1} parent=11 // pred_check_branch
          %303 = sbr.rel (%p301) target = $region44
        $region43: #{tpu_custom_call.1} parent=11 // pred_region
          _
        $region44: #{tpu_custom_call.1} parent=11 // pred_fallthru
          _
      $region12: #{tpu_custom_call.1} parent=5 // pred_fallthru
        _
      %p304 = scmp.lt.s32.totalorder %s19, 2
      // Predicated region
      $region45: #{tpu_custom_call.1} parent=5 // pred_check
        %p305 = pneg %p304
      $region46: #{tpu_custom_call.1} parent=5 // pred_check_branch
        %307 = sbr.rel (%p305) target = $region48
      $region47: #{tpu_custom_call.1} parent=5 // pred_region
        // Predicated region
        $region49: #{tpu_custom_call.1} parent=47 // pred_check
          %p308 = pneg %p39
        $region50: #{tpu_custom_call.1} parent=47 // pred_check_branch
          %310 = sbr.rel (%p308) target = $region52
        $region51: #{tpu_custom_call.1} parent=47 // pred_region
          %p311 = scmp.lt.s32.totalorder %s19, 1
          %s312 = scalar_select %p311, %s19, 1
          %s313 = smul.addr %s312, 2
          %s314 = smul.addr %s313, 4
          %s315 = scalar_lea.vmem %s0, %s314
        $region52: #{tpu_custom_call.1} parent=47 // pred_fallthru
          _
        // Predicated region
        $region53: #{tpu_custom_call.1} parent=47 // pred_check
          %p316 = pneg %p65
        $region54: #{tpu_custom_call.1} parent=47 // pred_check_branch
          %318 = sbr.rel (%p316) target = $region56
        $region55: #{tpu_custom_call.1} parent=47 // pred_region
          %p319 = scmp.lt.s32.totalorder %s19, 1
          %s320 = scalar_select %p319, %s19, 1
          %s321 = smul.addr %s320, 2
          %s322 = smul.addr %s321, 4
          %s323 = scalar_lea.vmem %s1, %s322
        $region56: #{tpu_custom_call.1} parent=47 // pred_fallthru
          _
      $region48: #{tpu_custom_call.1} parent=5 // pred_fallthru
        _
      %p324 = scmp.le.s32.totalorder 1, %s19
      %p325 = scmp.lt.s32.totalorder %s19, 3
      %p326 = pnand %p324, %p325
      %p327 = pneg %p326
      // Predicated region
      $region57: #{tpu_custom_call.1} parent=5 // pred_check
        _
      $region58: #{tpu_custom_call.1} parent=5 // pred_check_branch
        %329 = sbr.rel (%p326) target = $region60
      $region59: #{tpu_custom_call.1} parent=5 // pred_region
        %s330 = ssub.s32 %s19, 1
        %p331 = scmp.lt.s32.totalorder %s24, 1
        %s332 = scalar_select %p331, %s24, 1
        %s333 = smul.addr %s332, 2
        %s334 = smul.addr %s333, 4
        %s335 = scalar_lea.vmem %s0, %s334
        %p336 = pneg %p45
        %p337 = pneg %p42
        %p338 = scmp.lt.s32.totalorder %s24, 1
        %s339 = scalar_select %p338, %s24, 1
        %s340 = smul.addr %s339, 2
        %s341 = smul.addr %s340, 4
        %s342 = scalar_lea.vmem %s1, %s341
        %p343 = pneg %p71
        %p344 = pneg %p68
        %p345 = pneg %p92
        %p346 = pneg %p89
        %p347 = pneg %p113
        %p348 = pneg %p110
        %p349 = pneg %p134
        %p350 = pneg %p131
        %p351 = pneg %p155
        %p352 = pneg %p152
        %p353 = pneg %p176
        %p354 = pneg %p173
        %p355 = pneg %p197
        %p356 = pneg %p194
        %p357 = pneg %p218
        %p358 = pneg %p215
        %p359 = pneg %p239
        %p360 = pneg %p236
        %p361 = pneg %p265
        %p362 = pneg %p262
        %s363 = sand.u32 %s252, 1
        %s364 = scalar_lea.sflag [#allocation5], %s363
        %s365 = sand.u32 %s252, 1
        %s366 = smul.addr %s365, 16
        %s367 = scalar_lea.vmem [#allocation4], %s366
        %p368 = scmp.lt.s32.totalorder %s24, 1
        %s369 = scalar_select %p368, %s24, 1
        %s370 = smul.addr %s369, 2
        %s371 = smul.addr %s370, 4
        %s372 = scalar_lea.vmem %s0, %s371
        %p373 = scmp.lt.s32.totalorder %s24, 1
        %s374 = scalar_select %p373, %s24, 1
        %s375 = smul.addr %s374, 2
        %s376 = smul.addr %s375, 4
        %s377 = scalar_lea.vmem %s1, %s376
        %v378 = vld [vmem:[%s372] sm:$0xff]
        %v379 = vld [vmem:[%s2] sm:$0xf]
        %381 = vset.pattern.permute.xlu0 0
        %382 = vperm.xlu0 %381, %v379
        %v383 = vpop.permute.xlu0 %382
        %v385 = vunpack.c.l.s4 839922192
        %v386 = vunpack.c.0.s8 %v385
        %v387 = vlaneseq
        %v388 = vshrl.u32 %v387, 7
        %v389 = vsub.s32 %v386, %v388
        %v390 = vrot.slane %v383, %v389
        %v392 = vmul.f32 %v378, %v390
        %v393 = vld [vmem:[%s4] sm:$0xf]
        %395 = vset.pattern.permute.xlu0 0
        %396 = vperm.xlu0 %395, %v393
        %v397 = vpop.permute.xlu0 %396
        %v399 = vunpack.c.l.s4 839922192
        %v400 = vunpack.c.0.s8 %v399
        %v401 = vlaneseq
        %v402 = vshrl.u32 %v401, 7
        %v403 = vsub.s32 %v400, %v402
        %v404 = vrot.slane %v397, %v403
        %v406 = vadd.f32 %v392, %v404
        %v407 = vmax.f32 %v406, 0.0
        %v408 = vld [vmem:[%s6] sm:$0xff]
        %v409 = vld [vmem:[%s6 + $0x8] sm:$0xff]
        %v410 = vld [vmem:[%s6 + $0x10] sm:$0xff]
        %v411 = vld [vmem:[%s6 + $0x18] sm:$0xff]
        %v412 = vld [vmem:[%s377] sm:$0xff]
        %v413 = vld [vmem:[%s3] sm:$0xf]
        %415 = vset.pattern.permute.xlu0 0
        %416 = vperm.xlu0 %415, %v413
        %v417 = vpop.permute.xlu0 %416
        %v419 = vunpack.c.l.s4 839922192
        %v420 = vunpack.c.0.s8 %v419
        %v421 = vlaneseq
        %v422 = vshrl.u32 %v421, 7
        %v423 = vsub.s32 %v420, %v422
        %v424 = vrot.slane %v417, %v423
        %v426 = vmul.f32 %v412, %v424
        %v427 = vld [vmem:[%s5] sm:$0xf]
        %429 = vset.pattern.permute.xlu0 0
        %430 = vperm.xlu0 %429, %v427
        %v431 = vpop.permute.xlu0 %430
        %v433 = vunpack.c.l.s4 839922192
        %v434 = vunpack.c.0.s8 %v433
        %v435 = vlaneseq
        %v436 = vshrl.u32 %v435, 7
        %v437 = vsub.s32 %v434, %v436
        %v438 = vrot.slane %v431, %v437
        %v440 = vadd.f32 %v426, %v438
        %v441 = vmax.f32 %v440, 0.0
        %v442 = vld [vmem:[%s7] sm:$0xff]
        %v443 = vld [vmem:[%s7 + $0x8] sm:$0xff]
        %v444 = vld [vmem:[%s7 + $0x10] sm:$0xff]
        %v445 = vld [vmem:[%s7 + $0x18] sm:$0xff]
        %v447 = vcombine.high %v441, %v441
        %vm448 = vcmask 31744
        %v450 = vsel %vm448, %v442, 0
        %v453 = vsel %vm448, %v443, 0
        %v456 = vsel %vm448, %v444, 0
        %v459 = vsel %vm448, %v445, 0
        %vm461 = vcmask 1043456
        %v462 = vsel %vm461, %v441, 0
        %v464 = vsel %vm461, %v447, 0
        %466 = vmatprep.subr.mxu0 0.0
        %467 = vmatpush1.msra.mxu0 0.0
        %468 = vmatprep.subr.mxu0 0.0
        %469 = vmatpush1.msra.mxu0 0.0
        %470 = vmatprep.subr.mxu0 0.0
        %471 = vmatpush1.msra.mxu0 0.0
        %472 = vmatprep.subr.mxu0 0.0
        %473 = vmatpush1.msra.mxu0 0.0
        %474 = vmatprep.subr.mxu0 0.0
        %475 = vmatpush1.msra.mxu0 0.0
        %476 = vmatprep.subr.mxu0 0.0
        %477 = vmatpush1.msra.mxu0 0.0
        %478 = vmatprep.subr.mxu0 0.0
        %479 = vmatpush1.msra.mxu0 0.0
        %480 = vmatprep.subr.mxu0 0.0
        %481 = vmatpush1.msra.mxu0 0.0
        %482 = vmatprep.subr.mxu0 0.0
        %483 = vmatpush1.msra.mxu0 0.0
        %484 = vmatprep.subr.mxu0 0.0
        %485 = vmatpush1.msra.mxu0 0.0
        %486 = vmatprep.subr.mxu0 0.0
        %487 = vmatpush1.msra.mxu0 0.0
        %488 = vmatprep.subr.mxu0 0.0
        %489 = vmatpush1.msra.mxu0 0.0
        %490 = vmatprep.subr.mxu0 0.0
        %491 = vmatpush1.msra.mxu0 0.0
        %492 = vmatprep.subr.mxu0 0.0
        %493 = vmatpush1.msra.mxu0 0.0
        %494 = vmatprep.subr.mxu0 0.0
        %495 = vmatpush1.msra.mxu0 0.0
        %v496 = vand.u32 %v464, 4294901760
        %497 = vmatprep.subr.mxu0 %v496
        %v498 = vand.u32 %v462, 4294901760
        %499 = vmatpush1.msra.mxu0 %v498
        %500 = vmatprep.subr.mxu0 0.0
        %501 = vmatpush2.msra.mxu0 0.0
        %502 = vmatprep.subr.mxu0 0.0
        %503 = vmatpush2.msra.mxu0 0.0
        %504 = vmatprep.subr.mxu0 0.0
        %505 = vmatpush2.msra.mxu0 0.0
        %506 = vmatprep.subr.mxu0 0.0
        %507 = vmatpush2.msra.mxu0 0.0
        %508 = vmatprep.subr.mxu0 0.0
        %509 = vmatpush2.msra.mxu0 0.0
        %510 = vmatprep.subr.mxu0 0.0
        %511 = vmatpush2.msra.mxu0 0.0
        %512 = vmatprep.subr.mxu0 0.0
        %513 = vmatpush2.msra.mxu0 0.0
        %514 = vmatprep.subr.mxu0 0.0
        %515 = vmatpush2.msra.mxu0 0.0
        %516 = vmatprep.subr.mxu0 0.0
        %517 = vmatpush2.msra.mxu0 0.0
        %518 = vmatprep.subr.mxu0 0.0
        %519 = vmatpush2.msra.mxu0 0.0
        %520 = vmatprep.subr.mxu0 0.0
        %521 = vmatpush2.msra.mxu0 0.0
        %522 = vmatprep.subr.mxu0 0.0
        %523 = vmatpush2.msra.mxu0 0.0
        %524 = vmatprep.subr.mxu0 0.0
        %525 = vmatpush2.msra.mxu0 0.0
        %526 = vmatprep.subr.mxu0 0.0
        %527 = vmatpush2.msra.mxu0 0.0
        %528 = vmatprep.subr.mxu0 0.0
        %529 = vmatpush2.msra.mxu0 0.0
        %530 = vmatprep.subr.mxu0 0.0
        %531 = vmatpush2.msra.mxu0 0.0
        %532 = vmatprep.mubr.f32.mxu0 0.0
        %v533 = vand.u32 %v450, 4294901760
        %v534 = vsub.f32 %v450, %v533
        %v535 = vand.u32 %v534, 4294901760
        %v536 = vsub.f32 %v534, %v535
        %v537 = vand.u32 %v536, 4294901760
        %538 = vmatmul.mubr.f32.gmra.mxu0 %v537
        %v539 = vpop.f32.mrf.mxu0
        %v540 = vadd.f32 0.0, %v539
        %v541 = vpop.f32.mrf.mxu0
        %v542 = vadd.f32 0.0, %v541
        %543 = vmatprep.mubr.f32.mxu0 0.0
        %v544 = vand.u32 %v453, 4294901760
        %v545 = vsub.f32 %v453, %v544
        %v546 = vand.u32 %v545, 4294901760
        %v547 = vsub.f32 %v545, %v546
        %v548 = vand.u32 %v547, 4294901760
        %549 = vmatmul.mubr.f32.gmra.mxu0 %v548
        %v550 = vpop.f32.mrf.mxu0
        %v551 = vadd.f32 0.0, %v550
        %v552 = vpop.f32.mrf.mxu0
        %v553 = vadd.f32 0.0, %v552
        %554 = vmatprep.mubr.f32.mxu0 0.0
        %v555 = vand.u32 %v456, 4294901760
        %v556 = vsub.f32 %v456, %v555
        %v557 = vand.u32 %v556, 4294901760
        %v558 = vsub.f32 %v556, %v557
        %v559 = vand.u32 %v558, 4294901760
        %560 = vmatmul.mubr.f32.gmra.mxu0 %v559
        %v561 = vpop.f32.mrf.mxu0
        %v562 = vadd.f32 0.0, %v561
        %v563 = vpop.f32.mrf.mxu0
        %v564 = vadd.f32 0.0, %v563
        %565 = vmatprep.mubr.f32.mxu0 0.0
        %v566 = vand.u32 %v459, 4294901760
        %v567 = vsub.f32 %v459, %v566
        %v568 = vand.u32 %v567, 4294901760
        %v569 = vsub.f32 %v567, %v568
        %v570 = vand.u32 %v569, 4294901760
        %571 = vmatmul.mubr.f32.gmra.mxu0 %v570
        %v572 = vpop.f32.mrf.mxu0
        %v573 = vadd.f32 0.0, %v572
        %v574 = vpop.f32.mrf.mxu0
        %v575 = vadd.f32 0.0, %v574
        %576 = vdwg.mxu0
        %577 = vmatprep.subr.mxu0 0.0
        %578 = vmatpush1.msra.mxu0 0.0
        %579 = vmatprep.subr.mxu0 0.0
        %580 = vmatpush1.msra.mxu0 0.0
        %581 = vmatprep.subr.mxu0 0.0
        %582 = vmatpush1.msra.mxu0 0.0
        %583 = vmatprep.subr.mxu0 0.0
        %584 = vmatpush1.msra.mxu0 0.0
        %585 = vmatprep.subr.mxu0 0.0
        %586 = vmatpush1.msra.mxu0 0.0
        %587 = vmatprep.subr.mxu0 0.0
        %588 = vmatpush1.msra.mxu0 0.0
        %589 = vmatprep.subr.mxu0 0.0
        %590 = vmatpush1.msra.mxu0 0.0
        %591 = vmatprep.subr.mxu0 0.0
        %592 = vmatpush1.msra.mxu0 0.0
        %593 = vmatprep.subr.mxu0 0.0
        %594 = vmatpush1.msra.mxu0 0.0
        %595 = vmatprep.subr.mxu0 0.0
        %596 = vmatpush1.msra.mxu0 0.0
        %597 = vmatprep.subr.mxu0 0.0
        %598 = vmatpush1.msra.mxu0 0.0
        %599 = vmatprep.subr.mxu0 0.0
        %600 = vmatpush1.msra.mxu0 0.0
        %601 = vmatprep.subr.mxu0 0.0
        %602 = vmatpush1.msra.mxu0 0.0
        %603 = vmatprep.subr.mxu0 0.0
        %604 = vmatpush1.msra.mxu0 0.0
        %605 = vmatprep.subr.mxu0 0.0
        %606 = vmatpush1.msra.mxu0 0.0
        %v607 = vand.u32 %v464, 4294901760
        %v608 = vsub.f32 %v464, %v607
        %v609 = vand.u32 %v608, 4294901760
        %v610 = vsub.f32 %v608, %v609
        %v611 = vand.u32 %v610, 4294901760
        %612 = vmatprep.subr.mxu0 %v611
        %v613 = vand.u32 %v462, 4294901760
        %v614 = vsub.f32 %v462, %v613
        %v615 = vand.u32 %v614, 4294901760
        %v616 = vsub.f32 %v614, %v615
        %v617 = vand.u32 %v616, 4294901760
        %618 = vmatpush1.msra.mxu0 %v617
        %619 = vmatprep.subr.mxu0 0.0
        %620 = vmatpush2.msra.mxu0 0.0
        %621 = vmatprep.subr.mxu0 0.0
        %622 = vmatpush2.msra.mxu0 0.0
        %623 = vmatprep.subr.mxu0 0.0
        %624 = vmatpush2.msra.mxu0 0.0
        %625 = vmatprep.subr.mxu0 0.0
        %626 = vmatpush2.msra.mxu0 0.0
        %627 = vmatprep.subr.mxu0 0.0
        %628 = vmatpush2.msra.mxu0 0.0
        %629 = vmatprep.subr.mxu0 0.0
        %630 = vmatpush2.msra.mxu0 0.0
        %631 = vmatprep.subr.mxu0 0.0
        %632 = vmatpush2.msra.mxu0 0.0
        %633 = vmatprep.subr.mxu0 0.0
        %634 = vmatpush2.msra.mxu0 0.0
        %635 = vmatprep.subr.mxu0 0.0
        %636 = vmatpush2.msra.mxu0 0.0
        %637 = vmatprep.subr.mxu0 0.0
        %638 = vmatpush2.msra.mxu0 0.0
        %639 = vmatprep.subr.mxu0 0.0
        %640 = vmatpush2.msra.mxu0 0.0
        %641 = vmatprep.subr.mxu0 0.0
        %642 = vmatpush2.msra.mxu0 0.0
        %643 = vmatprep.subr.mxu0 0.0
        %644 = vmatpush2.msra.mxu0 0.0
        %645 = vmatprep.subr.mxu0 0.0
        %646 = vmatpush2.msra.mxu0 0.0
        %647 = vmatprep.subr.mxu0 0.0
        %648 = vmatpush2.msra.mxu0 0.0
        %649 = vmatprep.subr.mxu0 0.0
        %650 = vmatpush2.msra.mxu0 0.0
        %651 = vmatprep.mubr.f32.mxu0 0.0
        %v652 = vand.u32 %v450, 4294901760
        %653 = vmatmul.mubr.f32.gmra.mxu0 %v652
        %v654 = vpop.f32.mrf.mxu0
        %v655 = vadd.f32 %v540, %v654
        %v656 = vpop.f32.mrf.mxu0
        %v657 = vadd.f32 %v542, %v656
        %658 = vmatprep.mubr.f32.mxu0 0.0
        %v659 = vand.u32 %v453, 4294901760
        %660 = vmatmul.mubr.f32.gmra.mxu0 %v659
        %v661 = vpop.f32.mrf.mxu0
        %v662 = vadd.f32 %v551, %v661
        %v663 = vpop.f32.mrf.mxu0
        %v664 = vadd.f32 %v553, %v663
        %665 = vmatprep.mubr.f32.mxu0 0.0
        %v666 = vand.u32 %v456, 4294901760
        %667 = vmatmul.mubr.f32.gmra.mxu0 %v666
        %v668 = vpop.f32.mrf.mxu0
        %v669 = vadd.f32 %v562, %v668
        %v670 = vpop.f32.mrf.mxu0
        %v671 = vadd.f32 %v564, %v670
        %672 = vmatprep.mubr.f32.mxu0 0.0
        %v673 = vand.u32 %v459, 4294901760
        %674 = vmatmul.mubr.f32.gmra.mxu0 %v673
        %v675 = vpop.f32.mrf.mxu0
        %v676 = vadd.f32 %v573, %v675
        %v677 = vpop.f32.mrf.mxu0
        %v678 = vadd.f32 %v575, %v677
        %679 = vdwg.mxu0
        %680 = vmatprep.subr.mxu0 0.0
        %681 = vmatpush1.msra.mxu0 0.0
        %682 = vmatprep.subr.mxu0 0.0
        %683 = vmatpush1.msra.mxu0 0.0
        %684 = vmatprep.subr.mxu0 0.0
        %685 = vmatpush1.msra.mxu0 0.0
        %686 = vmatprep.subr.mxu0 0.0
        %687 = vmatpush1.msra.mxu0 0.0
        %688 = vmatprep.subr.mxu0 0.0
        %689 = vmatpush1.msra.mxu0 0.0
        %690 = vmatprep.subr.mxu0 0.0
        %691 = vmatpush1.msra.mxu0 0.0
        %692 = vmatprep.subr.mxu0 0.0
        %693 = vmatpush1.msra.mxu0 0.0
        %694 = vmatprep.subr.mxu0 0.0
        %695 = vmatpush1.msra.mxu0 0.0
        %696 = vmatprep.subr.mxu0 0.0
        %697 = vmatpush1.msra.mxu0 0.0
        %698 = vmatprep.subr.mxu0 0.0
        %699 = vmatpush1.msra.mxu0 0.0
        %700 = vmatprep.subr.mxu0 0.0
        %701 = vmatpush1.msra.mxu0 0.0
        %702 = vmatprep.subr.mxu0 0.0
        %703 = vmatpush1.msra.mxu0 0.0
        %704 = vmatprep.subr.mxu0 0.0
        %705 = vmatpush1.msra.mxu0 0.0
        %706 = vmatprep.subr.mxu0 0.0
        %707 = vmatpush1.msra.mxu0 0.0
        %708 = vmatprep.subr.mxu0 0.0
        %709 = vmatpush1.msra.mxu0 0.0
        %v710 = vand.u32 %v464, 4294901760
        %v711 = vsub.f32 %v464, %v710
        %712 = vmatprep.subr.mxu0 %v711
        %v713 = vand.u32 %v462, 4294901760
        %v714 = vsub.f32 %v462, %v713
        %715 = vmatpush1.msra.mxu0 %v714
        %716 = vmatprep.subr.mxu0 0.0
        %717 = vmatpush2.msra.mxu0 0.0
        %718 = vmatprep.subr.mxu0 0.0
        %719 = vmatpush2.msra.mxu0 0.0
        %720 = vmatprep.subr.mxu0 0.0
        %721 = vmatpush2.msra.mxu0 0.0
        %722 = vmatprep.subr.mxu0 0.0
        %723 = vmatpush2.msra.mxu0 0.0
        %724 = vmatprep.subr.mxu0 0.0
        %725 = vmatpush2.msra.mxu0 0.0
        %726 = vmatprep.subr.mxu0 0.0
        %727 = vmatpush2.msra.mxu0 0.0
        %728 = vmatprep.subr.mxu0 0.0
        %729 = vmatpush2.msra.mxu0 0.0
        %730 = vmatprep.subr.mxu0 0.0
        %731 = vmatpush2.msra.mxu0 0.0
        %732 = vmatprep.subr.mxu0 0.0
        %733 = vmatpush2.msra.mxu0 0.0
        %734 = vmatprep.subr.mxu0 0.0
        %735 = vmatpush2.msra.mxu0 0.0
        %736 = vmatprep.subr.mxu0 0.0
        %737 = vmatpush2.msra.mxu0 0.0
        %738 = vmatprep.subr.mxu0 0.0
        %739 = vmatpush2.msra.mxu0 0.0
        %740 = vmatprep.subr.mxu0 0.0
        %741 = vmatpush2.msra.mxu0 0.0
        %742 = vmatprep.subr.mxu0 0.0
        %743 = vmatpush2.msra.mxu0 0.0
        %744 = vmatprep.subr.mxu0 0.0
        %745 = vmatpush2.msra.mxu0 0.0
        %746 = vmatprep.subr.mxu0 0.0
        %747 = vmatpush2.msra.mxu0 0.0
        %748 = vmatprep.mubr.f32.mxu0 0.0
        %v749 = vand.u32 %v450, 4294901760
        %v750 = vsub.f32 %v450, %v749
        %751 = vmatmul.mubr.f32.gmra.mxu0 %v750
        %v752 = vpop.f32.mrf.mxu0
        %v753 = vadd.f32 %v655, %v752
        %v754 = vpop.f32.mrf.mxu0
        %v755 = vadd.f32 %v657, %v754
        %756 = vmatprep.mubr.f32.mxu0 0.0
        %v757 = vand.u32 %v453, 4294901760
        %v758 = vsub.f32 %v453, %v757
        %759 = vmatmul.mubr.f32.gmra.mxu0 %v758
        %v760 = vpop.f32.mrf.mxu0
        %v761 = vadd.f32 %v662, %v760
        %v762 = vpop.f32.mrf.mxu0
        %v763 = vadd.f32 %v664, %v762
        %764 = vmatprep.mubr.f32.mxu0 0.0
        %v765 = vand.u32 %v456, 4294901760
        %v766 = vsub.f32 %v456, %v765
        %767 = vmatmul.mubr.f32.gmra.mxu0 %v766
        %v768 = vpop.f32.mrf.mxu0
        %v769 = vadd.f32 %v669, %v768
        %v770 = vpop.f32.mrf.mxu0
        %v771 = vadd.f32 %v671, %v770
        %772 = vmatprep.mubr.f32.mxu0 0.0
        %v773 = vand.u32 %v459, 4294901760
        %v774 = vsub.f32 %v459, %v773
        %775 = vmatmul.mubr.f32.gmra.mxu0 %v774
        %v776 = vpop.f32.mrf.mxu0
        %v777 = vadd.f32 %v676, %v776
        %v778 = vpop.f32.mrf.mxu0
        %v779 = vadd.f32 %v678, %v778
        %780 = vdwg.mxu0
        %781 = vmatprep.subr.mxu0 0.0
        %782 = vmatpush1.msra.mxu0 0.0
        %783 = vmatprep.subr.mxu0 0.0
        %784 = vmatpush1.msra.mxu0 0.0
        %785 = vmatprep.subr.mxu0 0.0
        %786 = vmatpush1.msra.mxu0 0.0
        %787 = vmatprep.subr.mxu0 0.0
        %788 = vmatpush1.msra.mxu0 0.0
        %789 = vmatprep.subr.mxu0 0.0
        %790 = vmatpush1.msra.mxu0 0.0
        %791 = vmatprep.subr.mxu0 0.0
        %792 = vmatpush1.msra.mxu0 0.0
        %793 = vmatprep.subr.mxu0 0.0
        %794 = vmatpush1.msra.mxu0 0.0
        %795 = vmatprep.subr.mxu0 0.0
        %796 = vmatpush1.msra.mxu0 0.0
        %797 = vmatprep.subr.mxu0 0.0
        %798 = vmatpush1.msra.mxu0 0.0
        %799 = vmatprep.subr.mxu0 0.0
        %800 = vmatpush1.msra.mxu0 0.0
        %801 = vmatprep.subr.mxu0 0.0
        %802 = vmatpush1.msra.mxu0 0.0
        %803 = vmatprep.subr.mxu0 0.0
        %804 = vmatpush1.msra.mxu0 0.0
        %805 = vmatprep.subr.mxu0 0.0
        %806 = vmatpush1.msra.mxu0 0.0
        %807 = vmatprep.subr.mxu0 0.0
        %808 = vmatpush1.msra.mxu0 0.0
        %809 = vmatprep.subr.mxu0 0.0
        %810 = vmatpush1.msra.mxu0 0.0
        %v811 = vand.u32 %v464, 4294901760
        %812 = vmatprep.subr.mxu0 %v811
        %v813 = vand.u32 %v462, 4294901760
        %814 = vmatpush1.msra.mxu0 %v813
        %815 = vmatprep.subr.mxu0 0.0
        %816 = vmatpush2.msra.mxu0 0.0
        %817 = vmatprep.subr.mxu0 0.0
        %818 = vmatpush2.msra.mxu0 0.0
        %819 = vmatprep.subr.mxu0 0.0
        %820 = vmatpush2.msra.mxu0 0.0
        %821 = vmatprep.subr.mxu0 0.0
        %822 = vmatpush2.msra.mxu0 0.0
        %823 = vmatprep.subr.mxu0 0.0
        %824 = vmatpush2.msra.mxu0 0.0
        %825 = vmatprep.subr.mxu0 0.0
        %826 = vmatpush2.msra.mxu0 0.0
        %827 = vmatprep.subr.mxu0 0.0
        %828 = vmatpush2.msra.mxu0 0.0
        %829 = vmatprep.subr.mxu0 0.0
        %830 = vmatpush2.msra.mxu0 0.0
        %831 = vmatprep.subr.mxu0 0.0
        %832 = vmatpush2.msra.mxu0 0.0
        %833 = vmatprep.subr.mxu0 0.0
        %834 = vmatpush2.msra.mxu0 0.0
        %835 = vmatprep.subr.mxu0 0.0
        %836 = vmatpush2.msra.mxu0 0.0
        %837 = vmatprep.subr.mxu0 0.0
        %838 = vmatpush2.msra.mxu0 0.0
        %839 = vmatprep.subr.mxu0 0.0
        %840 = vmatpush2.msra.mxu0 0.0
        %841 = vmatprep.subr.mxu0 0.0
        %842 = vmatpush2.msra.mxu0 0.0
        %843 = vmatprep.subr.mxu0 0.0
        %844 = vmatpush2.msra.mxu0 0.0
        %845 = vmatprep.subr.mxu0 0.0
        %846 = vmatpush2.msra.mxu0 0.0
        %847 = vmatprep.mubr.f32.mxu0 0.0
        %v848 = vand.u32 %v450, 4294901760
        %v849 = vsub.f32 %v450, %v848
        %v850 = vand.u32 %v849, 4294901760
        %851 = vmatmul.mubr.f32.gmra.mxu0 %v850
        %v852 = vpop.f32.mrf.mxu0
        %v853 = vadd.f32 %v753, %v852
        %v854 = vpop.f32.mrf.mxu0
        %v855 = vadd.f32 %v755, %v854
        %856 = vmatprep.mubr.f32.mxu0 0.0
        %v857 = vand.u32 %v453, 4294901760
        %v858 = vsub.f32 %v453, %v857
        %v859 = vand.u32 %v858, 4294901760
        %860 = vmatmul.mubr.f32.gmra.mxu0 %v859
        %v861 = vpop.f32.mrf.mxu0
        %v862 = vadd.f32 %v761, %v861
        %v863 = vpop.f32.mrf.mxu0
        %v864 = vadd.f32 %v763, %v863
        %865 = vmatprep.mubr.f32.mxu0 0.0
        %v866 = vand.u32 %v456, 4294901760
        %v867 = vsub.f32 %v456, %v866
        %v868 = vand.u32 %v867, 4294901760
        %869 = vmatmul.mubr.f32.gmra.mxu0 %v868
        %v870 = vpop.f32.mrf.mxu0
        %v871 = vadd.f32 %v769, %v870
        %v872 = vpop.f32.mrf.mxu0
        %v873 = vadd.f32 %v771, %v872
        %874 = vmatprep.mubr.f32.mxu0 0.0
        %v875 = vand.u32 %v459, 4294901760
        %v876 = vsub.f32 %v459, %v875
        %v877 = vand.u32 %v876, 4294901760
        %878 = vmatmul.mubr.f32.gmra.mxu0 %v877
        %v879 = vpop.f32.mrf.mxu0
        %v880 = vadd.f32 %v777, %v879
        %v881 = vpop.f32.mrf.mxu0
        %v882 = vadd.f32 %v779, %v881
        %883 = vdwg.mxu0
        %884 = vmatprep.subr.mxu0 0.0
        %885 = vmatpush1.msra.mxu0 0.0
        %886 = vmatprep.subr.mxu0 0.0
        %887 = vmatpush1.msra.mxu0 0.0
        %888 = vmatprep.subr.mxu0 0.0
        %889 = vmatpush1.msra.mxu0 0.0
        %890 = vmatprep.subr.mxu0 0.0
        %891 = vmatpush1.msra.mxu0 0.0
        %892 = vmatprep.subr.mxu0 0.0
        %893 = vmatpush1.msra.mxu0 0.0
        %894 = vmatprep.subr.mxu0 0.0
        %895 = vmatpush1.msra.mxu0 0.0
        %896 = vmatprep.subr.mxu0 0.0
        %897 = vmatpush1.msra.mxu0 0.0
        %898 = vmatprep.subr.mxu0 0.0
        %899 = vmatpush1.msra.mxu0 0.0
        %900 = vmatprep.subr.mxu0 0.0
        %901 = vmatpush1.msra.mxu0 0.0
        %902 = vmatprep.subr.mxu0 0.0
        %903 = vmatpush1.msra.mxu0 0.0
        %904 = vmatprep.subr.mxu0 0.0
        %905 = vmatpush1.msra.mxu0 0.0
        %906 = vmatprep.subr.mxu0 0.0
        %907 = vmatpush1.msra.mxu0 0.0
        %908 = vmatprep.subr.mxu0 0.0
        %909 = vmatpush1.msra.mxu0 0.0
        %910 = vmatprep.subr.mxu0 0.0
        %911 = vmatpush1.msra.mxu0 0.0
        %912 = vmatprep.subr.mxu0 0.0
        %913 = vmatpush1.msra.mxu0 0.0
        %v914 = vand.u32 %v464, 4294901760
        %v915 = vsub.f32 %v464, %v914
        %v916 = vand.u32 %v915, 4294901760
        %917 = vmatprep.subr.mxu0 %v916
        %v918 = vand.u32 %v462, 4294901760
        %v919 = vsub.f32 %v462, %v918
        %v920 = vand.u32 %v919, 4294901760
        %921 = vmatpush1.msra.mxu0 %v920
        %922 = vmatprep.subr.mxu0 0.0
        %923 = vmatpush2.msra.mxu0 0.0
        %924 = vmatprep.subr.mxu0 0.0
        %925 = vmatpush2.msra.mxu0 0.0
        %926 = vmatprep.subr.mxu0 0.0
        %927 = vmatpush2.msra.mxu0 0.0
        %928 = vmatprep.subr.mxu0 0.0
        %929 = vmatpush2.msra.mxu0 0.0
        %930 = vmatprep.subr.mxu0 0.0
        %931 = vmatpush2.msra.mxu0 0.0
        %932 = vmatprep.subr.mxu0 0.0
        %933 = vmatpush2.msra.mxu0 0.0
        %934 = vmatprep.subr.mxu0 0.0
        %935 = vmatpush2.msra.mxu0 0.0
        %936 = vmatprep.subr.mxu0 0.0
        %937 = vmatpush2.msra.mxu0 0.0
        %938 = vmatprep.subr.mxu0 0.0
        %939 = vmatpush2.msra.mxu0 0.0
        %940 = vmatprep.subr.mxu0 0.0
        %941 = vmatpush2.msra.mxu0 0.0
        %942 = vmatprep.subr.mxu0 0.0
        %943 = vmatpush2.msra.mxu0 0.0
        %944 = vmatprep.subr.mxu0 0.0
        %945 = vmatpush2.msra.mxu0 0.0
        %946 = vmatprep.subr.mxu0 0.0
        %947 = vmatpush2.msra.mxu0 0.0
        %948 = vmatprep.subr.mxu0 0.0
        %949 = vmatpush2.msra.mxu0 0.0
        %950 = vmatprep.subr.mxu0 0.0
        %951 = vmatpush2.msra.mxu0 0.0
        %952 = vmatprep.subr.mxu0 0.0
        %953 = vmatpush2.msra.mxu0 0.0
        %954 = vmatprep.mubr.f32.mxu0 0.0
        %v955 = vand.u32 %v450, 4294901760
        %956 = vmatmul.mubr.f32.gmra.mxu0 %v955
        %v957 = vpop.f32.mrf.mxu0
        %v958 = vadd.f32 %v853, %v957
        %v959 = vpop.f32.mrf.mxu0
        %v960 = vadd.f32 %v855, %v959
        %961 = vmatprep.mubr.f32.mxu0 0.0
        %v962 = vand.u32 %v453, 4294901760
        %963 = vmatmul.mubr.f32.gmra.mxu0 %v962
        %v964 = vpop.f32.mrf.mxu0
        %v965 = vadd.f32 %v862, %v964
        %v966 = vpop.f32.mrf.mxu0
        %v967 = vadd.f32 %v864, %v966
        %968 = vmatprep.mubr.f32.mxu0 0.0
        %v969 = vand.u32 %v456, 4294901760
        %970 = vmatmul.mubr.f32.gmra.mxu0 %v969
        %v971 = vpop.f32.mrf.mxu0
        %v972 = vadd.f32 %v871, %v971
        %v973 = vpop.f32.mrf.mxu0
        %v974 = vadd.f32 %v873, %v973
        %975 = vmatprep.mubr.f32.mxu0 0.0
        %v976 = vand.u32 %v459, 4294901760
        %977 = vmatmul.mubr.f32.gmra.mxu0 %v976
        %v978 = vpop.f32.mrf.mxu0
        %v979 = vadd.f32 %v880, %v978
        %v980 = vpop.f32.mrf.mxu0
        %v981 = vadd.f32 %v882, %v980
        %982 = vdwg.mxu0
        %983 = vmatprep.subr.mxu0 0.0
        %984 = vmatpush1.msra.mxu0 0.0
        %985 = vmatprep.subr.mxu0 0.0
        %986 = vmatpush1.msra.mxu0 0.0
        %987 = vmatprep.subr.mxu0 0.0
        %988 = vmatpush1.msra.mxu0 0.0
        %989 = vmatprep.subr.mxu0 0.0
        %990 = vmatpush1.msra.mxu0 0.0
        %991 = vmatprep.subr.mxu0 0.0
        %992 = vmatpush1.msra.mxu0 0.0
        %993 = vmatprep.subr.mxu0 0.0
        %994 = vmatpush1.msra.mxu0 0.0
        %995 = vmatprep.subr.mxu0 0.0
        %996 = vmatpush1.msra.mxu0 0.0
        %997 = vmatprep.subr.mxu0 0.0
        %998 = vmatpush1.msra.mxu0 0.0
        %999 = vmatprep.subr.mxu0 0.0
        %1000 = vmatpush1.msra.mxu0 0.0
        %1001 = vmatprep.subr.mxu0 0.0
        %1002 = vmatpush1.msra.mxu0 0.0
        %1003 = vmatprep.subr.mxu0 0.0
        %1004 = vmatpush1.msra.mxu0 0.0
        %1005 = vmatprep.subr.mxu0 0.0
        %1006 = vmatpush1.msra.mxu0 0.0
        %1007 = vmatprep.subr.mxu0 0.0
        %1008 = vmatpush1.msra.mxu0 0.0
        %1009 = vmatprep.subr.mxu0 0.0
        %1010 = vmatpush1.msra.mxu0 0.0
        %1011 = vmatprep.subr.mxu0 0.0
        %1012 = vmatpush1.msra.mxu0 0.0
        %v1013 = vand.u32 %v464, 4294901760
        %1014 = vmatprep.subr.mxu0 %v1013
        %v1015 = vand.u32 %v462, 4294901760
        %1016 = vmatpush1.msra.mxu0 %v1015
        %1017 = vmatprep.subr.mxu0 0.0
        %1018 = vmatpush2.msra.mxu0 0.0
        %1019 = vmatprep.subr.mxu0 0.0
        %1020 = vmatpush2.msra.mxu0 0.0
        %1021 = vmatprep.subr.mxu0 0.0
        %1022 = vmatpush2.msra.mxu0 0.0
        %1023 = vmatprep.subr.mxu0 0.0
        %1024 = vmatpush2.msra.mxu0 0.0
        %1025 = vmatprep.subr.mxu0 0.0
        %1026 = vmatpush2.msra.mxu0 0.0
        %1027 = vmatprep.subr.mxu0 0.0
        %1028 = vmatpush2.msra.mxu0 0.0
        %1029 = vmatprep.subr.mxu0 0.0
        %1030 = vmatpush2.msra.mxu0 0.0
        %1031 = vmatprep.subr.mxu0 0.0
        %1032 = vmatpush2.msra.mxu0 0.0
        %1033 = vmatprep.subr.mxu0 0.0
        %1034 = vmatpush2.msra.mxu0 0.0
        %1035 = vmatprep.subr.mxu0 0.0
        %1036 = vmatpush2.msra.mxu0 0.0
        %1037 = vmatprep.subr.mxu0 0.0
        %1038 = vmatpush2.msra.mxu0 0.0
        %1039 = vmatprep.subr.mxu0 0.0
        %1040 = vmatpush2.msra.mxu0 0.0
        %1041 = vmatprep.subr.mxu0 0.0
        %1042 = vmatpush2.msra.mxu0 0.0
        %1043 = vmatprep.subr.mxu0 0.0
        %1044 = vmatpush2.msra.mxu0 0.0
        %1045 = vmatprep.subr.mxu0 0.0
        %1046 = vmatpush2.msra.mxu0 0.0
        %1047 = vmatprep.subr.mxu0 0.0
        %1048 = vmatpush2.msra.mxu0 0.0
        %1049 = vmatprep.mubr.f32.mxu0 0.0
        %v1050 = vand.u32 %v450, 4294901760
        %1051 = vmatmul.mubr.f32.gmra.mxu0 %v1050
        %v1052 = vpop.f32.mrf.mxu0
        %v1053 = vadd.f32 %v958, %v1052
        %v1054 = vpop.f32.mrf.mxu0
        %v1055 = vadd.f32 %v960, %v1054
        %1056 = vmatprep.mubr.f32.mxu0 0.0
        %v1057 = vand.u32 %v453, 4294901760
        %1058 = vmatmul.mubr.f32.gmra.mxu0 %v1057
        %v1059 = vpop.f32.mrf.mxu0
        %v1060 = vadd.f32 %v965, %v1059
        %v1061 = vpop.f32.mrf.mxu0
        %v1062 = vadd.f32 %v967, %v1061
        %1063 = vmatprep.mubr.f32.mxu0 0.0
        %v1064 = vand.u32 %v456, 4294901760
        %1065 = vmatmul.mubr.f32.gmra.mxu0 %v1064
        %v1066 = vpop.f32.mrf.mxu0
        %v1067 = vadd.f32 %v972, %v1066
        %v1068 = vpop.f32.mrf.mxu0
        %v1069 = vadd.f32 %v974, %v1068
        %1070 = vmatprep.mubr.f32.mxu0 0.0
        %v1071 = vand.u32 %v459, 4294901760
        %1072 = vmatmul.mubr.f32.gmra.mxu0 %v1071
        %v1073 = vpop.f32.mrf.mxu0
        %v1074 = vadd.f32 %v979, %v1073
        %v1075 = vpop.f32.mrf.mxu0
        %v1076 = vadd.f32 %v981, %v1075
        %1077 = vdwg.mxu0
        %v1079 = vcombine.high %v407, %v407
        %v1081 = vsel %vm448, %v408, 0
        %v1084 = vsel %vm448, %v409, 0
        %v1087 = vsel %vm448, %v410, 0
        %v1090 = vsel %vm448, %v411, 0
        %v1092 = vsel %vm461, %v407, 0
        %v1094 = vsel %vm461, %v1079, 0
        %1096 = vmatprep.subr.mxu0 0.0
        %1097 = vmatpush1.msra.mxu0 0.0
        %1098 = vmatprep.subr.mxu0 0.0
        %1099 = vmatpush1.msra.mxu0 0.0
        %1100 = vmatprep.subr.mxu0 0.0
        %1101 = vmatpush1.msra.mxu0 0.0
        %1102 = vmatprep.subr.mxu0 0.0
        %1103 = vmatpush1.msra.mxu0 0.0
        %1104 = vmatprep.subr.mxu0 0.0
        %1105 = vmatpush1.msra.mxu0 0.0
        %1106 = vmatprep.subr.mxu0 0.0
        %1107 = vmatpush1.msra.mxu0 0.0
        %1108 = vmatprep.subr.mxu0 0.0
        %1109 = vmatpush1.msra.mxu0 0.0
        %1110 = vmatprep.subr.mxu0 0.0
        %1111 = vmatpush1.msra.mxu0 0.0
        %1112 = vmatprep.subr.mxu0 0.0
        %1113 = vmatpush1.msra.mxu0 0.0
        %1114 = vmatprep.subr.mxu0 0.0
        %1115 = vmatpush1.msra.mxu0 0.0
        %1116 = vmatprep.subr.mxu0 0.0
        %1117 = vmatpush1.msra.mxu0 0.0
        %1118 = vmatprep.subr.mxu0 0.0
        %1119 = vmatpush1.msra.mxu0 0.0
        %1120 = vmatprep.subr.mxu0 0.0
        %1121 = vmatpush1.msra.mxu0 0.0
        %1122 = vmatprep.subr.mxu0 0.0
        %1123 = vmatpush1.msra.mxu0 0.0
        %1124 = vmatprep.subr.mxu0 0.0
        %1125 = vmatpush1.msra.mxu0 0.0
        %v1126 = vand.u32 %v1094, 4294901760
        %1127 = vmatprep.subr.mxu0 %v1126
        %v1128 = vand.u32 %v1092, 4294901760
        %1129 = vmatpush1.msra.mxu0 %v1128
        %1130 = vmatprep.subr.mxu0 0.0
        %1131 = vmatpush2.msra.mxu0 0.0
        %1132 = vmatprep.subr.mxu0 0.0
        %1133 = vmatpush2.msra.mxu0 0.0
        %1134 = vmatprep.subr.mxu0 0.0
        %1135 = vmatpush2.msra.mxu0 0.0
        %1136 = vmatprep.subr.mxu0 0.0
        %1137 = vmatpush2.msra.mxu0 0.0
        %1138 = vmatprep.subr.mxu0 0.0
        %1139 = vmatpush2.msra.mxu0 0.0
        %1140 = vmatprep.subr.mxu0 0.0
        %1141 = vmatpush2.msra.mxu0 0.0
        %1142 = vmatprep.subr.mxu0 0.0
        %1143 = vmatpush2.msra.mxu0 0.0
        %1144 = vmatprep.subr.mxu0 0.0
        %1145 = vmatpush2.msra.mxu0 0.0
        %1146 = vmatprep.subr.mxu0 0.0
        %1147 = vmatpush2.msra.mxu0 0.0
        %1148 = vmatprep.subr.mxu0 0.0
        %1149 = vmatpush2.msra.mxu0 0.0
        %1150 = vmatprep.subr.mxu0 0.0
        %1151 = vmatpush2.msra.mxu0 0.0
        %1152 = vmatprep.subr.mxu0 0.0
        %1153 = vmatpush2.msra.mxu0 0.0
        %1154 = vmatprep.subr.mxu0 0.0
        %1155 = vmatpush2.msra.mxu0 0.0
        %1156 = vmatprep.subr.mxu0 0.0
        %1157 = vmatpush2.msra.mxu0 0.0
        %1158 = vmatprep.subr.mxu0 0.0
        %1159 = vmatpush2.msra.mxu0 0.0
        %1160 = vmatprep.subr.mxu0 0.0
        %1161 = vmatpush2.msra.mxu0 0.0
        %1162 = vmatprep.mubr.f32.mxu0 0.0
        %v1163 = vand.u32 %v1081, 4294901760
        %v1164 = vsub.f32 %v1081, %v1163
        %v1165 = vand.u32 %v1164, 4294901760
        %v1166 = vsub.f32 %v1164, %v1165
        %v1167 = vand.u32 %v1166, 4294901760
        %1168 = vmatmul.mubr.f32.gmra.mxu0 %v1167
        %v1169 = vpop.f32.mrf.mxu0
        %v1170 = vadd.f32 %v1053, %v1169
        %v1171 = vpop.f32.mrf.mxu0
        %v1172 = vadd.f32 %v1055, %v1171
        %1173 = vmatprep.mubr.f32.mxu0 0.0
        %v1174 = vand.u32 %v1084, 4294901760
        %v1175 = vsub.f32 %v1084, %v1174
        %v1176 = vand.u32 %v1175, 4294901760
        %v1177 = vsub.f32 %v1175, %v1176
        %v1178 = vand.u32 %v1177, 4294901760
        %1179 = vmatmul.mubr.f32.gmra.mxu0 %v1178
        %v1180 = vpop.f32.mrf.mxu0
        %v1181 = vadd.f32 %v1060, %v1180
        %v1182 = vpop.f32.mrf.mxu0
        %v1183 = vadd.f32 %v1062, %v1182
        %1184 = vmatprep.mubr.f32.mxu0 0.0
        %v1185 = vand.u32 %v1087, 4294901760
        %v1186 = vsub.f32 %v1087, %v1185
        %v1187 = vand.u32 %v1186, 4294901760
        %v1188 = vsub.f32 %v1186, %v1187
        %v1189 = vand.u32 %v1188, 4294901760
        %1190 = vmatmul.mubr.f32.gmra.mxu0 %v1189
        %v1191 = vpop.f32.mrf.mxu0
        %v1192 = vadd.f32 %v1067, %v1191
        %v1193 = vpop.f32.mrf.mxu0
        %v1194 = vadd.f32 %v1069, %v1193
        %1195 = vmatprep.mubr.f32.mxu0 0.0
        %v1196 = vand.u32 %v1090, 4294901760
        %v1197 = vsub.f32 %v1090, %v1196
        %v1198 = vand.u32 %v1197, 4294901760
        %v1199 = vsub.f32 %v1197, %v1198
        %v1200 = vand.u32 %v1199, 4294901760
        %1201 = vmatmul.mubr.f32.gmra.mxu0 %v1200
        %v1202 = vpop.f32.mrf.mxu0
        %v1203 = vadd.f32 %v1074, %v1202
        %v1204 = vpop.f32.mrf.mxu0
        %v1205 = vadd.f32 %v1076, %v1204
        %1206 = vdwg.mxu0
        %1207 = vmatprep.subr.mxu0 0.0
        %1208 = vmatpush1.msra.mxu0 0.0
        %1209 = vmatprep.subr.mxu0 0.0
        %1210 = vmatpush1.msra.mxu0 0.0
        %1211 = vmatprep.subr.mxu0 0.0
        %1212 = vmatpush1.msra.mxu0 0.0
        %1213 = vmatprep.subr.mxu0 0.0
        %1214 = vmatpush1.msra.mxu0 0.0
        %1215 = vmatprep.subr.mxu0 0.0
        %1216 = vmatpush1.msra.mxu0 0.0
        %1217 = vmatprep.subr.mxu0 0.0
        %1218 = vmatpush1.msra.mxu0 0.0
        %1219 = vmatprep.subr.mxu0 0.0
        %1220 = vmatpush1.msra.mxu0 0.0
        %1221 = vmatprep.subr.mxu0 0.0
        %1222 = vmatpush1.msra.mxu0 0.0
        %1223 = vmatprep.subr.mxu0 0.0
        %1224 = vmatpush1.msra.mxu0 0.0
        %1225 = vmatprep.subr.mxu0 0.0
        %1226 = vmatpush1.msra.mxu0 0.0
        %1227 = vmatprep.subr.mxu0 0.0
        %1228 = vmatpush1.msra.mxu0 0.0
        %1229 = vmatprep.subr.mxu0 0.0
        %1230 = vmatpush1.msra.mxu0 0.0
        %1231 = vmatprep.subr.mxu0 0.0
        %1232 = vmatpush1.msra.mxu0 0.0
        %1233 = vmatprep.subr.mxu0 0.0
        %1234 = vmatpush1.msra.mxu0 0.0
        %1235 = vmatprep.subr.mxu0 0.0
        %1236 = vmatpush1.msra.mxu0 0.0
        %v1237 = vand.u32 %v1094, 4294901760
        %v1238 = vsub.f32 %v1094, %v1237
        %v1239 = vand.u32 %v1238, 4294901760
        %v1240 = vsub.f32 %v1238, %v1239
        %v1241 = vand.u32 %v1240, 4294901760
        %1242 = vmatprep.subr.mxu0 %v1241
        %v1243 = vand.u32 %v1092, 4294901760
        %v1244 = vsub.f32 %v1092, %v1243
        %v1245 = vand.u32 %v1244, 4294901760
        %v1246 = vsub.f32 %v1244, %v1245
        %v1247 = vand.u32 %v1246, 4294901760
        %1248 = vmatpush1.msra.mxu0 %v1247
        %1249 = vmatprep.subr.mxu0 0.0
        %1250 = vmatpush2.msra.mxu0 0.0
        %1251 = vmatprep.subr.mxu0 0.0
        %1252 = vmatpush2.msra.mxu0 0.0
        %1253 = vmatprep.subr.mxu0 0.0
        %1254 = vmatpush2.msra.mxu0 0.0
        %1255 = vmatprep.subr.mxu0 0.0
        %1256 = vmatpush2.msra.mxu0 0.0
        %1257 = vmatprep.subr.mxu0 0.0
        %1258 = vmatpush2.msra.mxu0 0.0
        %1259 = vmatprep.subr.mxu0 0.0
        %1260 = vmatpush2.msra.mxu0 0.0
        %1261 = vmatprep.subr.mxu0 0.0
        %1262 = vmatpush2.msra.mxu0 0.0
        %1263 = vmatprep.subr.mxu0 0.0
        %1264 = vmatpush2.msra.mxu0 0.0
        %1265 = vmatprep.subr.mxu0 0.0
        %1266 = vmatpush2.msra.mxu0 0.0
        %1267 = vmatprep.subr.mxu0 0.0
        %1268 = vmatpush2.msra.mxu0 0.0
        %1269 = vmatprep.subr.mxu0 0.0
        %1270 = vmatpush2.msra.mxu0 0.0
        %1271 = vmatprep.subr.mxu0 0.0
        %1272 = vmatpush2.msra.mxu0 0.0
        %1273 = vmatprep.subr.mxu0 0.0
        %1274 = vmatpush2.msra.mxu0 0.0
        %1275 = vmatprep.subr.mxu0 0.0
        %1276 = vmatpush2.msra.mxu0 0.0
        %1277 = vmatprep.subr.mxu0 0.0
        %1278 = vmatpush2.msra.mxu0 0.0
        %1279 = vmatprep.subr.mxu0 0.0
        %1280 = vmatpush2.msra.mxu0 0.0
        %1281 = vmatprep.mubr.f32.mxu0 0.0
        %v1282 = vand.u32 %v1081, 4294901760
        %1283 = vmatmul.mubr.f32.gmra.mxu0 %v1282
        %v1284 = vpop.f32.mrf.mxu0
        %v1285 = vadd.f32 %v1170, %v1284
        %v1286 = vpop.f32.mrf.mxu0
        %v1287 = vadd.f32 %v1172, %v1286
        %1288 = vmatprep.mubr.f32.mxu0 0.0
        %v1289 = vand.u32 %v1084, 4294901760
        %1290 = vmatmul.mubr.f32.gmra.mxu0 %v1289
        %v1291 = vpop.f32.mrf.mxu0
        %v1292 = vadd.f32 %v1181, %v1291
        %v1293 = vpop.f32.mrf.mxu0
        %v1294 = vadd.f32 %v1183, %v1293
        %1295 = vmatprep.mubr.f32.mxu0 0.0
        %v1296 = vand.u32 %v1087, 4294901760
        %1297 = vmatmul.mubr.f32.gmra.mxu0 %v1296
        %v1298 = vpop.f32.mrf.mxu0
        %v1299 = vadd.f32 %v1192, %v1298
        %v1300 = vpop.f32.mrf.mxu0
        %v1301 = vadd.f32 %v1194, %v1300
        %1302 = vmatprep.mubr.f32.mxu0 0.0
        %v1303 = vand.u32 %v1090, 4294901760
        %1304 = vmatmul.mubr.f32.gmra.mxu0 %v1303
        %v1305 = vpop.f32.mrf.mxu0
        %v1306 = vadd.f32 %v1203, %v1305
        %v1307 = vpop.f32.mrf.mxu0
        %v1308 = vadd.f32 %v1205, %v1307
        %1309 = vdwg.mxu0
        %1310 = vmatprep.subr.mxu0 0.0
        %1311 = vmatpush1.msra.mxu0 0.0
        %1312 = vmatprep.subr.mxu0 0.0
        %1313 = vmatpush1.msra.mxu0 0.0
        %1314 = vmatprep.subr.mxu0 0.0
        %1315 = vmatpush1.msra.mxu0 0.0
        %1316 = vmatprep.subr.mxu0 0.0
        %1317 = vmatpush1.msra.mxu0 0.0
        %1318 = vmatprep.subr.mxu0 0.0
        %1319 = vmatpush1.msra.mxu0 0.0
        %1320 = vmatprep.subr.mxu0 0.0
        %1321 = vmatpush1.msra.mxu0 0.0
        %1322 = vmatprep.subr.mxu0 0.0
        %1323 = vmatpush1.msra.mxu0 0.0
        %1324 = vmatprep.subr.mxu0 0.0
        %1325 = vmatpush1.msra.mxu0 0.0
        %1326 = vmatprep.subr.mxu0 0.0
        %1327 = vmatpush1.msra.mxu0 0.0
        %1328 = vmatprep.subr.mxu0 0.0
        %1329 = vmatpush1.msra.mxu0 0.0
        %1330 = vmatprep.subr.mxu0 0.0
        %1331 = vmatpush1.msra.mxu0 0.0
        %1332 = vmatprep.subr.mxu0 0.0
        %1333 = vmatpush1.msra.mxu0 0.0
        %1334 = vmatprep.subr.mxu0 0.0
        %1335 = vmatpush1.msra.mxu0 0.0
        %1336 = vmatprep.subr.mxu0 0.0
        %1337 = vmatpush1.msra.mxu0 0.0
        %1338 = vmatprep.subr.mxu0 0.0
        %1339 = vmatpush1.msra.mxu0 0.0
        %v1340 = vand.u32 %v1094, 4294901760
        %v1341 = vsub.f32 %v1094, %v1340
        %1342 = vmatprep.subr.mxu0 %v1341
        %v1343 = vand.u32 %v1092, 4294901760
        %v1344 = vsub.f32 %v1092, %v1343
        %1345 = vmatpush1.msra.mxu0 %v1344
        %1346 = vmatprep.subr.mxu0 0.0
        %1347 = vmatpush2.msra.mxu0 0.0
        %1348 = vmatprep.subr.mxu0 0.0
        %1349 = vmatpush2.msra.mxu0 0.0
        %1350 = vmatprep.subr.mxu0 0.0
        %1351 = vmatpush2.msra.mxu0 0.0
        %1352 = vmatprep.subr.mxu0 0.0
        %1353 = vmatpush2.msra.mxu0 0.0
        %1354 = vmatprep.subr.mxu0 0.0
        %1355 = vmatpush2.msra.mxu0 0.0
        %1356 = vmatprep.subr.mxu0 0.0
        %1357 = vmatpush2.msra.mxu0 0.0
        %1358 = vmatprep.subr.mxu0 0.0
        %1359 = vmatpush2.msra.mxu0 0.0
        %1360 = vmatprep.subr.mxu0 0.0
        %1361 = vmatpush2.msra.mxu0 0.0
        %1362 = vmatprep.subr.mxu0 0.0
        %1363 = vmatpush2.msra.mxu0 0.0
        %1364 = vmatprep.subr.mxu0 0.0
        %1365 = vmatpush2.msra.mxu0 0.0
        %1366 = vmatprep.subr.mxu0 0.0
        %1367 = vmatpush2.msra.mxu0 0.0
        %1368 = vmatprep.subr.mxu0 0.0
        %1369 = vmatpush2.msra.mxu0 0.0
        %1370 = vmatprep.subr.mxu0 0.0
        %1371 = vmatpush2.msra.mxu0 0.0
        %1372 = vmatprep.subr.mxu0 0.0
        %1373 = vmatpush2.msra.mxu0 0.0
        %1374 = vmatprep.subr.mxu0 0.0
        %1375 = vmatpush2.msra.mxu0 0.0
        %1376 = vmatprep.subr.mxu0 0.0
        %1377 = vmatpush2.msra.mxu0 0.0
        %1378 = vmatprep.mubr.f32.mxu0 0.0
        %v1379 = vand.u32 %v1081, 4294901760
        %v1380 = vsub.f32 %v1081, %v1379
        %1381 = vmatmul.mubr.f32.gmra.mxu0 %v1380
        %v1382 = vpop.f32.mrf.mxu0
        %v1383 = vadd.f32 %v1285, %v1382
        %v1384 = vpop.f32.mrf.mxu0
        %v1385 = vadd.f32 %v1287, %v1384
        %1386 = vmatprep.mubr.f32.mxu0 0.0
        %v1387 = vand.u32 %v1084, 4294901760
        %v1388 = vsub.f32 %v1084, %v1387
        %1389 = vmatmul.mubr.f32.gmra.mxu0 %v1388
        %v1390 = vpop.f32.mrf.mxu0
        %v1391 = vadd.f32 %v1292, %v1390
        %v1392 = vpop.f32.mrf.mxu0
        %v1393 = vadd.f32 %v1294, %v1392
        %1394 = vmatprep.mubr.f32.mxu0 0.0
        %v1395 = vand.u32 %v1087, 4294901760
        %v1396 = vsub.f32 %v1087, %v1395
        %1397 = vmatmul.mubr.f32.gmra.mxu0 %v1396
        %v1398 = vpop.f32.mrf.mxu0
        %v1399 = vadd.f32 %v1299, %v1398
        %v1400 = vpop.f32.mrf.mxu0
        %v1401 = vadd.f32 %v1301, %v1400
        %1402 = vmatprep.mubr.f32.mxu0 0.0
        %v1403 = vand.u32 %v1090, 4294901760
        %v1404 = vsub.f32 %v1090, %v1403
        %1405 = vmatmul.mubr.f32.gmra.mxu0 %v1404
        %v1406 = vpop.f32.mrf.mxu0
        %v1407 = vadd.f32 %v1306, %v1406
        %v1408 = vpop.f32.mrf.mxu0
        %v1409 = vadd.f32 %v1308, %v1408
        %1410 = vdwg.mxu0
        %1411 = vmatprep.subr.mxu0 0.0
        %1412 = vmatpush1.msra.mxu0 0.0
        %1413 = vmatprep.subr.mxu0 0.0
        %1414 = vmatpush1.msra.mxu0 0.0
        %1415 = vmatprep.subr.mxu0 0.0
        %1416 = vmatpush1.msra.mxu0 0.0
        %1417 = vmatprep.subr.mxu0 0.0
        %1418 = vmatpush1.msra.mxu0 0.0
        %1419 = vmatprep.subr.mxu0 0.0
        %1420 = vmatpush1.msra.mxu0 0.0
        %1421 = vmatprep.subr.mxu0 0.0
        %1422 = vmatpush1.msra.mxu0 0.0
        %1423 = vmatprep.subr.mxu0 0.0
        %1424 = vmatpush1.msra.mxu0 0.0
        %1425 = vmatprep.subr.mxu0 0.0
        %1426 = vmatpush1.msra.mxu0 0.0
        %1427 = vmatprep.subr.mxu0 0.0
        %1428 = vmatpush1.msra.mxu0 0.0
        %1429 = vmatprep.subr.mxu0 0.0
        %1430 = vmatpush1.msra.mxu0 0.0
        %1431 = vmatprep.subr.mxu0 0.0
        %1432 = vmatpush1.msra.mxu0 0.0
        %1433 = vmatprep.subr.mxu0 0.0
        %1434 = vmatpush1.msra.mxu0 0.0
        %1435 = vmatprep.subr.mxu0 0.0
        %1436 = vmatpush1.msra.mxu0 0.0
        %1437 = vmatprep.subr.mxu0 0.0
        %1438 = vmatpush1.msra.mxu0 0.0
        %1439 = vmatprep.subr.mxu0 0.0
        %1440 = vmatpush1.msra.mxu0 0.0
        %v1441 = vand.u32 %v1094, 4294901760
        %1442 = vmatprep.subr.mxu0 %v1441
        %v1443 = vand.u32 %v1092, 4294901760
        %1444 = vmatpush1.msra.mxu0 %v1443
        %1445 = vmatprep.subr.mxu0 0.0
        %1446 = vmatpush2.msra.mxu0 0.0
        %1447 = vmatprep.subr.mxu0 0.0
        %1448 = vmatpush2.msra.mxu0 0.0
        %1449 = vmatprep.subr.mxu0 0.0
        %1450 = vmatpush2.msra.mxu0 0.0
        %1451 = vmatprep.subr.mxu0 0.0
        %1452 = vmatpush2.msra.mxu0 0.0
        %1453 = vmatprep.subr.mxu0 0.0
        %1454 = vmatpush2.msra.mxu0 0.0
        %1455 = vmatprep.subr.mxu0 0.0
        %1456 = vmatpush2.msra.mxu0 0.0
        %1457 = vmatprep.subr.mxu0 0.0
        %1458 = vmatpush2.msra.mxu0 0.0
        %1459 = vmatprep.subr.mxu0 0.0
        %1460 = vmatpush2.msra.mxu0 0.0
        %1461 = vmatprep.subr.mxu0 0.0
        %1462 = vmatpush2.msra.mxu0 0.0
        %1463 = vmatprep.subr.mxu0 0.0
        %1464 = vmatpush2.msra.mxu0 0.0
        %1465 = vmatprep.subr.mxu0 0.0
        %1466 = vmatpush2.msra.mxu0 0.0
        %1467 = vmatprep.subr.mxu0 0.0
        %1468 = vmatpush2.msra.mxu0 0.0
        %1469 = vmatprep.subr.mxu0 0.0
        %1470 = vmatpush2.msra.mxu0 0.0
        %1471 = vmatprep.subr.mxu0 0.0
        %1472 = vmatpush2.msra.mxu0 0.0
        %1473 = vmatprep.subr.mxu0 0.0
        %1474 = vmatpush2.msra.mxu0 0.0
        %1475 = vmatprep.subr.mxu0 0.0
        %1476 = vmatpush2.msra.mxu0 0.0
        %1477 = vmatprep.mubr.f32.mxu0 0.0
        %v1478 = vand.u32 %v1081, 4294901760
        %v1479 = vsub.f32 %v1081, %v1478
        %v1480 = vand.u32 %v1479, 4294901760
        %1481 = vmatmul.mubr.f32.gmra.mxu0 %v1480
        %v1482 = vpop.f32.mrf.mxu0
        %v1483 = vadd.f32 %v1383, %v1482
        %v1484 = vpop.f32.mrf.mxu0
        %v1485 = vadd.f32 %v1385, %v1484
        %1486 = vmatprep.mubr.f32.mxu0 0.0
        %v1487 = vand.u32 %v1084, 4294901760
        %v1488 = vsub.f32 %v1084, %v1487
        %v1489 = vand.u32 %v1488, 4294901760
        %1490 = vmatmul.mubr.f32.gmra.mxu0 %v1489
        %v1491 = vpop.f32.mrf.mxu0
        %v1492 = vadd.f32 %v1391, %v1491
        %v1493 = vpop.f32.mrf.mxu0
        %v1494 = vadd.f32 %v1393, %v1493
        %1495 = vmatprep.mubr.f32.mxu0 0.0
        %v1496 = vand.u32 %v1087, 4294901760
        %v1497 = vsub.f32 %v1087, %v1496
        %v1498 = vand.u32 %v1497, 4294901760
        %1499 = vmatmul.mubr.f32.gmra.mxu0 %v1498
        %v1500 = vpop.f32.mrf.mxu0
        %v1501 = vadd.f32 %v1399, %v1500
        %v1502 = vpop.f32.mrf.mxu0
        %v1503 = vadd.f32 %v1401, %v1502
        %1504 = vmatprep.mubr.f32.mxu0 0.0
        %v1505 = vand.u32 %v1090, 4294901760
        %v1506 = vsub.f32 %v1090, %v1505
        %v1507 = vand.u32 %v1506, 4294901760
        %1508 = vmatmul.mubr.f32.gmra.mxu0 %v1507
        %v1509 = vpop.f32.mrf.mxu0
        %v1510 = vadd.f32 %v1407, %v1509
        %v1511 = vpop.f32.mrf.mxu0
        %v1512 = vadd.f32 %v1409, %v1511
        %1513 = vdwg.mxu0
        %1514 = vmatprep.subr.mxu0 0.0
        %1515 = vmatpush1.msra.mxu0 0.0
        %1516 = vmatprep.subr.mxu0 0.0
        %1517 = vmatpush1.msra.mxu0 0.0
        %1518 = vmatprep.subr.mxu0 0.0
        %1519 = vmatpush1.msra.mxu0 0.0
        %1520 = vmatprep.subr.mxu0 0.0
        %1521 = vmatpush1.msra.mxu0 0.0
        %1522 = vmatprep.subr.mxu0 0.0
        %1523 = vmatpush1.msra.mxu0 0.0
        %1524 = vmatprep.subr.mxu0 0.0
        %1525 = vmatpush1.msra.mxu0 0.0
        %1526 = vmatprep.subr.mxu0 0.0
        %1527 = vmatpush1.msra.mxu0 0.0
        %1528 = vmatprep.subr.mxu0 0.0
        %1529 = vmatpush1.msra.mxu0 0.0
        %1530 = vmatprep.subr.mxu0 0.0
        %1531 = vmatpush1.msra.mxu0 0.0
        %1532 = vmatprep.subr.mxu0 0.0
        %1533 = vmatpush1.msra.mxu0 0.0
        %1534 = vmatprep.subr.mxu0 0.0
        %1535 = vmatpush1.msra.mxu0 0.0
        %1536 = vmatprep.subr.mxu0 0.0
        %1537 = vmatpush1.msra.mxu0 0.0
        %1538 = vmatprep.subr.mxu0 0.0
        %1539 = vmatpush1.msra.mxu0 0.0
        %1540 = vmatprep.subr.mxu0 0.0
        %1541 = vmatpush1.msra.mxu0 0.0
        %1542 = vmatprep.subr.mxu0 0.0
        %1543 = vmatpush1.msra.mxu0 0.0
        %v1544 = vand.u32 %v1094, 4294901760
        %v1545 = vsub.f32 %v1094, %v1544
        %v1546 = vand.u32 %v1545, 4294901760
        %1547 = vmatprep.subr.mxu0 %v1546
        %v1548 = vand.u32 %v1092, 4294901760
        %v1549 = vsub.f32 %v1092, %v1548
        %v1550 = vand.u32 %v1549, 4294901760
        %1551 = vmatpush1.msra.mxu0 %v1550
        %1552 = vmatprep.subr.mxu0 0.0
        %1553 = vmatpush2.msra.mxu0 0.0
        %1554 = vmatprep.subr.mxu0 0.0
        %1555 = vmatpush2.msra.mxu0 0.0
        %1556 = vmatprep.subr.mxu0 0.0
        %1557 = vmatpush2.msra.mxu0 0.0
        %1558 = vmatprep.subr.mxu0 0.0
        %1559 = vmatpush2.msra.mxu0 0.0
        %1560 = vmatprep.subr.mxu0 0.0
        %1561 = vmatpush2.msra.mxu0 0.0
        %1562 = vmatprep.subr.mxu0 0.0
        %1563 = vmatpush2.msra.mxu0 0.0
        %1564 = vmatprep.subr.mxu0 0.0
        %1565 = vmatpush2.msra.mxu0 0.0
        %1566 = vmatprep.subr.mxu0 0.0
        %1567 = vmatpush2.msra.mxu0 0.0
        %1568 = vmatprep.subr.mxu0 0.0
        %1569 = vmatpush2.msra.mxu0 0.0
        %1570 = vmatprep.subr.mxu0 0.0
        %1571 = vmatpush2.msra.mxu0 0.0
        %1572 = vmatprep.subr.mxu0 0.0
        %1573 = vmatpush2.msra.mxu0 0.0
        %1574 = vmatprep.subr.mxu0 0.0
        %1575 = vmatpush2.msra.mxu0 0.0
        %1576 = vmatprep.subr.mxu0 0.0
        %1577 = vmatpush2.msra.mxu0 0.0
        %1578 = vmatprep.subr.mxu0 0.0
        %1579 = vmatpush2.msra.mxu0 0.0
        %1580 = vmatprep.subr.mxu0 0.0
        %1581 = vmatpush2.msra.mxu0 0.0
        %1582 = vmatprep.subr.mxu0 0.0
        %1583 = vmatpush2.msra.mxu0 0.0
        %1584 = vmatprep.mubr.f32.mxu0 0.0
        %v1585 = vand.u32 %v1081, 4294901760
        %1586 = vmatmul.mubr.f32.gmra.mxu0 %v1585
        %v1587 = vpop.f32.mrf.mxu0
        %v1588 = vadd.f32 %v1483, %v1587
        %v1589 = vpop.f32.mrf.mxu0
        %v1590 = vadd.f32 %v1485, %v1589
        %1591 = vmatprep.mubr.f32.mxu0 0.0
        %v1592 = vand.u32 %v1084, 4294901760
        %1593 = vmatmul.mubr.f32.gmra.mxu0 %v1592
        %v1594 = vpop.f32.mrf.mxu0
        %v1595 = vadd.f32 %v1492, %v1594
        %v1596 = vpop.f32.mrf.mxu0
        %v1597 = vadd.f32 %v1494, %v1596
        %1598 = vmatprep.mubr.f32.mxu0 0.0
        %v1599 = vand.u32 %v1087, 4294901760
        %1600 = vmatmul.mubr.f32.gmra.mxu0 %v1599
        %v1601 = vpop.f32.mrf.mxu0
        %v1602 = vadd.f32 %v1501, %v1601
        %v1603 = vpop.f32.mrf.mxu0
        %v1604 = vadd.f32 %v1503, %v1603
        %1605 = vmatprep.mubr.f32.mxu0 0.0
        %v1606 = vand.u32 %v1090, 4294901760
        %1607 = vmatmul.mubr.f32.gmra.mxu0 %v1606
        %v1608 = vpop.f32.mrf.mxu0
        %v1609 = vadd.f32 %v1510, %v1608
        %v1610 = vpop.f32.mrf.mxu0
        %v1611 = vadd.f32 %v1512, %v1610
        %1612 = vdwg.mxu0
        %1613 = vmatprep.subr.mxu0 0.0
        %1614 = vmatpush1.msra.mxu0 0.0
        %1615 = vmatprep.subr.mxu0 0.0
        %1616 = vmatpush1.msra.mxu0 0.0
        %1617 = vmatprep.subr.mxu0 0.0
        %1618 = vmatpush1.msra.mxu0 0.0
        %1619 = vmatprep.subr.mxu0 0.0
        %1620 = vmatpush1.msra.mxu0 0.0
        %1621 = vmatprep.subr.mxu0 0.0
        %1622 = vmatpush1.msra.mxu0 0.0
        %1623 = vmatprep.subr.mxu0 0.0
        %1624 = vmatpush1.msra.mxu0 0.0
        %1625 = vmatprep.subr.mxu0 0.0
        %1626 = vmatpush1.msra.mxu0 0.0
        %1627 = vmatprep.subr.mxu0 0.0
        %1628 = vmatpush1.msra.mxu0 0.0
        %1629 = vmatprep.subr.mxu0 0.0
        %1630 = vmatpush1.msra.mxu0 0.0
        %1631 = vmatprep.subr.mxu0 0.0
        %1632 = vmatpush1.msra.mxu0 0.0
        %1633 = vmatprep.subr.mxu0 0.0
        %1634 = vmatpush1.msra.mxu0 0.0
        %1635 = vmatprep.subr.mxu0 0.0
        %1636 = vmatpush1.msra.mxu0 0.0
        %1637 = vmatprep.subr.mxu0 0.0
        %1638 = vmatpush1.msra.mxu0 0.0
        %1639 = vmatprep.subr.mxu0 0.0
        %1640 = vmatpush1.msra.mxu0 0.0
        %1641 = vmatprep.subr.mxu0 0.0
        %1642 = vmatpush1.msra.mxu0 0.0
        %v1643 = vand.u32 %v1094, 4294901760
        %1644 = vmatprep.subr.mxu0 %v1643
        %v1645 = vand.u32 %v1092, 4294901760
        %1646 = vmatpush1.msra.mxu0 %v1645
        %1647 = vmatprep.subr.mxu0 0.0
        %1648 = vmatpush2.msra.mxu0 0.0
        %1649 = vmatprep.subr.mxu0 0.0
        %1650 = vmatpush2.msra.mxu0 0.0
        %1651 = vmatprep.subr.mxu0 0.0
        %1652 = vmatpush2.msra.mxu0 0.0
        %1653 = vmatprep.subr.mxu0 0.0
        %1654 = vmatpush2.msra.mxu0 0.0
        %1655 = vmatprep.subr.mxu0 0.0
        %1656 = vmatpush2.msra.mxu0 0.0
        %1657 = vmatprep.subr.mxu0 0.0
        %1658 = vmatpush2.msra.mxu0 0.0
        %1659 = vmatprep.subr.mxu0 0.0
        %1660 = vmatpush2.msra.mxu0 0.0
        %1661 = vmatprep.subr.mxu0 0.0
        %1662 = vmatpush2.msra.mxu0 0.0
        %1663 = vmatprep.subr.mxu0 0.0
        %1664 = vmatpush2.msra.mxu0 0.0
        %1665 = vmatprep.subr.mxu0 0.0
        %1666 = vmatpush2.msra.mxu0 0.0
        %1667 = vmatprep.subr.mxu0 0.0
        %1668 = vmatpush2.msra.mxu0 0.0
        %1669 = vmatprep.subr.mxu0 0.0
        %1670 = vmatpush2.msra.mxu0 0.0
        %1671 = vmatprep.subr.mxu0 0.0
        %1672 = vmatpush2.msra.mxu0 0.0
        %1673 = vmatprep.subr.mxu0 0.0
        %1674 = vmatpush2.msra.mxu0 0.0
        %1675 = vmatprep.subr.mxu0 0.0
        %1676 = vmatpush2.msra.mxu0 0.0
        %1677 = vmatprep.subr.mxu0 0.0
        %1678 = vmatpush2.msra.mxu0 0.0
        %1679 = vmatprep.mubr.f32.mxu0 0.0
        %v1680 = vand.u32 %v1081, 4294901760
        %1681 = vmatmul.mubr.f32.gmra.mxu0 %v1680
        %v1682 = vpop.f32.mrf.mxu0
        %v1683 = vadd.f32 %v1588, %v1682
        %v1684 = vpop.f32.mrf.mxu0
        %v1685 = vadd.f32 %v1590, %v1684
        %1686 = vmatprep.mubr.f32.mxu0 0.0
        %v1687 = vand.u32 %v1084, 4294901760
        %1688 = vmatmul.mubr.f32.gmra.mxu0 %v1687
        %v1689 = vpop.f32.mrf.mxu0
        %v1690 = vadd.f32 %v1595, %v1689
        %v1691 = vpop.f32.mrf.mxu0
        %v1692 = vadd.f32 %v1597, %v1691
        %1693 = vmatprep.mubr.f32.mxu0 0.0
        %v1694 = vand.u32 %v1087, 4294901760
        %1695 = vmatmul.mubr.f32.gmra.mxu0 %v1694
        %v1696 = vpop.f32.mrf.mxu0
        %v1697 = vadd.f32 %v1602, %v1696
        %v1698 = vpop.f32.mrf.mxu0
        %v1699 = vadd.f32 %v1604, %v1698
        %1700 = vmatprep.mubr.f32.mxu0 0.0
        %v1701 = vand.u32 %v1090, 4294901760
        %1702 = vmatmul.mubr.f32.gmra.mxu0 %v1701
        %v1703 = vpop.f32.mrf.mxu0
        %v1704 = vadd.f32 %v1609, %v1703
        %v1705 = vpop.f32.mrf.mxu0
        %v1706 = vadd.f32 %v1611, %v1705
        %1707 = vdwg.mxu0
        %v1708 = vld [vmem:[%s8] sm:$0xff]
        %v1709 = vld [vmem:[%s8 + $0x8] sm:$0xff]
        %v1710 = vld [vmem:[%s8 + $0x10] sm:$0xff]
        %v1711 = vld [vmem:[%s8 + $0x18] sm:$0xff]
        %1713 = vset.pattern.permute.xlu0 0
        %1714 = vperm.xlu0 %1713, %v1708
        %v1715 = vpop.permute.xlu0 %1714
        %1718 = vset.pattern.permute.xlu0 0
        %1719 = vperm.xlu0 %1718, %v1709
        %v1720 = vpop.permute.xlu0 %1719
        %1723 = vset.pattern.permute.xlu0 0
        %1724 = vperm.xlu0 %1723, %v1710
        %v1725 = vpop.permute.xlu0 %1724
        %1728 = vset.pattern.permute.xlu0 0
        %1729 = vperm.xlu0 %1728, %v1711
        %v1730 = vpop.permute.xlu0 %1729
        %v1732 = vadd.f32 %v1683, %v1715
        %v1733 = vadd.f32 %v1685, %v1715
        %v1734 = vadd.f32 %v1690, %v1720
        %v1735 = vadd.f32 %v1692, %v1720
        %v1736 = vadd.f32 %v1697, %v1725
        %v1737 = vadd.f32 %v1699, %v1725
        %v1738 = vadd.f32 %v1704, %v1730
        %v1739 = vadd.f32 %v1706, %v1730
        %v1740 = vmax.f32 %v1732, 0.0
        %v1741 = vmax.f32 %v1733, 0.0
        %v1742 = vmax.f32 %v1734, 0.0
        %v1743 = vmax.f32 %v1735, 0.0
        %v1744 = vmax.f32 %v1736, 0.0
        %v1745 = vmax.f32 %v1737, 0.0
        %v1746 = vmax.f32 %v1738, 0.0
        %v1747 = vmax.f32 %v1739, 0.0
        %1748 = vst [vmem:[#allocation2] sm:$0xff] 0.0
        %1749 = vst [vmem:[#allocation2 + $0x20] sm:$0xff] 0.0
        %1750 = vst [vmem:[#allocation2 + $0x40] sm:$0xff] 0.0
        %1751 = vst [vmem:[#allocation2 + $0x60] sm:$0xff] 0.0
        %1752 = vst [vmem:[#allocation2 + $0x8] sm:$0xff] %v1740
        %1753 = vst [vmem:[#allocation2 + $0x10] sm:$0xff] %v1741
        %1754 = vst [vmem:[#allocation2 + $0x28] sm:$0xff] %v1742
        %1755 = vst [vmem:[#allocation2 + $0x30] sm:$0xff] %v1743
        %1756 = vst [vmem:[#allocation2 + $0x48] sm:$0xff] %v1744
        %1757 = vst [vmem:[#allocation2 + $0x50] sm:$0xff] %v1745
        %1758 = vst [vmem:[#allocation2 + $0x68] sm:$0xff] %v1746
        %1759 = vst [vmem:[#allocation2 + $0x70] sm:$0xff] %v1747
        %1760 = vst [vmem:[#allocation2 + $0x18] sm:$0xff] 0.0
        %1761 = vst [vmem:[#allocation2 + $0x38] sm:$0xff] 0.0
        %1762 = vst [vmem:[#allocation2 + $0x58] sm:$0xff] 0.0
        %1763 = vst [vmem:[#allocation2 + $0x78] sm:$0xff] 0.0
        %v1764 = vlaneseq
        %v1765 = vand.u32 %v1764, 127
        %v1766 = vadd.s32 %v1765, 128
        %vm1767 = vcmp.lt.s32.totalorder %v1765, 0
        %v1768 = vsub.s32 0, %v1765
        %v1769 = vsel %vm1767, %v1768, %v1765
        %v1770 = vshrl.u32 %v1769, 4
        %v1771 = vand.u32 %v1769, 15
        %v1772 = vsub.s32 0, %v1771
        %v1773 = vsel %vm1767, %v1772, %v1771
        %vm1774 = vcmp.lt.s32.totalorder %v1766, 0
        %v1775 = vsub.s32 0, %v1766
        %v1776 = vsel %vm1774, %v1775, %v1766
        %v1777 = vshrl.u32 %v1776, 4
        %v1778 = vand.u32 %v1776, 15
        %v1779 = vsub.s32 0, %v1778
        %v1780 = vsel %vm1774, %v1779, %v1778
        %vm1781 = vcmp.ne.s32.totalorder %v1773, 0
        %vm1782 = vcmp.ne.s32.totalorder %v1780, 0
        %vm1783 = vcmp.lt.s32.totalorder %v1773, 0
        %vm1784 = vcmp.lt.s32.totalorder %v1780, 0
        %vm1785 = vmand %vm1783, %vm1781
        %vm1786 = vmand %vm1784, %vm1782
        %v1787 = vadd.s32 %v1773, 16
        %v1788 = vadd.s32 %v1780, 16
        %v1789 = vsel %vm1785, %v1787, %v1773
        %v1790 = vsel %vm1786, %v1788, %v1780
        %vm1791 = vcmp.ge.s32.totalorder %v1789, 1
        %vm1792 = vcmp.ge.s32.totalorder %v1790, 1
        %vm1793 = vcmp.le.s32.totalorder %v1789, 14
        %vm1794 = vcmp.le.s32.totalorder %v1790, 14
        %v1795 = vld [vmem:[#allocation2] sm:$0xff]
        %v1796 = vld [vmem:[#allocation2 + $0x8] sm:$0xff]
        %v1797 = vld [vmem:[#allocation2 + $0x10] sm:$0xff]
        %v1798 = vld [vmem:[#allocation2 + $0x20] sm:$0xff]
        %v1799 = vld [vmem:[#allocation2 + $0x28] sm:$0xff]
        %v1800 = vld [vmem:[#allocation2 + $0x30] sm:$0xff]
        %v1801 = vld [vmem:[#allocation2 + $0x40] sm:$0xff]
        %v1802 = vld [vmem:[#allocation2 + $0x48] sm:$0xff]
        %v1803 = vld [vmem:[#allocation2 + $0x50] sm:$0xff]
        %v1804 = vld [vmem:[#allocation2 + $0x60] sm:$0xff]
        %v1805 = vld [vmem:[#allocation2 + $0x68] sm:$0xff]
        %v1806 = vld [vmem:[#allocation2 + $0x70] sm:$0xff]
        %v1807 = vsel %vm1791, 1, 0
        %v1808 = vsel %vm1792, 1, 0
        %vm1809 = vcmp.eq.s32.totalorder %v1807, 1
        %vm1810 = vcmp.eq.s32.totalorder %v1808, 1
        %1823 = vrot.lane.b32.xlu0 %v1795, 17
        %v1824 = vpop.permute.xlu0 %1823
        %1825 = vrot.lane.b32.xlu0 %v1796, 17
        %v1826 = vpop.permute.xlu0 %1825
        %1827 = vrot.lane.b32.xlu0 %v1797, 17
        %v1828 = vpop.permute.xlu0 %1827
        %1829 = vrot.lane.b32.xlu0 %v1798, 17
        %v1830 = vpop.permute.xlu0 %1829
        %1831 = vrot.lane.b32.xlu0 %v1799, 17
        %v1832 = vpop.permute.xlu0 %1831
        %1833 = vrot.lane.b32.xlu0 %v1800, 17
        %v1834 = vpop.permute.xlu0 %1833
        %1835 = vrot.lane.b32.xlu0 %v1801, 17
        %v1836 = vpop.permute.xlu0 %1835
        %1837 = vrot.lane.b32.xlu0 %v1802, 17
        %v1838 = vpop.permute.xlu0 %1837
        %1839 = vrot.lane.b32.xlu0 %v1803, 17
        %v1840 = vpop.permute.xlu0 %1839
        %1841 = vrot.lane.b32.xlu0 %v1804, 17
        %v1842 = vpop.permute.xlu0 %1841
        %1843 = vrot.lane.b32.xlu0 %v1805, 17
        %v1844 = vpop.permute.xlu0 %1843
        %1845 = vrot.lane.b32.xlu0 %v1806, 17
        %v1846 = vpop.permute.xlu0 %1845
        %vm1847 = vcmask 138240
        %v1848 = vsel %vm1847, %v1824, %v1826
        %v1849 = vsel %vm1847, %v1826, %v1828
        %v1850 = vsel %vm1847, %v1830, %v1832
        %v1851 = vsel %vm1847, %v1832, %v1834
        %v1852 = vsel %vm1847, %v1836, %v1838
        %v1853 = vsel %vm1847, %v1838, %v1840
        %v1854 = vsel %vm1847, %v1842, %v1844
        %v1855 = vsel %vm1847, %v1844, %v1846
        %v1864 = vsel %vm1809, %v1848, 0.0
        %v1865 = vsel %vm1810, %v1849, 0.0
        %v1866 = vsel %vm1809, %v1850, 0.0
        %v1867 = vsel %vm1810, %v1851, 0.0
        %v1868 = vsel %vm1809, %v1852, 0.0
        %v1869 = vsel %vm1810, %v1853, 0.0
        %v1870 = vsel %vm1809, %v1854, 0.0
        %v1871 = vsel %vm1810, %v1855, 0.0
        %1872 = vst [vmem:[#allocation3] sm:$0xff] %v1864
        %1873 = vst [vmem:[#allocation3 + $0x8] sm:$0xff] %v1865
        %1874 = vst [vmem:[#allocation3 + $0x10] sm:$0xff] %v1866
        %1875 = vst [vmem:[#allocation3 + $0x18] sm:$0xff] %v1867
        %1876 = vst [vmem:[#allocation3 + $0x20] sm:$0xff] %v1868
        %1877 = vst [vmem:[#allocation3 + $0x28] sm:$0xff] %v1869
        %1878 = vst [vmem:[#allocation3 + $0x30] sm:$0xff] %v1870
        %1879 = vst [vmem:[#allocation3 + $0x38] sm:$0xff] %v1871
        %v1880 = vld [vmem:[#allocation2] sm:$0xff]
        %v1881 = vld [vmem:[#allocation2 + $0x8] sm:$0xff]
        %v1882 = vld [vmem:[#allocation2 + $0x10] sm:$0xff]
        %v1883 = vld [vmem:[#allocation2 + $0x20] sm:$0xff]
        %v1884 = vld [vmem:[#allocation2 + $0x28] sm:$0xff]
        %v1885 = vld [vmem:[#allocation2 + $0x30] sm:$0xff]
        %v1886 = vld [vmem:[#allocation2 + $0x40] sm:$0xff]
        %v1887 = vld [vmem:[#allocation2 + $0x48] sm:$0xff]
        %v1888 = vld [vmem:[#allocation2 + $0x50] sm:$0xff]
        %v1889 = vld [vmem:[#allocation2 + $0x60] sm:$0xff]
        %v1890 = vld [vmem:[#allocation2 + $0x68] sm:$0xff]
        %v1891 = vld [vmem:[#allocation2 + $0x70] sm:$0xff]
        %1904 = vrot.lane.b32.xlu0 %v1880, 16
        %v1905 = vpop.permute.xlu0 %1904
        %1906 = vrot.lane.b32.xlu0 %v1881, 16
        %v1907 = vpop.permute.xlu0 %1906
        %1908 = vrot.lane.b32.xlu0 %v1882, 16
        %v1909 = vpop.permute.xlu0 %1908
        %1910 = vrot.lane.b32.xlu0 %v1883, 16
        %v1911 = vpop.permute.xlu0 %1910
        %1912 = vrot.lane.b32.xlu0 %v1884, 16
        %v1913 = vpop.permute.xlu0 %1912
        %1914 = vrot.lane.b32.xlu0 %v1885, 16
        %v1915 = vpop.permute.xlu0 %1914
        %1916 = vrot.lane.b32.xlu0 %v1886, 16
        %v1917 = vpop.permute.xlu0 %1916
        %1918 = vrot.lane.b32.xlu0 %v1887, 16
        %v1919 = vpop.permute.xlu0 %1918
        %1920 = vrot.lane.b32.xlu0 %v1888, 16
        %v1921 = vpop.permute.xlu0 %1920
        %1922 = vrot.lane.b32.xlu0 %v1889, 16
        %v1923 = vpop.permute.xlu0 %1922
        %1924 = vrot.lane.b32.xlu0 %v1890, 16
        %v1925 = vpop.permute.xlu0 %1924
        %1926 = vrot.lane.b32.xlu0 %v1891, 16
        %v1927 = vpop.permute.xlu0 %1926
        %vm1928 = vcmask 130048
        %v1929 = vsel %vm1928, %v1905, %v1907
        %v1930 = vsel %vm1928, %v1907, %v1909
        %v1931 = vsel %vm1928, %v1911, %v1913
        %v1932 = vsel %vm1928, %v1913, %v1915
        %v1933 = vsel %vm1928, %v1917, %v1919
        %v1934 = vsel %vm1928, %v1919, %v1921
        %v1935 = vsel %vm1928, %v1923, %v1925
        %v1936 = vsel %vm1928, %v1925, %v1927
        %1945 = vst [vmem:[#allocation3 + $0x40] sm:$0xff] %v1929
        %1946 = vst [vmem:[#allocation3 + $0x48] sm:$0xff] %v1930
        %1947 = vst [vmem:[#allocation3 + $0x50] sm:$0xff] %v1931
        %1948 = vst [vmem:[#allocation3 + $0x58] sm:$0xff] %v1932
        %1949 = vst [vmem:[#allocation3 + $0x60] sm:$0xff] %v1933
        %1950 = vst [vmem:[#allocation3 + $0x68] sm:$0xff] %v1934
        %1951 = vst [vmem:[#allocation3 + $0x70] sm:$0xff] %v1935
        %1952 = vst [vmem:[#allocation3 + $0x78] sm:$0xff] %v1936
        %v1953 = vld [vmem:[#allocation2] sm:$0xff]
        %v1954 = vld [vmem:[#allocation2 + $0x8] sm:$0xff]
        %v1955 = vld [vmem:[#allocation2 + $0x10] sm:$0xff]
        %v1956 = vld [vmem:[#allocation2 + $0x20] sm:$0xff]
        %v1957 = vld [vmem:[#allocation2 + $0x28] sm:$0xff]
        %v1958 = vld [vmem:[#allocation2 + $0x30] sm:$0xff]
        %v1959 = vld [vmem:[#allocation2 + $0x40] sm:$0xff]
        %v1960 = vld [vmem:[#allocation2 + $0x48] sm:$0xff]
        %v1961 = vld [vmem:[#allocation2 + $0x50] sm:$0xff]
        %v1962 = vld [vmem:[#allocation2 + $0x60] sm:$0xff]
        %v1963 = vld [vmem:[#allocation2 + $0x68] sm:$0xff]
        %v1964 = vld [vmem:[#allocation2 + $0x70] sm:$0xff]
        %v1965 = vsel %vm1793, 1, 0
        %v1966 = vsel %vm1794, 1, 0
        %vm1967 = vcmp.eq.s32.totalorder %v1965, 1
        %vm1968 = vcmp.eq.s32.totalorder %v1966, 1
        %1981 = vrot.lane.b32.xlu0 %v1953, 15
        %v1982 = vpop.permute.xlu0 %1981
        %1983 = vrot.lane.b32.xlu0 %v1954, 15
        %v1984 = vpop.permute.xlu0 %1983
        %1985 = vrot.lane.b32.xlu0 %v1955, 15
        %v1986 = vpop.permute.xlu0 %1985
        %1987 = vrot.lane.b32.xlu0 %v1956, 15
        %v1988 = vpop.permute.xlu0 %1987
        %1989 = vrot.lane.b32.xlu0 %v1957, 15
        %v1990 = vpop.permute.xlu0 %1989
        %1991 = vrot.lane.b32.xlu0 %v1958, 15
        %v1992 = vpop.permute.xlu0 %1991
        %1993 = vrot.lane.b32.xlu0 %v1959, 15
        %v1994 = vpop.permute.xlu0 %1993
        %1995 = vrot.lane.b32.xlu0 %v1960, 15
        %v1996 = vpop.permute.xlu0 %1995
        %1997 = vrot.lane.b32.xlu0 %v1961, 15
        %v1998 = vpop.permute.xlu0 %1997
        %1999 = vrot.lane.b32.xlu0 %v1962, 15
        %v2000 = vpop.permute.xlu0 %1999
        %2001 = vrot.lane.b32.xlu0 %v1963, 15
        %v2002 = vpop.permute.xlu0 %2001
        %2003 = vrot.lane.b32.xlu0 %v1964, 15
        %v2004 = vpop.permute.xlu0 %2003
        %vm2005 = vcmask 121856
        %v2006 = vsel %vm2005, %v1982, %v1984
        %v2007 = vsel %vm2005, %v1984, %v1986
        %v2008 = vsel %vm2005, %v1988, %v1990
        %v2009 = vsel %vm2005, %v1990, %v1992
        %v2010 = vsel %vm2005, %v1994, %v1996
        %v2011 = vsel %vm2005, %v1996, %v1998
        %v2012 = vsel %vm2005, %v2000, %v2002
        %v2013 = vsel %vm2005, %v2002, %v2004
        %v2022 = vsel %vm1967, %v2006, 0.0
        %v2023 = vsel %vm1968, %v2007, 0.0
        %v2024 = vsel %vm1967, %v2008, 0.0
        %v2025 = vsel %vm1968, %v2009, 0.0
        %v2026 = vsel %vm1967, %v2010, 0.0
        %v2027 = vsel %vm1968, %v2011, 0.0
        %v2028 = vsel %vm1967, %v2012, 0.0
        %v2029 = vsel %vm1968, %v2013, 0.0
        %2030 = vst [vmem:[#allocation3 + $0x80] sm:$0xff] %v2022
        %2031 = vst [vmem:[#allocation3 + $0x88] sm:$0xff] %v2023
        %2032 = vst [vmem:[#allocation3 + $0x90] sm:$0xff] %v2024
        %2033 = vst [vmem:[#allocation3 + $0x98] sm:$0xff] %v2025
        %2034 = vst [vmem:[#allocation3 + $0xa0] sm:$0xff] %v2026
        %2035 = vst [vmem:[#allocation3 + $0xa8] sm:$0xff] %v2027
        %2036 = vst [vmem:[#allocation3 + $0xb0] sm:$0xff] %v2028
        %2037 = vst [vmem:[#allocation3 + $0xb8] sm:$0xff] %v2029
        %v2038 = vld [vmem:[#allocation2] sm:$0xff]
        %v2039 = vld [vmem:[#allocation2 + $0x8] sm:$0xff]
        %v2040 = vld [vmem:[#allocation2 + $0x10] sm:$0xff]
        %v2041 = vld [vmem:[#allocation2 + $0x20] sm:$0xff]
        %v2042 = vld [vmem:[#allocation2 + $0x28] sm:$0xff]
        %v2043 = vld [vmem:[#allocation2 + $0x30] sm:$0xff]
        %v2044 = vld [vmem:[#allocation2 + $0x40] sm:$0xff]
        %v2045 = vld [vmem:[#allocation2 + $0x48] sm:$0xff]
        %v2046 = vld [vmem:[#allocation2 + $0x50] sm:$0xff]
        %v2047 = vld [vmem:[#allocation2 + $0x60] sm:$0xff]
        %v2048 = vld [vmem:[#allocation2 + $0x68] sm:$0xff]
        %v2049 = vld [vmem:[#allocation2 + $0x70] sm:$0xff]
        %2062 = vrot.lane.b32.xlu0 %v2038, 1
        %v2063 = vpop.permute.xlu0 %2062
        %2064 = vrot.lane.b32.xlu0 %v2039, 1
        %v2065 = vpop.permute.xlu0 %2064
        %2066 = vrot.lane.b32.xlu0 %v2040, 1
        %v2067 = vpop.permute.xlu0 %2066
        %2068 = vrot.lane.b32.xlu0 %v2041, 1
        %v2069 = vpop.permute.xlu0 %2068
        %2070 = vrot.lane.b32.xlu0 %v2042, 1
        %v2071 = vpop.permute.xlu0 %2070
        %2072 = vrot.lane.b32.xlu0 %v2043, 1
        %v2073 = vpop.permute.xlu0 %2072
        %2074 = vrot.lane.b32.xlu0 %v2044, 1
        %v2075 = vpop.permute.xlu0 %2074
        %2076 = vrot.lane.b32.xlu0 %v2045, 1
        %v2077 = vpop.permute.xlu0 %2076
        %2078 = vrot.lane.b32.xlu0 %v2046, 1
        %v2079 = vpop.permute.xlu0 %2078
        %2080 = vrot.lane.b32.xlu0 %v2047, 1
        %v2081 = vpop.permute.xlu0 %2080
        %2082 = vrot.lane.b32.xlu0 %v2048, 1
        %v2083 = vpop.permute.xlu0 %2082
        %2084 = vrot.lane.b32.xlu0 %v2049, 1
        %v2085 = vpop.permute.xlu0 %2084
        %vm2086 = vcmask 7168
        %v2087 = vsel %vm2086, %v2063, %v2065
        %v2088 = vsel %vm2086, %v2065, %v2067
        %v2089 = vsel %vm2086, %v2069, %v2071
        %v2090 = vsel %vm2086, %v2071, %v2073
        %v2091 = vsel %vm2086, %v2075, %v2077
        %v2092 = vsel %vm2086, %v2077, %v2079
        %v2093 = vsel %vm2086, %v2081, %v2083
        %v2094 = vsel %vm2086, %v2083, %v2085
        %v2103 = vsel %vm1809, %v2087, 0.0
        %v2104 = vsel %vm1810, %v2088, 0.0
        %v2105 = vsel %vm1809, %v2089, 0.0
        %v2106 = vsel %vm1810, %v2090, 0.0
        %v2107 = vsel %vm1809, %v2091, 0.0
        %v2108 = vsel %vm1810, %v2092, 0.0
        %v2109 = vsel %vm1809, %v2093, 0.0
        %v2110 = vsel %vm1810, %v2094, 0.0
        %2111 = vst [vmem:[#allocation3 + $0xc0] sm:$0xff] %v2103
        %2112 = vst [vmem:[#allocation3 + $0xc8] sm:$0xff] %v2104
        %2113 = vst [vmem:[#allocation3 + $0xd0] sm:$0xff] %v2105
        %2114 = vst [vmem:[#allocation3 + $0xd8] sm:$0xff] %v2106
        %2115 = vst [vmem:[#allocation3 + $0xe0] sm:$0xff] %v2107
        %2116 = vst [vmem:[#allocation3 + $0xe8] sm:$0xff] %v2108
        %2117 = vst [vmem:[#allocation3 + $0xf0] sm:$0xff] %v2109
        %2118 = vst [vmem:[#allocation3 + $0xf8] sm:$0xff] %v2110
        %v2119 = vld [vmem:[#allocation2 + $0x8] sm:$0xff]
        %v2120 = vld [vmem:[#allocation2 + $0x10] sm:$0xff]
        %v2121 = vld [vmem:[#allocation2 + $0x28] sm:$0xff]
        %v2122 = vld [vmem:[#allocation2 + $0x30] sm:$0xff]
        %v2123 = vld [vmem:[#allocation2 + $0x48] sm:$0xff]
        %v2124 = vld [vmem:[#allocation2 + $0x50] sm:$0xff]
        %v2125 = vld [vmem:[#allocation2 + $0x68] sm:$0xff]
        %v2126 = vld [vmem:[#allocation2 + $0x70] sm:$0xff]
        %2127 = vst [vmem:[#allocation3 + $0x100] sm:$0xff] %v2119
        %2128 = vst [vmem:[#allocation3 + $0x108] sm:$0xff] %v2120
        %2129 = vst [vmem:[#allocation3 + $0x110] sm:$0xff] %v2121
        %2130 = vst [vmem:[#allocation3 + $0x118] sm:$0xff] %v2122
        %2131 = vst [vmem:[#allocation3 + $0x120] sm:$0xff] %v2123
        %2132 = vst [vmem:[#allocation3 + $0x128] sm:$0xff] %v2124
        %2133 = vst [vmem:[#allocation3 + $0x130] sm:$0xff] %v2125
        %2134 = vst [vmem:[#allocation3 + $0x138] sm:$0xff] %v2126
        %v2135 = vld [vmem:[#allocation2 + $0x8] sm:$0xff]
        %v2136 = vld [vmem:[#allocation2 + $0x10] sm:$0xff]
        %v2137 = vld [vmem:[#allocation2 + $0x18] sm:$0xff]
        %v2138 = vld [vmem:[#allocation2 + $0x28] sm:$0xff]
        %v2139 = vld [vmem:[#allocation2 + $0x30] sm:$0xff]
        %v2140 = vld [vmem:[#allocation2 + $0x38] sm:$0xff]
        %v2141 = vld [vmem:[#allocation2 + $0x48] sm:$0xff]
        %v2142 = vld [vmem:[#allocation2 + $0x50] sm:$0xff]
        %v2143 = vld [vmem:[#allocation2 + $0x58] sm:$0xff]
        %v2144 = vld [vmem:[#allocation2 + $0x68] sm:$0xff]
        %v2145 = vld [vmem:[#allocation2 + $0x70] sm:$0xff]
        %v2146 = vld [vmem:[#allocation2 + $0x78] sm:$0xff]
        %2159 = vrot.lane.b32.xlu0 %v2135, 127
        %v2160 = vpop.permute.xlu0 %2159
        %2161 = vrot.lane.b32.xlu0 %v2136, 127
        %v2162 = vpop.permute.xlu0 %2161
        %2163 = vrot.lane.b32.xlu0 %v2137, 127
        %v2164 = vpop.permute.xlu0 %2163
        %2165 = vrot.lane.b32.xlu0 %v2138, 127
        %v2166 = vpop.permute.xlu0 %2165
        %2167 = vrot.lane.b32.xlu0 %v2139, 127
        %v2168 = vpop.permute.xlu0 %2167
        %2169 = vrot.lane.b32.xlu0 %v2140, 127
        %v2170 = vpop.permute.xlu0 %2169
        %2171 = vrot.lane.b32.xlu0 %v2141, 127
        %v2172 = vpop.permute.xlu0 %2171
        %2173 = vrot.lane.b32.xlu0 %v2142, 127
        %v2174 = vpop.permute.xlu0 %2173
        %2175 = vrot.lane.b32.xlu0 %v2143, 127
        %v2176 = vpop.permute.xlu0 %2175
        %2177 = vrot.lane.b32.xlu0 %v2144, 127
        %v2178 = vpop.permute.xlu0 %2177
        %2179 = vrot.lane.b32.xlu0 %v2145, 127
        %v2180 = vpop.permute.xlu0 %2179
        %2181 = vrot.lane.b32.xlu0 %v2146, 127
        %v2182 = vpop.permute.xlu0 %2181
        %vm2183 = vcmask 1039360
        %v2184 = vsel %vm2183, %v2160, %v2162
        %v2185 = vsel %vm2183, %v2162, %v2164
        %v2186 = vsel %vm2183, %v2166, %v2168
        %v2187 = vsel %vm2183, %v2168, %v2170
        %v2188 = vsel %vm2183, %v2172, %v2174
        %v2189 = vsel %vm2183, %v2174, %v2176
        %v2190 = vsel %vm2183, %v2178, %v2180
        %v2191 = vsel %vm2183, %v2180, %v2182
        %v2200 = vsel %vm1967, %v2184, 0.0
        %v2201 = vsel %vm1968, %v2185, 0.0
        %v2202 = vsel %vm1967, %v2186, 0.0
        %v2203 = vsel %vm1968, %v2187, 0.0
        %v2204 = vsel %vm1967, %v2188, 0.0
        %v2205 = vsel %vm1968, %v2189, 0.0
        %v2206 = vsel %vm1967, %v2190, 0.0
        %v2207 = vsel %vm1968, %v2191, 0.0
        %2208 = vst [vmem:[#allocation3 + $0x140] sm:$0xff] %v2200
        %2209 = vst [vmem:[#allocation3 + $0x148] sm:$0xff] %v2201
        %2210 = vst [vmem:[#allocation3 + $0x150] sm:$0xff] %v2202
        %2211 = vst [vmem:[#allocation3 + $0x158] sm:$0xff] %v2203
        %2212 = vst [vmem:[#allocation3 + $0x160] sm:$0xff] %v2204
        %2213 = vst [vmem:[#allocation3 + $0x168] sm:$0xff] %v2205
        %2214 = vst [vmem:[#allocation3 + $0x170] sm:$0xff] %v2206
        %2215 = vst [vmem:[#allocation3 + $0x178] sm:$0xff] %v2207
        %v2216 = vld [vmem:[#allocation2 + $0x8] sm:$0xff]
        %v2217 = vld [vmem:[#allocation2 + $0x10] sm:$0xff]
        %v2218 = vld [vmem:[#allocation2 + $0x18] sm:$0xff]
        %v2219 = vld [vmem:[#allocation2 + $0x28] sm:$0xff]
        %v2220 = vld [vmem:[#allocation2 + $0x30] sm:$0xff]
        %v2221 = vld [vmem:[#allocation2 + $0x38] sm:$0xff]
        %v2222 = vld [vmem:[#allocation2 + $0x48] sm:$0xff]
        %v2223 = vld [vmem:[#allocation2 + $0x50] sm:$0xff]
        %v2224 = vld [vmem:[#allocation2 + $0x58] sm:$0xff]
        %v2225 = vld [vmem:[#allocation2 + $0x68] sm:$0xff]
        %v2226 = vld [vmem:[#allocation2 + $0x70] sm:$0xff]
        %v2227 = vld [vmem:[#allocation2 + $0x78] sm:$0xff]
        %2240 = vrot.lane.b32.xlu0 %v2216, 113
        %v2241 = vpop.permute.xlu0 %2240
        %2242 = vrot.lane.b32.xlu0 %v2217, 113
        %v2243 = vpop.permute.xlu0 %2242
        %2244 = vrot.lane.b32.xlu0 %v2218, 113
        %v2245 = vpop.permute.xlu0 %2244
        %2246 = vrot.lane.b32.xlu0 %v2219, 113
        %v2247 = vpop.permute.xlu0 %2246
        %2248 = vrot.lane.b32.xlu0 %v2220, 113
        %v2249 = vpop.permute.xlu0 %2248
        %2250 = vrot.lane.b32.xlu0 %v2221, 113
        %v2251 = vpop.permute.xlu0 %2250
        %2252 = vrot.lane.b32.xlu0 %v2222, 113
        %v2253 = vpop.permute.xlu0 %2252
        %2254 = vrot.lane.b32.xlu0 %v2223, 113
        %v2255 = vpop.permute.xlu0 %2254
        %2256 = vrot.lane.b32.xlu0 %v2224, 113
        %v2257 = vpop.permute.xlu0 %2256
        %2258 = vrot.lane.b32.xlu0 %v2225, 113
        %v2259 = vpop.permute.xlu0 %2258
        %2260 = vrot.lane.b32.xlu0 %v2226, 113
        %v2261 = vpop.permute.xlu0 %2260
        %2262 = vrot.lane.b32.xlu0 %v2227, 113
        %v2263 = vpop.permute.xlu0 %2262
        %vm2264 = vcmask 924672
        %v2265 = vsel %vm2264, %v2241, %v2243
        %v2266 = vsel %vm2264, %v2243, %v2245
        %v2267 = vsel %vm2264, %v2247, %v2249
        %v2268 = vsel %vm2264, %v2249, %v2251
        %v2269 = vsel %vm2264, %v2253, %v2255
        %v2270 = vsel %vm2264, %v2255, %v2257
        %v2271 = vsel %vm2264, %v2259, %v2261
        %v2272 = vsel %vm2264, %v2261, %v2263
        %v2281 = vsel %vm1809, %v2265, 0.0
        %v2282 = vsel %vm1810, %v2266, 0.0
        %v2283 = vsel %vm1809, %v2267, 0.0
        %v2284 = vsel %vm1810, %v2268, 0.0
        %v2285 = vsel %vm1809, %v2269, 0.0
        %v2286 = vsel %vm1810, %v2270, 0.0
        %v2287 = vsel %vm1809, %v2271, 0.0
        %v2288 = vsel %vm1810, %v2272, 0.0
        %2289 = vst [vmem:[#allocation3 + $0x180] sm:$0xff] %v2281
        %2290 = vst [vmem:[#allocation3 + $0x188] sm:$0xff] %v2282
        %2291 = vst [vmem:[#allocation3 + $0x190] sm:$0xff] %v2283
        %2292 = vst [vmem:[#allocation3 + $0x198] sm:$0xff] %v2284
        %2293 = vst [vmem:[#allocation3 + $0x1a0] sm:$0xff] %v2285
        %2294 = vst [vmem:[#allocation3 + $0x1a8] sm:$0xff] %v2286
        %2295 = vst [vmem:[#allocation3 + $0x1b0] sm:$0xff] %v2287
        %2296 = vst [vmem:[#allocation3 + $0x1b8] sm:$0xff] %v2288
        %v2297 = vld [vmem:[#allocation2 + $0x8] sm:$0xff]
        %v2298 = vld [vmem:[#allocation2 + $0x10] sm:$0xff]
        %v2299 = vld [vmem:[#allocation2 + $0x18] sm:$0xff]
        %v2300 = vld [vmem:[#allocation2 + $0x28] sm:$0xff]
        %v2301 = vld [vmem:[#allocation2 + $0x30] sm:$0xff]
        %v2302 = vld [vmem:[#allocation2 + $0x38] sm:$0xff]
        %v2303 = vld [vmem:[#allocation2 + $0x48] sm:$0xff]
        %v2304 = vld [vmem:[#allocation2 + $0x50] sm:$0xff]
        %v2305 = vld [vmem:[#allocation2 + $0x58] sm:$0xff]
        %v2306 = vld [vmem:[#allocation2 + $0x68] sm:$0xff]
        %v2307 = vld [vmem:[#allocation2 + $0x70] sm:$0xff]
        %v2308 = vld [vmem:[#allocation2 + $0x78] sm:$0xff]
        %2321 = vrot.lane.b32.xlu0 %v2297, 112
        %v2322 = vpop.permute.xlu0 %2321
        %2323 = vrot.lane.b32.xlu0 %v2298, 112
        %v2324 = vpop.permute.xlu0 %2323
        %2325 = vrot.lane.b32.xlu0 %v2299, 112
        %v2326 = vpop.permute.xlu0 %2325
        %2327 = vrot.lane.b32.xlu0 %v2300, 112
        %v2328 = vpop.permute.xlu0 %2327
        %2329 = vrot.lane.b32.xlu0 %v2301, 112
        %v2330 = vpop.permute.xlu0 %2329
        %2331 = vrot.lane.b32.xlu0 %v2302, 112
        %v2332 = vpop.permute.xlu0 %2331
        %2333 = vrot.lane.b32.xlu0 %v2303, 112
        %v2334 = vpop.permute.xlu0 %2333
        %2335 = vrot.lane.b32.xlu0 %v2304, 112
        %v2336 = vpop.permute.xlu0 %2335
        %2337 = vrot.lane.b32.xlu0 %v2305, 112
        %v2338 = vpop.permute.xlu0 %2337
        %2339 = vrot.lane.b32.xlu0 %v2306, 112
        %v2340 = vpop.permute.xlu0 %2339
        %2341 = vrot.lane.b32.xlu0 %v2307, 112
        %v2342 = vpop.permute.xlu0 %2341
        %2343 = vrot.lane.b32.xlu0 %v2308, 112
        %v2344 = vpop.permute.xlu0 %2343
        %vm2345 = vcmask 916480
        %v2346 = vsel %vm2345, %v2322, %v2324
        %v2347 = vsel %vm2345, %v2324, %v2326
        %v2348 = vsel %vm2345, %v2328, %v2330
        %v2349 = vsel %vm2345, %v2330, %v2332
        %v2350 = vsel %vm2345, %v2334, %v2336
        %v2351 = vsel %vm2345, %v2336, %v2338
        %v2352 = vsel %vm2345, %v2340, %v2342
        %v2353 = vsel %vm2345, %v2342, %v2344
        %2362 = vst [vmem:[#allocation3 + $0x1c0] sm:$0xff] %v2346
        %2363 = vst [vmem:[#allocation3 + $0x1c8] sm:$0xff] %v2347
        %2364 = vst [vmem:[#allocation3 + $0x1d0] sm:$0xff] %v2348
        %2365 = vst [vmem:[#allocation3 + $0x1d8] sm:$0xff] %v2349
        %2366 = vst [vmem:[#allocation3 + $0x1e0] sm:$0xff] %v2350
        %2367 = vst [vmem:[#allocation3 + $0x1e8] sm:$0xff] %v2351
        %2368 = vst [vmem:[#allocation3 + $0x1f0] sm:$0xff] %v2352
        %2369 = vst [vmem:[#allocation3 + $0x1f8] sm:$0xff] %v2353
        %v2370 = vld [vmem:[#allocation2 + $0x8] sm:$0xff]
        %v2371 = vld [vmem:[#allocation2 + $0x10] sm:$0xff]
        %v2372 = vld [vmem:[#allocation2 + $0x18] sm:$0xff]
        %v2373 = vld [vmem:[#allocation2 + $0x28] sm:$0xff]
        %v2374 = vld [vmem:[#allocation2 + $0x30] sm:$0xff]
        %v2375 = vld [vmem:[#allocation2 + $0x38] sm:$0xff]
        %v2376 = vld [vmem:[#allocation2 + $0x48] sm:$0xff]
        %v2377 = vld [vmem:[#allocation2 + $0x50] sm:$0xff]
        %v2378 = vld [vmem:[#allocation2 + $0x58] sm:$0xff]
        %v2379 = vld [vmem:[#allocation2 + $0x68] sm:$0xff]
        %v2380 = vld [vmem:[#allocation2 + $0x70] sm:$0xff]
        %v2381 = vld [vmem:[#allocation2 + $0x78] sm:$0xff]
        %2394 = vrot.lane.b32.xlu0 %v2370, 111
        %v2395 = vpop.permute.xlu0 %2394
        %2396 = vrot.lane.b32.xlu0 %v2371, 111
        %v2397 = vpop.permute.xlu0 %2396
        %2398 = vrot.lane.b32.xlu0 %v2372, 111
        %v2399 = vpop.permute.xlu0 %2398
        %2400 = vrot.lane.b32.xlu0 %v2373, 111
        %v2401 = vpop.permute.xlu0 %2400
        %2402 = vrot.lane.b32.xlu0 %v2374, 111
        %v2403 = vpop.permute.xlu0 %2402
        %2404 = vrot.lane.b32.xlu0 %v2375, 111
        %v2405 = vpop.permute.xlu0 %2404
        %2406 = vrot.lane.b32.xlu0 %v2376, 111
        %v2407 = vpop.permute.xlu0 %2406
        %2408 = vrot.lane.b32.xlu0 %v2377, 111
        %v2409 = vpop.permute.xlu0 %2408
        %2410 = vrot.lane.b32.xlu0 %v2378, 111
        %v2411 = vpop.permute.xlu0 %2410
        %2412 = vrot.lane.b32.xlu0 %v2379, 111
        %v2413 = vpop.permute.xlu0 %2412
        %2414 = vrot.lane.b32.xlu0 %v2380, 111
        %v2415 = vpop.permute.xlu0 %2414
        %2416 = vrot.lane.b32.xlu0 %v2381, 111
        %v2417 = vpop.permute.xlu0 %2416
        %vm2418 = vcmask 908288
        %v2419 = vsel %vm2418, %v2395, %v2397
        %v2420 = vsel %vm2418, %v2397, %v2399
        %v2421 = vsel %vm2418, %v2401, %v2403
        %v2422 = vsel %vm2418, %v2403, %v2405
        %v2423 = vsel %vm2418, %v2407, %v2409
        %v2424 = vsel %vm2418, %v2409, %v2411
        %v2425 = vsel %vm2418, %v2413, %v2415
        %v2426 = vsel %vm2418, %v2415, %v2417
        %v2435 = vsel %vm1967, %v2419, 0.0
        %v2436 = vsel %vm1968, %v2420, 0.0
        %v2437 = vsel %vm1967, %v2421, 0.0
        %v2438 = vsel %vm1968, %v2422, 0.0
        %v2439 = vsel %vm1967, %v2423, 0.0
        %v2440 = vsel %vm1968, %v2424, 0.0
        %v2441 = vsel %vm1967, %v2425, 0.0
        %v2442 = vsel %vm1968, %v2426, 0.0
        %2443 = vst [vmem:[#allocation3 + $0x200] sm:$0xff] %v2435
        %2444 = vst [vmem:[#allocation3 + $0x208] sm:$0xff] %v2436
        %2445 = vst [vmem:[#allocation3 + $0x210] sm:$0xff] %v2437
        %2446 = vst [vmem:[#allocation3 + $0x218] sm:$0xff] %v2438
        %2447 = vst [vmem:[#allocation3 + $0x220] sm:$0xff] %v2439
        %2448 = vst [vmem:[#allocation3 + $0x228] sm:$0xff] %v2440
        %2449 = vst [vmem:[#allocation3 + $0x230] sm:$0xff] %v2441
        %2450 = vst [vmem:[#allocation3 + $0x238] sm:$0xff] %v2442
        %v2451 = vld [vmem:[%s9] sm:$0xff]
        %v2452 = vld [vmem:[%s9 + $0x8] sm:$0xff]
        %v2453 = vld [vmem:[%s9 + $0x10] sm:$0xff]
        %v2454 = vld [vmem:[#allocation3] sm:$0xff]
        %v2455 = vld [vmem:[#allocation3 + $0x8] sm:$0xff]
        %v2456 = vld [vmem:[#allocation3 + $0x10] sm:$0xff]
        %v2457 = vld [vmem:[#allocation3 + $0x18] sm:$0xff]
        %v2458 = vld [vmem:[#allocation3 + $0x20] sm:$0xff]
        %v2459 = vld [vmem:[#allocation3 + $0x28] sm:$0xff]
        %v2460 = vld [vmem:[#allocation3 + $0x30] sm:$0xff]
        %v2461 = vld [vmem:[#allocation3 + $0x38] sm:$0xff]
        %v2462 = vld [vmem:[#allocation3 + $0x40] sm:$0xff]
        %v2463 = vld [vmem:[#allocation3 + $0x48] sm:$0xff]
        %v2464 = vld [vmem:[#allocation3 + $0x50] sm:$0xff]
        %v2465 = vld [vmem:[#allocation3 + $0x58] sm:$0xff]
        %v2466 = vld [vmem:[#allocation3 + $0x60] sm:$0xff]
        %v2467 = vld [vmem:[#allocation3 + $0x68] sm:$0xff]
        %v2468 = vld [vmem:[#allocation3 + $0x70] sm:$0xff]
        %v2469 = vld [vmem:[#allocation3 + $0x78] sm:$0xff]
        %v2470 = vld [vmem:[#allocation3 + $0x80] sm:$0xff]
        %v2471 = vld [vmem:[#allocation3 + $0x88] sm:$0xff]
        %v2472 = vld [vmem:[#allocation3 + $0x90] sm:$0xff]
        %v2473 = vld [vmem:[#allocation3 + $0x98] sm:$0xff]
        %v2474 = vld [vmem:[#allocation3 + $0xa0] sm:$0xff]
        %v2475 = vld [vmem:[#allocation3 + $0xa8] sm:$0xff]
        %v2476 = vld [vmem:[#allocation3 + $0xb0] sm:$0xff]
        %v2477 = vld [vmem:[#allocation3 + $0xb8] sm:$0xff]
        %v2478 = vld [vmem:[#allocation3 + $0xc0] sm:$0xff]
        %v2479 = vld [vmem:[#allocation3 + $0xc8] sm:$0xff]
        %v2480 = vld [vmem:[#allocation3 + $0xd0] sm:$0xff]
        %v2481 = vld [vmem:[#allocation3 + $0xd8] sm:$0xff]
        %v2482 = vld [vmem:[#allocation3 + $0xe0] sm:$0xff]
        %v2483 = vld [vmem:[#allocation3 + $0xe8] sm:$0xff]
        %v2484 = vld [vmem:[#allocation3 + $0xf0] sm:$0xff]
        %v2485 = vld [vmem:[#allocation3 + $0xf8] sm:$0xff]
        %v2486 = vld [vmem:[#allocation3 + $0x100] sm:$0xff]
        %v2487 = vld [vmem:[#allocation3 + $0x108] sm:$0xff]
        %v2488 = vld [vmem:[#allocation3 + $0x110] sm:$0xff]
        %v2489 = vld [vmem:[#allocation3 + $0x118] sm:$0xff]
        %v2490 = vld [vmem:[#allocation3 + $0x120] sm:$0xff]
        %v2491 = vld [vmem:[#allocation3 + $0x128] sm:$0xff]
        %v2492 = vld [vmem:[#allocation3 + $0x130] sm:$0xff]
        %v2493 = vld [vmem:[#allocation3 + $0x138] sm:$0xff]
        %v2494 = vld [vmem:[#allocation3 + $0x140] sm:$0xff]
        %v2495 = vld [vmem:[#allocation3 + $0x148] sm:$0xff]
        %v2496 = vld [vmem:[#allocation3 + $0x150] sm:$0xff]
        %v2497 = vld [vmem:[#allocation3 + $0x158] sm:$0xff]
        %v2498 = vld [vmem:[#allocation3 + $0x160] sm:$0xff]
        %v2499 = vld [vmem:[#allocation3 + $0x168] sm:$0xff]
        %v2500 = vld [vmem:[#allocation3 + $0x170] sm:$0xff]
        %v2501 = vld [vmem:[#allocation3 + $0x178] sm:$0xff]
        %v2502 = vld [vmem:[#allocation3 + $0x180] sm:$0xff]
        %v2503 = vld [vmem:[#allocation3 + $0x188] sm:$0xff]
        %v2504 = vld [vmem:[#allocation3 + $0x190] sm:$0xff]
        %v2505 = vld [vmem:[#allocation3 + $0x198] sm:$0xff]
        %v2506 = vld [vmem:[#allocation3 + $0x1a0] sm:$0xff]
        %v2507 = vld [vmem:[#allocation3 + $0x1a8] sm:$0xff]
        %v2508 = vld [vmem:[#allocation3 + $0x1b0] sm:$0xff]
        %v2509 = vld [vmem:[#allocation3 + $0x1b8] sm:$0xff]
        %v2510 = vld [vmem:[#allocation3 + $0x1c0] sm:$0xff]
        %v2511 = vld [vmem:[#allocation3 + $0x1c8] sm:$0xff]
        %v2512 = vld [vmem:[#allocation3 + $0x1d0] sm:$0xff]
        %v2513 = vld [vmem:[#allocation3 + $0x1d8] sm:$0xff]
        %v2514 = vld [vmem:[#allocation3 + $0x1e0] sm:$0xff]
        %v2515 = vld [vmem:[#allocation3 + $0x1e8] sm:$0xff]
        %v2516 = vld [vmem:[#allocation3 + $0x1f0] sm:$0xff]
        %v2517 = vld [vmem:[#allocation3 + $0x1f8] sm:$0xff]
        %v2518 = vld [vmem:[#allocation3 + $0x200] sm:$0xff]
        %v2519 = vld [vmem:[#allocation3 + $0x208] sm:$0xff]
        %v2520 = vld [vmem:[#allocation3 + $0x210] sm:$0xff]
        %v2521 = vld [vmem:[#allocation3 + $0x218] sm:$0xff]
        %v2522 = vld [vmem:[#allocation3 + $0x220] sm:$0xff]
        %v2523 = vld [vmem:[#allocation3 + $0x228] sm:$0xff]
        %v2524 = vld [vmem:[#allocation3 + $0x230] sm:$0xff]
        %v2525 = vld [vmem:[#allocation3 + $0x238] sm:$0xff]
        %vm2526 = vcmask 261120
        %v2528 = vsel %vm2526, %v2453, 0
        %v2530 = vand.u32 %v2485, 4294901760
        %2531 = vmatprep.subr.mxu0 %v2530
        %v2532 = vand.u32 %v2484, 4294901760
        %2533 = vmatpush1.msra.mxu0 %v2532
        %v2534 = vand.u32 %v2483, 4294901760
        %2535 = vmatprep.subr.mxu0 %v2534
        %v2536 = vand.u32 %v2482, 4294901760
        %2537 = vmatpush1.msra.mxu0 %v2536
        %v2538 = vand.u32 %v2481, 4294901760
        %2539 = vmatprep.subr.mxu0 %v2538
        %v2540 = vand.u32 %v2480, 4294901760
        %2541 = vmatpush1.msra.mxu0 %v2540
        %v2542 = vand.u32 %v2479, 4294901760
        %2543 = vmatprep.subr.mxu0 %v2542
        %v2544 = vand.u32 %v2478, 4294901760
        %2545 = vmatpush1.msra.mxu0 %v2544
        %v2546 = vand.u32 %v2477, 4294901760
        %2547 = vmatprep.subr.mxu0 %v2546
        %v2548 = vand.u32 %v2476, 4294901760
        %2549 = vmatpush1.msra.mxu0 %v2548
        %v2550 = vand.u32 %v2475, 4294901760
        %2551 = vmatprep.subr.mxu0 %v2550
        %v2552 = vand.u32 %v2474, 4294901760
        %2553 = vmatpush1.msra.mxu0 %v2552
        %v2554 = vand.u32 %v2473, 4294901760
        %2555 = vmatprep.subr.mxu0 %v2554
        %v2556 = vand.u32 %v2472, 4294901760
        %2557 = vmatpush1.msra.mxu0 %v2556
        %v2558 = vand.u32 %v2471, 4294901760
        %2559 = vmatprep.subr.mxu0 %v2558
        %v2560 = vand.u32 %v2470, 4294901760
        %2561 = vmatpush1.msra.mxu0 %v2560
        %v2562 = vand.u32 %v2469, 4294901760
        %2563 = vmatprep.subr.mxu0 %v2562
        %v2564 = vand.u32 %v2468, 4294901760
        %2565 = vmatpush1.msra.mxu0 %v2564
        %v2566 = vand.u32 %v2467, 4294901760
        %2567 = vmatprep.subr.mxu0 %v2566
        %v2568 = vand.u32 %v2466, 4294901760
        %2569 = vmatpush1.msra.mxu0 %v2568
        %v2570 = vand.u32 %v2465, 4294901760
        %2571 = vmatprep.subr.mxu0 %v2570
        %v2572 = vand.u32 %v2464, 4294901760
        %2573 = vmatpush1.msra.mxu0 %v2572
        %v2574 = vand.u32 %v2463, 4294901760
        %2575 = vmatprep.subr.mxu0 %v2574
        %v2576 = vand.u32 %v2462, 4294901760
        %2577 = vmatpush1.msra.mxu0 %v2576
        %v2578 = vand.u32 %v2461, 4294901760
        %2579 = vmatprep.subr.mxu0 %v2578
        %v2580 = vand.u32 %v2460, 4294901760
        %2581 = vmatpush1.msra.mxu0 %v2580
        %v2582 = vand.u32 %v2459, 4294901760
        %2583 = vmatprep.subr.mxu0 %v2582
        %v2584 = vand.u32 %v2458, 4294901760
        %2585 = vmatpush1.msra.mxu0 %v2584
        %v2586 = vand.u32 %v2457, 4294901760
        %2587 = vmatprep.subr.mxu0 %v2586
        %v2588 = vand.u32 %v2456, 4294901760
        %2589 = vmatpush1.msra.mxu0 %v2588
        %v2590 = vand.u32 %v2455, 4294901760
        %2591 = vmatprep.subr.mxu0 %v2590
        %v2592 = vand.u32 %v2454, 4294901760
        %2593 = vmatpush1.msra.mxu0 %v2592
        %v2594 = vand.u32 %v2517, 4294901760
        %2595 = vmatprep.subr.mxu0 %v2594
        %v2596 = vand.u32 %v2516, 4294901760
        %2597 = vmatpush2.msra.mxu0 %v2596
        %v2598 = vand.u32 %v2515, 4294901760
        %2599 = vmatprep.subr.mxu0 %v2598
        %v2600 = vand.u32 %v2514, 4294901760
        %2601 = vmatpush2.msra.mxu0 %v2600
        %v2602 = vand.u32 %v2513, 4294901760
        %2603 = vmatprep.subr.mxu0 %v2602
        %v2604 = vand.u32 %v2512, 4294901760
        %2605 = vmatpush2.msra.mxu0 %v2604
        %v2606 = vand.u32 %v2511, 4294901760
        %2607 = vmatprep.subr.mxu0 %v2606
        %v2608 = vand.u32 %v2510, 4294901760
        %2609 = vmatpush2.msra.mxu0 %v2608
        %v2610 = vand.u32 %v2509, 4294901760
        %2611 = vmatprep.subr.mxu0 %v2610
        %v2612 = vand.u32 %v2508, 4294901760
        %2613 = vmatpush2.msra.mxu0 %v2612
        %v2614 = vand.u32 %v2507, 4294901760
        %2615 = vmatprep.subr.mxu0 %v2614
        %v2616 = vand.u32 %v2506, 4294901760
        %2617 = vmatpush2.msra.mxu0 %v2616
        %v2618 = vand.u32 %v2505, 4294901760
        %2619 = vmatprep.subr.mxu0 %v2618
        %v2620 = vand.u32 %v2504, 4294901760
        %2621 = vmatpush2.msra.mxu0 %v2620
        %v2622 = vand.u32 %v2503, 4294901760
        %2623 = vmatprep.subr.mxu0 %v2622
        %v2624 = vand.u32 %v2502, 4294901760
        %2625 = vmatpush2.msra.mxu0 %v2624
        %v2626 = vand.u32 %v2501, 4294901760
        %2627 = vmatprep.subr.mxu0 %v2626
        %v2628 = vand.u32 %v2500, 4294901760
        %2629 = vmatpush2.msra.mxu0 %v2628
        %v2630 = vand.u32 %v2499, 4294901760
        %2631 = vmatprep.subr.mxu0 %v2630
        %v2632 = vand.u32 %v2498, 4294901760
        %2633 = vmatpush2.msra.mxu0 %v2632
        %v2634 = vand.u32 %v2497, 4294901760
        %2635 = vmatprep.subr.mxu0 %v2634
        %v2636 = vand.u32 %v2496, 4294901760
        %2637 = vmatpush2.msra.mxu0 %v2636
        %v2638 = vand.u32 %v2495, 4294901760
        %2639 = vmatprep.subr.mxu0 %v2638
        %v2640 = vand.u32 %v2494, 4294901760
        %2641 = vmatpush2.msra.mxu0 %v2640
        %v2642 = vand.u32 %v2493, 4294901760
        %2643 = vmatprep.subr.mxu0 %v2642
        %v2644 = vand.u32 %v2492, 4294901760
        %2645 = vmatpush2.msra.mxu0 %v2644
        %v2646 = vand.u32 %v2491, 4294901760
        %2647 = vmatprep.subr.mxu0 %v2646
        %v2648 = vand.u32 %v2490, 4294901760
        %2649 = vmatpush2.msra.mxu0 %v2648
        %v2650 = vand.u32 %v2489, 4294901760
        %2651 = vmatprep.subr.mxu0 %v2650
        %v2652 = vand.u32 %v2488, 4294901760
        %2653 = vmatpush2.msra.mxu0 %v2652
        %v2654 = vand.u32 %v2487, 4294901760
        %2655 = vmatprep.subr.mxu0 %v2654
        %v2656 = vand.u32 %v2486, 4294901760
        %2657 = vmatpush2.msra.mxu0 %v2656
        %v2658 = vand.u32 %v2452, 4294901760
        %v2659 = vsub.f32 %v2452, %v2658
        %v2660 = vand.u32 %v2659, 4294901760
        %v2661 = vsub.f32 %v2659, %v2660
        %v2662 = vand.u32 %v2661, 4294901760
        %2663 = vmatprep.mubr.f32.mxu0 %v2662
        %v2664 = vand.u32 %v2451, 4294901760
        %v2665 = vsub.f32 %v2451, %v2664
        %v2666 = vand.u32 %v2665, 4294901760
        %v2667 = vsub.f32 %v2665, %v2666
        %v2668 = vand.u32 %v2667, 4294901760
        %2669 = vmatmul.mubr.f32.gmra.mxu0 %v2668
        %v2670 = vpop.f32.mrf.mxu0
        %v2671 = vadd.f32 0.0, %v2670
        %v2672 = vpop.f32.mrf.mxu0
        %v2673 = vadd.f32 0.0, %v2672
        %2674 = vdwg.mxu0
        %v2675 = vand.u32 %v2485, 4294901760
        %v2676 = vsub.f32 %v2485, %v2675
        %v2677 = vand.u32 %v2676, 4294901760
        %v2678 = vsub.f32 %v2676, %v2677
        %v2679 = vand.u32 %v2678, 4294901760
        %2680 = vmatprep.subr.mxu0 %v2679
        %v2681 = vand.u32 %v2484, 4294901760
        %v2682 = vsub.f32 %v2484, %v2681
        %v2683 = vand.u32 %v2682, 4294901760
        %v2684 = vsub.f32 %v2682, %v2683
        %v2685 = vand.u32 %v2684, 4294901760
        %2686 = vmatpush1.msra.mxu0 %v2685
        %v2687 = vand.u32 %v2483, 4294901760
        %v2688 = vsub.f32 %v2483, %v2687
        %v2689 = vand.u32 %v2688, 4294901760
        %v2690 = vsub.f32 %v2688, %v2689
        %v2691 = vand.u32 %v2690, 4294901760
        %2692 = vmatprep.subr.mxu0 %v2691
        %v2693 = vand.u32 %v2482, 4294901760
        %v2694 = vsub.f32 %v2482, %v2693
        %v2695 = vand.u32 %v2694, 4294901760
        %v2696 = vsub.f32 %v2694, %v2695
        %v2697 = vand.u32 %v2696, 4294901760
        %2698 = vmatpush1.msra.mxu0 %v2697
        %v2699 = vand.u32 %v2481, 4294901760
        %v2700 = vsub.f32 %v2481, %v2699
        %v2701 = vand.u32 %v2700, 4294901760
        %v2702 = vsub.f32 %v2700, %v2701
        %v2703 = vand.u32 %v2702, 4294901760
        %2704 = vmatprep.subr.mxu0 %v2703
        %v2705 = vand.u32 %v2480, 4294901760
        %v2706 = vsub.f32 %v2480, %v2705
        %v2707 = vand.u32 %v2706, 4294901760
        %v2708 = vsub.f32 %v2706, %v2707
        %v2709 = vand.u32 %v2708, 4294901760
        %2710 = vmatpush1.msra.mxu0 %v2709
        %v2711 = vand.u32 %v2479, 4294901760
        %v2712 = vsub.f32 %v2479, %v2711
        %v2713 = vand.u32 %v2712, 4294901760
        %v2714 = vsub.f32 %v2712, %v2713
        %v2715 = vand.u32 %v2714, 4294901760
        %2716 = vmatprep.subr.mxu0 %v2715
        %v2717 = vand.u32 %v2478, 4294901760
        %v2718 = vsub.f32 %v2478, %v2717
        %v2719 = vand.u32 %v2718, 4294901760
        %v2720 = vsub.f32 %v2718, %v2719
        %v2721 = vand.u32 %v2720, 4294901760
        %2722 = vmatpush1.msra.mxu0 %v2721
        %v2723 = vand.u32 %v2477, 4294901760
        %v2724 = vsub.f32 %v2477, %v2723
        %v2725 = vand.u32 %v2724, 4294901760
        %v2726 = vsub.f32 %v2724, %v2725
        %v2727 = vand.u32 %v2726, 4294901760
        %2728 = vmatprep.subr.mxu0 %v2727
        %v2729 = vand.u32 %v2476, 4294901760
        %v2730 = vsub.f32 %v2476, %v2729
        %v2731 = vand.u32 %v2730, 4294901760
        %v2732 = vsub.f32 %v2730, %v2731
        %v2733 = vand.u32 %v2732, 4294901760
        %2734 = vmatpush1.msra.mxu0 %v2733
        %v2735 = vand.u32 %v2475, 4294901760
        %v2736 = vsub.f32 %v2475, %v2735
        %v2737 = vand.u32 %v2736, 4294901760
        %v2738 = vsub.f32 %v2736, %v2737
        %v2739 = vand.u32 %v2738, 4294901760
        %2740 = vmatprep.subr.mxu0 %v2739
        %v2741 = vand.u32 %v2474, 4294901760
        %v2742 = vsub.f32 %v2474, %v2741
        %v2743 = vand.u32 %v2742, 4294901760
        %v2744 = vsub.f32 %v2742, %v2743
        %v2745 = vand.u32 %v2744, 4294901760
        %2746 = vmatpush1.msra.mxu0 %v2745
        %v2747 = vand.u32 %v2473, 4294901760
        %v2748 = vsub.f32 %v2473, %v2747
        %v2749 = vand.u32 %v2748, 4294901760
        %v2750 = vsub.f32 %v2748, %v2749
        %v2751 = vand.u32 %v2750, 4294901760
        %2752 = vmatprep.subr.mxu0 %v2751
        %v2753 = vand.u32 %v2472, 4294901760
        %v2754 = vsub.f32 %v2472, %v2753
        %v2755 = vand.u32 %v2754, 4294901760
        %v2756 = vsub.f32 %v2754, %v2755
        %v2757 = vand.u32 %v2756, 4294901760
        %2758 = vmatpush1.msra.mxu0 %v2757
        %v2759 = vand.u32 %v2471, 4294901760
        %v2760 = vsub.f32 %v2471, %v2759
        %v2761 = vand.u32 %v2760, 4294901760
        %v2762 = vsub.f32 %v2760, %v2761
        %v2763 = vand.u32 %v2762, 4294901760
        %2764 = vmatprep.subr.mxu0 %v2763
        %v2765 = vand.u32 %v2470, 4294901760
        %v2766 = vsub.f32 %v2470, %v2765
        %v2767 = vand.u32 %v2766, 4294901760
        %v2768 = vsub.f32 %v2766, %v2767
        %v2769 = vand.u32 %v2768, 4294901760
        %2770 = vmatpush1.msra.mxu0 %v2769
        %v2771 = vand.u32 %v2469, 4294901760
        %v2772 = vsub.f32 %v2469, %v2771
        %v2773 = vand.u32 %v2772, 4294901760
        %v2774 = vsub.f32 %v2772, %v2773
        %v2775 = vand.u32 %v2774, 4294901760
        %2776 = vmatprep.subr.mxu0 %v2775
        %v2777 = vand.u32 %v2468, 4294901760
        %v2778 = vsub.f32 %v2468, %v2777
        %v2779 = vand.u32 %v2778, 4294901760
        %v2780 = vsub.f32 %v2778, %v2779
        %v2781 = vand.u32 %v2780, 4294901760
        %2782 = vmatpush1.msra.mxu0 %v2781
        %v2783 = vand.u32 %v2467, 4294901760
        %v2784 = vsub.f32 %v2467, %v2783
        %v2785 = vand.u32 %v2784, 4294901760
        %v2786 = vsub.f32 %v2784, %v2785
        %v2787 = vand.u32 %v2786, 4294901760
        %2788 = vmatprep.subr.mxu0 %v2787
        %v2789 = vand.u32 %v2466, 4294901760
        %v2790 = vsub.f32 %v2466, %v2789
        %v2791 = vand.u32 %v2790, 4294901760
        %v2792 = vsub.f32 %v2790, %v2791
        %v2793 = vand.u32 %v2792, 4294901760
        %2794 = vmatpush1.msra.mxu0 %v2793
        %v2795 = vand.u32 %v2465, 4294901760
        %v2796 = vsub.f32 %v2465, %v2795
        %v2797 = vand.u32 %v2796, 4294901760
        %v2798 = vsub.f32 %v2796, %v2797
        %v2799 = vand.u32 %v2798, 4294901760
        %2800 = vmatprep.subr.mxu0 %v2799
        %v2801 = vand.u32 %v2464, 4294901760
        %v2802 = vsub.f32 %v2464, %v2801
        %v2803 = vand.u32 %v2802, 4294901760
        %v2804 = vsub.f32 %v2802, %v2803
        %v2805 = vand.u32 %v2804, 4294901760
        %2806 = vmatpush1.msra.mxu0 %v2805
        %v2807 = vand.u32 %v2463, 4294901760
        %v2808 = vsub.f32 %v2463, %v2807
        %v2809 = vand.u32 %v2808, 4294901760
        %v2810 = vsub.f32 %v2808, %v2809
        %v2811 = vand.u32 %v2810, 4294901760
        %2812 = vmatprep.subr.mxu0 %v2811
        %v2813 = vand.u32 %v2462, 4294901760
        %v2814 = vsub.f32 %v2462, %v2813
        %v2815 = vand.u32 %v2814, 4294901760
        %v2816 = vsub.f32 %v2814, %v2815
        %v2817 = vand.u32 %v2816, 4294901760
        %2818 = vmatpush1.msra.mxu0 %v2817
        %v2819 = vand.u32 %v2461, 4294901760
        %v2820 = vsub.f32 %v2461, %v2819
        %v2821 = vand.u32 %v2820, 4294901760
        %v2822 = vsub.f32 %v2820, %v2821
        %v2823 = vand.u32 %v2822, 4294901760
        %2824 = vmatprep.subr.mxu0 %v2823
        %v2825 = vand.u32 %v2460, 4294901760
        %v2826 = vsub.f32 %v2460, %v2825
        %v2827 = vand.u32 %v2826, 4294901760
        %v2828 = vsub.f32 %v2826, %v2827
        %v2829 = vand.u32 %v2828, 4294901760
        %2830 = vmatpush1.msra.mxu0 %v2829
        %v2831 = vand.u32 %v2459, 4294901760
        %v2832 = vsub.f32 %v2459, %v2831
        %v2833 = vand.u32 %v2832, 4294901760
        %v2834 = vsub.f32 %v2832, %v2833
        %v2835 = vand.u32 %v2834, 4294901760
        %2836 = vmatprep.subr.mxu0 %v2835
        %v2837 = vand.u32 %v2458, 4294901760
        %v2838 = vsub.f32 %v2458, %v2837
        %v2839 = vand.u32 %v2838, 4294901760
        %v2840 = vsub.f32 %v2838, %v2839
        %v2841 = vand.u32 %v2840, 4294901760
        %2842 = vmatpush1.msra.mxu0 %v2841
        %v2843 = vand.u32 %v2457, 4294901760
        %v2844 = vsub.f32 %v2457, %v2843
        %v2845 = vand.u32 %v2844, 4294901760
        %v2846 = vsub.f32 %v2844, %v2845
        %v2847 = vand.u32 %v2846, 4294901760
        %2848 = vmatprep.subr.mxu0 %v2847
        %v2849 = vand.u32 %v2456, 4294901760
        %v2850 = vsub.f32 %v2456, %v2849
        %v2851 = vand.u32 %v2850, 4294901760
        %v2852 = vsub.f32 %v2850, %v2851
        %v2853 = vand.u32 %v2852, 4294901760
        %2854 = vmatpush1.msra.mxu0 %v2853
        %v2855 = vand.u32 %v2455, 4294901760
        %v2856 = vsub.f32 %v2455, %v2855
        %v2857 = vand.u32 %v2856, 4294901760
        %v2858 = vsub.f32 %v2856, %v2857
        %v2859 = vand.u32 %v2858, 4294901760
        %2860 = vmatprep.subr.mxu0 %v2859
        %v2861 = vand.u32 %v2454, 4294901760
        %v2862 = vsub.f32 %v2454, %v2861
        %v2863 = vand.u32 %v2862, 4294901760
        %v2864 = vsub.f32 %v2862, %v2863
        %v2865 = vand.u32 %v2864, 4294901760
        %2866 = vmatpush1.msra.mxu0 %v2865
        %v2867 = vand.u32 %v2517, 4294901760
        %v2868 = vsub.f32 %v2517, %v2867
        %v2869 = vand.u32 %v2868, 4294901760
        %v2870 = vsub.f32 %v2868, %v2869
        %v2871 = vand.u32 %v2870, 4294901760
        %2872 = vmatprep.subr.mxu0 %v2871
        %v2873 = vand.u32 %v2516, 4294901760
        %v2874 = vsub.f32 %v2516, %v2873
        %v2875 = vand.u32 %v2874, 4294901760
        %v2876 = vsub.f32 %v2874, %v2875
        %v2877 = vand.u32 %v2876, 4294901760
        %2878 = vmatpush2.msra.mxu0 %v2877
        %v2879 = vand.u32 %v2515, 4294901760
        %v2880 = vsub.f32 %v2515, %v2879
        %v2881 = vand.u32 %v2880, 4294901760
        %v2882 = vsub.f32 %v2880, %v2881
        %v2883 = vand.u32 %v2882, 4294901760
        %2884 = vmatprep.subr.mxu0 %v2883
        %v2885 = vand.u32 %v2514, 4294901760
        %v2886 = vsub.f32 %v2514, %v2885
        %v2887 = vand.u32 %v2886, 4294901760
        %v2888 = vsub.f32 %v2886, %v2887
        %v2889 = vand.u32 %v2888, 4294901760
        %2890 = vmatpush2.msra.mxu0 %v2889
        %v2891 = vand.u32 %v2513, 4294901760
        %v2892 = vsub.f32 %v2513, %v2891
        %v2893 = vand.u32 %v2892, 4294901760
        %v2894 = vsub.f32 %v2892, %v2893
        %v2895 = vand.u32 %v2894, 4294901760
        %2896 = vmatprep.subr.mxu0 %v2895
        %v2897 = vand.u32 %v2512, 4294901760
        %v2898 = vsub.f32 %v2512, %v2897
        %v2899 = vand.u32 %v2898, 4294901760
        %v2900 = vsub.f32 %v2898, %v2899
        %v2901 = vand.u32 %v2900, 4294901760
        %2902 = vmatpush2.msra.mxu0 %v2901
        %v2903 = vand.u32 %v2511, 4294901760
        %v2904 = vsub.f32 %v2511, %v2903
        %v2905 = vand.u32 %v2904, 4294901760
        %v2906 = vsub.f32 %v2904, %v2905
        %v2907 = vand.u32 %v2906, 4294901760
        %2908 = vmatprep.subr.mxu0 %v2907
        %v2909 = vand.u32 %v2510, 4294901760
        %v2910 = vsub.f32 %v2510, %v2909
        %v2911 = vand.u32 %v2910, 4294901760
        %v2912 = vsub.f32 %v2910, %v2911
        %v2913 = vand.u32 %v2912, 4294901760
        %2914 = vmatpush2.msra.mxu0 %v2913
        %v2915 = vand.u32 %v2509, 4294901760
        %v2916 = vsub.f32 %v2509, %v2915
        %v2917 = vand.u32 %v2916, 4294901760
        %v2918 = vsub.f32 %v2916, %v2917
        %v2919 = vand.u32 %v2918, 4294901760
        %2920 = vmatprep.subr.mxu0 %v2919
        %v2921 = vand.u32 %v2508, 4294901760
        %v2922 = vsub.f32 %v2508, %v2921
        %v2923 = vand.u32 %v2922, 4294901760
        %v2924 = vsub.f32 %v2922, %v2923
        %v2925 = vand.u32 %v2924, 4294901760
        %2926 = vmatpush2.msra.mxu0 %v2925
        %v2927 = vand.u32 %v2507, 4294901760
        %v2928 = vsub.f32 %v2507, %v2927
        %v2929 = vand.u32 %v2928, 4294901760
        %v2930 = vsub.f32 %v2928, %v2929
        %v2931 = vand.u32 %v2930, 4294901760
        %2932 = vmatprep.subr.mxu0 %v2931
        %v2933 = vand.u32 %v2506, 4294901760
        %v2934 = vsub.f32 %v2506, %v2933
        %v2935 = vand.u32 %v2934, 4294901760
        %v2936 = vsub.f32 %v2934, %v2935
        %v2937 = vand.u32 %v2936, 4294901760
        %2938 = vmatpush2.msra.mxu0 %v2937
        %v2939 = vand.u32 %v2505, 4294901760
        %v2940 = vsub.f32 %v2505, %v2939
        %v2941 = vand.u32 %v2940, 4294901760
        %v2942 = vsub.f32 %v2940, %v2941
        %v2943 = vand.u32 %v2942, 4294901760
        %2944 = vmatprep.subr.mxu0 %v2943
        %v2945 = vand.u32 %v2504, 4294901760
        %v2946 = vsub.f32 %v2504, %v2945
        %v2947 = vand.u32 %v2946, 4294901760
        %v2948 = vsub.f32 %v2946, %v2947
        %v2949 = vand.u32 %v2948, 4294901760
        %2950 = vmatpush2.msra.mxu0 %v2949
        %v2951 = vand.u32 %v2503, 4294901760
        %v2952 = vsub.f32 %v2503, %v2951
        %v2953 = vand.u32 %v2952, 4294901760
        %v2954 = vsub.f32 %v2952, %v2953
        %v2955 = vand.u32 %v2954, 4294901760
        %2956 = vmatprep.subr.mxu0 %v2955
        %v2957 = vand.u32 %v2502, 4294901760
        %v2958 = vsub.f32 %v2502, %v2957
        %v2959 = vand.u32 %v2958, 4294901760
        %v2960 = vsub.f32 %v2958, %v2959
        %v2961 = vand.u32 %v2960, 4294901760
        %2962 = vmatpush2.msra.mxu0 %v2961
        %v2963 = vand.u32 %v2501, 4294901760
        %v2964 = vsub.f32 %v2501, %v2963
        %v2965 = vand.u32 %v2964, 4294901760
        %v2966 = vsub.f32 %v2964, %v2965
        %v2967 = vand.u32 %v2966, 4294901760
        %2968 = vmatprep.subr.mxu0 %v2967
        %v2969 = vand.u32 %v2500, 4294901760
        %v2970 = vsub.f32 %v2500, %v2969
        %v2971 = vand.u32 %v2970, 4294901760
        %v2972 = vsub.f32 %v2970, %v2971
        %v2973 = vand.u32 %v2972, 4294901760
        %2974 = vmatpush2.msra.mxu0 %v2973
        %v2975 = vand.u32 %v2499, 4294901760
        %v2976 = vsub.f32 %v2499, %v2975
        %v2977 = vand.u32 %v2976, 4294901760
        %v2978 = vsub.f32 %v2976, %v2977
        %v2979 = vand.u32 %v2978, 4294901760
        %2980 = vmatprep.subr.mxu0 %v2979
        %v2981 = vand.u32 %v2498, 4294901760
        %v2982 = vsub.f32 %v2498, %v2981
        %v2983 = vand.u32 %v2982, 4294901760
        %v2984 = vsub.f32 %v2982, %v2983
        %v2985 = vand.u32 %v2984, 4294901760
        %2986 = vmatpush2.msra.mxu0 %v2985
        %v2987 = vand.u32 %v2497, 4294901760
        %v2988 = vsub.f32 %v2497, %v2987
        %v2989 = vand.u32 %v2988, 4294901760
        %v2990 = vsub.f32 %v2988, %v2989
        %v2991 = vand.u32 %v2990, 4294901760
        %2992 = vmatprep.subr.mxu0 %v2991
        %v2993 = vand.u32 %v2496, 4294901760
        %v2994 = vsub.f32 %v2496, %v2993
        %v2995 = vand.u32 %v2994, 4294901760
        %v2996 = vsub.f32 %v2994, %v2995
        %v2997 = vand.u32 %v2996, 4294901760
        %2998 = vmatpush2.msra.mxu0 %v2997
        %v2999 = vand.u32 %v2495, 4294901760
        %v3000 = vsub.f32 %v2495, %v2999
        %v3001 = vand.u32 %v3000, 4294901760
        %v3002 = vsub.f32 %v3000, %v3001
        %v3003 = vand.u32 %v3002, 4294901760
        %3004 = vmatprep.subr.mxu0 %v3003
        %v3005 = vand.u32 %v2494, 4294901760
        %v3006 = vsub.f32 %v2494, %v3005
        %v3007 = vand.u32 %v3006, 4294901760
        %v3008 = vsub.f32 %v3006, %v3007
        %v3009 = vand.u32 %v3008, 4294901760
        %3010 = vmatpush2.msra.mxu0 %v3009
        %v3011 = vand.u32 %v2493, 4294901760
        %v3012 = vsub.f32 %v2493, %v3011
        %v3013 = vand.u32 %v3012, 4294901760
        %v3014 = vsub.f32 %v3012, %v3013
        %v3015 = vand.u32 %v3014, 4294901760
        %3016 = vmatprep.subr.mxu0 %v3015
        %v3017 = vand.u32 %v2492, 4294901760
        %v3018 = vsub.f32 %v2492, %v3017
        %v3019 = vand.u32 %v3018, 4294901760
        %v3020 = vsub.f32 %v3018, %v3019
        %v3021 = vand.u32 %v3020, 4294901760
        %3022 = vmatpush2.msra.mxu0 %v3021
        %v3023 = vand.u32 %v2491, 4294901760
        %v3024 = vsub.f32 %v2491, %v3023
        %v3025 = vand.u32 %v3024, 4294901760
        %v3026 = vsub.f32 %v3024, %v3025
        %v3027 = vand.u32 %v3026, 4294901760
        %3028 = vmatprep.subr.mxu0 %v3027
        %v3029 = vand.u32 %v2490, 4294901760
        %v3030 = vsub.f32 %v2490, %v3029
        %v3031 = vand.u32 %v3030, 4294901760
        %v3032 = vsub.f32 %v3030, %v3031
        %v3033 = vand.u32 %v3032, 4294901760
        %3034 = vmatpush2.msra.mxu0 %v3033
        %v3035 = vand.u32 %v2489, 4294901760
        %v3036 = vsub.f32 %v2489, %v3035
        %v3037 = vand.u32 %v3036, 4294901760
        %v3038 = vsub.f32 %v3036, %v3037
        %v3039 = vand.u32 %v3038, 4294901760
        %3040 = vmatprep.subr.mxu0 %v3039
        %v3041 = vand.u32 %v2488, 4294901760
        %v3042 = vsub.f32 %v2488, %v3041
        %v3043 = vand.u32 %v3042, 4294901760
        %v3044 = vsub.f32 %v3042, %v3043
        %v3045 = vand.u32 %v3044, 4294901760
        %3046 = vmatpush2.msra.mxu0 %v3045
        %v3047 = vand.u32 %v2487, 4294901760
        %v3048 = vsub.f32 %v2487, %v3047
        %v3049 = vand.u32 %v3048, 4294901760
        %v3050 = vsub.f32 %v3048, %v3049
        %v3051 = vand.u32 %v3050, 4294901760
        %3052 = vmatprep.subr.mxu0 %v3051
        %v3053 = vand.u32 %v2486, 4294901760
        %v3054 = vsub.f32 %v2486, %v3053
        %v3055 = vand.u32 %v3054, 4294901760
        %v3056 = vsub.f32 %v3054, %v3055
        %v3057 = vand.u32 %v3056, 4294901760
        %3058 = vmatpush2.msra.mxu0 %v3057
        %v3059 = vand.u32 %v2452, 4294901760
        %3060 = vmatprep.mubr.f32.mxu0 %v3059
        %v3061 = vand.u32 %v2451, 4294901760
        %3062 = vmatmul.mubr.f32.gmra.mxu0 %v3061
        %v3063 = vpop.f32.mrf.mxu0
        %v3064 = vadd.f32 %v2671, %v3063
        %v3065 = vpop.f32.mrf.mxu0
        %v3066 = vadd.f32 %v2673, %v3065
        %3067 = vdwg.mxu0
        %v3068 = vand.u32 %v2485, 4294901760
        %v3069 = vsub.f32 %v2485, %v3068
        %3070 = vmatprep.subr.mxu0 %v3069
        %v3071 = vand.u32 %v2484, 4294901760
        %v3072 = vsub.f32 %v2484, %v3071
        %3073 = vmatpush1.msra.mxu0 %v3072
        %v3074 = vand.u32 %v2483, 4294901760
        %v3075 = vsub.f32 %v2483, %v3074
        %3076 = vmatprep.subr.mxu0 %v3075
        %v3077 = vand.u32 %v2482, 4294901760
        %v3078 = vsub.f32 %v2482, %v3077
        %3079 = vmatpush1.msra.mxu0 %v3078
        %v3080 = vand.u32 %v2481, 4294901760
        %v3081 = vsub.f32 %v2481, %v3080
        %3082 = vmatprep.subr.mxu0 %v3081
        %v3083 = vand.u32 %v2480, 4294901760
        %v3084 = vsub.f32 %v2480, %v3083
        %3085 = vmatpush1.msra.mxu0 %v3084
        %v3086 = vand.u32 %v2479, 4294901760
        %v3087 = vsub.f32 %v2479, %v3086
        %3088 = vmatprep.subr.mxu0 %v3087
        %v3089 = vand.u32 %v2478, 4294901760
        %v3090 = vsub.f32 %v2478, %v3089
        %3091 = vmatpush1.msra.mxu0 %v3090
        %v3092 = vand.u32 %v2477, 4294901760
        %v3093 = vsub.f32 %v2477, %v3092
        %3094 = vmatprep.subr.mxu0 %v3093
        %v3095 = vand.u32 %v2476, 4294901760
        %v3096 = vsub.f32 %v2476, %v3095
        %3097 = vmatpush1.msra.mxu0 %v3096
        %v3098 = vand.u32 %v2475, 4294901760
        %v3099 = vsub.f32 %v2475, %v3098
        %3100 = vmatprep.subr.mxu0 %v3099
        %v3101 = vand.u32 %v2474, 4294901760
        %v3102 = vsub.f32 %v2474, %v3101
        %3103 = vmatpush1.msra.mxu0 %v3102
        %v3104 = vand.u32 %v2473, 4294901760
        %v3105 = vsub.f32 %v2473, %v3104
        %3106 = vmatprep.subr.mxu0 %v3105
        %v3107 = vand.u32 %v2472, 4294901760
        %v3108 = vsub.f32 %v2472, %v3107
        %3109 = vmatpush1.msra.mxu0 %v3108
        %v3110 = vand.u32 %v2471, 4294901760
        %v3111 = vsub.f32 %v2471, %v3110
        %3112 = vmatprep.subr.mxu0 %v3111
        %v3113 = vand.u32 %v2470, 4294901760
        %v3114 = vsub.f32 %v2470, %v3113
        %3115 = vmatpush1.msra.mxu0 %v3114
        %v3116 = vand.u32 %v2469, 4294901760
        %v3117 = vsub.f32 %v2469, %v3116
        %3118 = vmatprep.subr.mxu0 %v3117
        %v3119 = vand.u32 %v2468, 4294901760
        %v3120 = vsub.f32 %v2468, %v3119
        %3121 = vmatpush1.msra.mxu0 %v3120
        %v3122 = vand.u32 %v2467, 4294901760
        %v3123 = vsub.f32 %v2467, %v3122
        %3124 = vmatprep.subr.mxu0 %v3123
        %v3125 = vand.u32 %v2466, 4294901760
        %v3126 = vsub.f32 %v2466, %v3125
        %3127 = vmatpush1.msra.mxu0 %v3126
        %v3128 = vand.u32 %v2465, 4294901760
        %v3129 = vsub.f32 %v2465, %v3128
        %3130 = vmatprep.subr.mxu0 %v3129
        %v3131 = vand.u32 %v2464, 4294901760
        %v3132 = vsub.f32 %v2464, %v3131
        %3133 = vmatpush1.msra.mxu0 %v3132
        %v3134 = vand.u32 %v2463, 4294901760
        %v3135 = vsub.f32 %v2463, %v3134
        %3136 = vmatprep.subr.mxu0 %v3135
        %v3137 = vand.u32 %v2462, 4294901760
        %v3138 = vsub.f32 %v2462, %v3137
        %3139 = vmatpush1.msra.mxu0 %v3138
        %v3140 = vand.u32 %v2461, 4294901760
        %v3141 = vsub.f32 %v2461, %v3140
        %3142 = vmatprep.subr.mxu0 %v3141
        %v3143 = vand.u32 %v2460, 4294901760
        %v3144 = vsub.f32 %v2460, %v3143
        %3145 = vmatpush1.msra.mxu0 %v3144
        %v3146 = vand.u32 %v2459, 4294901760
        %v3147 = vsub.f32 %v2459, %v3146
        %3148 = vmatprep.subr.mxu0 %v3147
        %v3149 = vand.u32 %v2458, 4294901760
        %v3150 = vsub.f32 %v2458, %v3149
        %3151 = vmatpush1.msra.mxu0 %v3150
        %v3152 = vand.u32 %v2457, 4294901760
        %v3153 = vsub.f32 %v2457, %v3152
        %3154 = vmatprep.subr.mxu0 %v3153
        %v3155 = vand.u32 %v2456, 4294901760
        %v3156 = vsub.f32 %v2456, %v3155
        %3157 = vmatpush1.msra.mxu0 %v3156
        %v3158 = vand.u32 %v2455, 4294901760
        %v3159 = vsub.f32 %v2455, %v3158
        %3160 = vmatprep.subr.mxu0 %v3159
        %v3161 = vand.u32 %v2454, 4294901760
        %v3162 = vsub.f32 %v2454, %v3161
        %3163 = vmatpush1.msra.mxu0 %v3162
        %v3164 = vand.u32 %v2517, 4294901760
        %v3165 = vsub.f32 %v2517, %v3164
        %3166 = vmatprep.subr.mxu0 %v3165
        %v3167 = vand.u32 %v2516, 4294901760
        %v3168 = vsub.f32 %v2516, %v3167
        %3169 = vmatpush2.msra.mxu0 %v3168
        %v3170 = vand.u32 %v2515, 4294901760
        %v3171 = vsub.f32 %v2515, %v3170
        %3172 = vmatprep.subr.mxu0 %v3171
        %v3173 = vand.u32 %v2514, 4294901760
        %v3174 = vsub.f32 %v2514, %v3173
        %3175 = vmatpush2.msra.mxu0 %v3174
        %v3176 = vand.u32 %v2513, 4294901760
        %v3177 = vsub.f32 %v2513, %v3176
        %3178 = vmatprep.subr.mxu0 %v3177
        %v3179 = vand.u32 %v2512, 4294901760
        %v3180 = vsub.f32 %v2512, %v3179
        %3181 = vmatpush2.msra.mxu0 %v3180
        %v3182 = vand.u32 %v2511, 4294901760
        %v3183 = vsub.f32 %v2511, %v3182
        %3184 = vmatprep.subr.mxu0 %v3183
        %v3185 = vand.u32 %v2510, 4294901760
        %v3186 = vsub.f32 %v2510, %v3185
        %3187 = vmatpush2.msra.mxu0 %v3186
        %v3188 = vand.u32 %v2509, 4294901760
        %v3189 = vsub.f32 %v2509, %v3188
        %3190 = vmatprep.subr.mxu0 %v3189
        %v3191 = vand.u32 %v2508, 4294901760
        %v3192 = vsub.f32 %v2508, %v3191
        %3193 = vmatpush2.msra.mxu0 %v3192
        %v3194 = vand.u32 %v2507, 4294901760
        %v3195 = vsub.f32 %v2507, %v3194
        %3196 = vmatprep.subr.mxu0 %v3195
        %v3197 = vand.u32 %v2506, 4294901760
        %v3198 = vsub.f32 %v2506, %v3197
        %3199 = vmatpush2.msra.mxu0 %v3198
        %v3200 = vand.u32 %v2505, 4294901760
        %v3201 = vsub.f32 %v2505, %v3200
        %3202 = vmatprep.subr.mxu0 %v3201
        %v3203 = vand.u32 %v2504, 4294901760
        %v3204 = vsub.f32 %v2504, %v3203
        %3205 = vmatpush2.msra.mxu0 %v3204
        %v3206 = vand.u32 %v2503, 4294901760
        %v3207 = vsub.f32 %v2503, %v3206
        %3208 = vmatprep.subr.mxu0 %v3207
        %v3209 = vand.u32 %v2502, 4294901760
        %v3210 = vsub.f32 %v2502, %v3209
        %3211 = vmatpush2.msra.mxu0 %v3210
        %v3212 = vand.u32 %v2501, 4294901760
        %v3213 = vsub.f32 %v2501, %v3212
        %3214 = vmatprep.subr.mxu0 %v3213
        %v3215 = vand.u32 %v2500, 4294901760
        %v3216 = vsub.f32 %v2500, %v3215
        %3217 = vmatpush2.msra.mxu0 %v3216
        %v3218 = vand.u32 %v2499, 4294901760
        %v3219 = vsub.f32 %v2499, %v3218
        %3220 = vmatprep.subr.mxu0 %v3219
        %v3221 = vand.u32 %v2498, 4294901760
        %v3222 = vsub.f32 %v2498, %v3221
        %3223 = vmatpush2.msra.mxu0 %v3222
        %v3224 = vand.u32 %v2497, 4294901760
        %v3225 = vsub.f32 %v2497, %v3224
        %3226 = vmatprep.subr.mxu0 %v3225
        %v3227 = vand.u32 %v2496, 4294901760
        %v3228 = vsub.f32 %v2496, %v3227
        %3229 = vmatpush2.msra.mxu0 %v3228
        %v3230 = vand.u32 %v2495, 4294901760
        %v3231 = vsub.f32 %v2495, %v3230
        %3232 = vmatprep.subr.mxu0 %v3231
        %v3233 = vand.u32 %v2494, 4294901760
        %v3234 = vsub.f32 %v2494, %v3233
        %3235 = vmatpush2.msra.mxu0 %v3234
        %v3236 = vand.u32 %v2493, 4294901760
        %v3237 = vsub.f32 %v2493, %v3236
        %3238 = vmatprep.subr.mxu0 %v3237
        %v3239 = vand.u32 %v2492, 4294901760
        %v3240 = vsub.f32 %v2492, %v3239
        %3241 = vmatpush2.msra.mxu0 %v3240
        %v3242 = vand.u32 %v2491, 4294901760
        %v3243 = vsub.f32 %v2491, %v3242
        %3244 = vmatprep.subr.mxu0 %v3243
        %v3245 = vand.u32 %v2490, 4294901760
        %v3246 = vsub.f32 %v2490, %v3245
        %3247 = vmatpush2.msra.mxu0 %v3246
        %v3248 = vand.u32 %v2489, 4294901760
        %v3249 = vsub.f32 %v2489, %v3248
        %3250 = vmatprep.subr.mxu0 %v3249
        %v3251 = vand.u32 %v2488, 4294901760
        %v3252 = vsub.f32 %v2488, %v3251
        %3253 = vmatpush2.msra.mxu0 %v3252
        %v3254 = vand.u32 %v2487, 4294901760
        %v3255 = vsub.f32 %v2487, %v3254
        %3256 = vmatprep.subr.mxu0 %v3255
        %v3257 = vand.u32 %v2486, 4294901760
        %v3258 = vsub.f32 %v2486, %v3257
        %3259 = vmatpush2.msra.mxu0 %v3258
        %v3260 = vand.u32 %v2452, 4294901760
        %v3261 = vsub.f32 %v2452, %v3260
        %3262 = vmatprep.mubr.f32.mxu0 %v3261
        %v3263 = vand.u32 %v2451, 4294901760
        %v3264 = vsub.f32 %v2451, %v3263
        %3265 = vmatmul.mubr.f32.gmra.mxu0 %v3264
        %v3266 = vpop.f32.mrf.mxu0
        %v3267 = vadd.f32 %v3064, %v3266
        %v3268 = vpop.f32.mrf.mxu0
        %v3269 = vadd.f32 %v3066, %v3268
        %3270 = vdwg.mxu0
        %v3271 = vand.u32 %v2485, 4294901760
        %3272 = vmatprep.subr.mxu0 %v3271
        %v3273 = vand.u32 %v2484, 4294901760
        %3274 = vmatpush1.msra.mxu0 %v3273
        %v3275 = vand.u32 %v2483, 4294901760
        %3276 = vmatprep.subr.mxu0 %v3275
        %v3277 = vand.u32 %v2482, 4294901760
        %3278 = vmatpush1.msra.mxu0 %v3277
        %v3279 = vand.u32 %v2481, 4294901760
        %3280 = vmatprep.subr.mxu0 %v3279
        %v3281 = vand.u32 %v2480, 4294901760
        %3282 = vmatpush1.msra.mxu0 %v3281
        %v3283 = vand.u32 %v2479, 4294901760
        %3284 = vmatprep.subr.mxu0 %v3283
        %v3285 = vand.u32 %v2478, 4294901760
        %3286 = vmatpush1.msra.mxu0 %v3285
        %v3287 = vand.u32 %v2477, 4294901760
        %3288 = vmatprep.subr.mxu0 %v3287
        %v3289 = vand.u32 %v2476, 4294901760
        %3290 = vmatpush1.msra.mxu0 %v3289
        %v3291 = vand.u32 %v2475, 4294901760
        %3292 = vmatprep.subr.mxu0 %v3291
        %v3293 = vand.u32 %v2474, 4294901760
        %3294 = vmatpush1.msra.mxu0 %v3293
        %v3295 = vand.u32 %v2473, 4294901760
        %3296 = vmatprep.subr.mxu0 %v3295
        %v3297 = vand.u32 %v2472, 4294901760
        %3298 = vmatpush1.msra.mxu0 %v3297
        %v3299 = vand.u32 %v2471, 4294901760
        %3300 = vmatprep.subr.mxu0 %v3299
        %v3301 = vand.u32 %v2470, 4294901760
        %3302 = vmatpush1.msra.mxu0 %v3301
        %v3303 = vand.u32 %v2469, 4294901760
        %3304 = vmatprep.subr.mxu0 %v3303
        %v3305 = vand.u32 %v2468, 4294901760
        %3306 = vmatpush1.msra.mxu0 %v3305
        %v3307 = vand.u32 %v2467, 4294901760
        %3308 = vmatprep.subr.mxu0 %v3307
        %v3309 = vand.u32 %v2466, 4294901760
        %3310 = vmatpush1.msra.mxu0 %v3309
        %v3311 = vand.u32 %v2465, 4294901760
        %3312 = vmatprep.subr.mxu0 %v3311
        %v3313 = vand.u32 %v2464, 4294901760
        %3314 = vmatpush1.msra.mxu0 %v3313
        %v3315 = vand.u32 %v2463, 4294901760
        %3316 = vmatprep.subr.mxu0 %v3315
        %v3317 = vand.u32 %v2462, 4294901760
        %3318 = vmatpush1.msra.mxu0 %v3317
        %v3319 = vand.u32 %v2461, 4294901760
        %3320 = vmatprep.subr.mxu0 %v3319
        %v3321 = vand.u32 %v2460, 4294901760
        %3322 = vmatpush1.msra.mxu0 %v3321
        %v3323 = vand.u32 %v2459, 4294901760
        %3324 = vmatprep.subr.mxu0 %v3323
        %v3325 = vand.u32 %v2458, 4294901760
        %3326 = vmatpush1.msra.mxu0 %v3325
        %v3327 = vand.u32 %v2457, 4294901760
        %3328 = vmatprep.subr.mxu0 %v3327
        %v3329 = vand.u32 %v2456, 4294901760
        %3330 = vmatpush1.msra.mxu0 %v3329
        %v3331 = vand.u32 %v2455, 4294901760
        %3332 = vmatprep.subr.mxu0 %v3331
        %v3333 = vand.u32 %v2454, 4294901760
        %3334 = vmatpush1.msra.mxu0 %v3333
        %v3335 = vand.u32 %v2517, 4294901760
        %3336 = vmatprep.subr.mxu0 %v3335
        %v3337 = vand.u32 %v2516, 4294901760
        %3338 = vmatpush2.msra.mxu0 %v3337
        %v3339 = vand.u32 %v2515, 4294901760
        %3340 = vmatprep.subr.mxu0 %v3339
        %v3341 = vand.u32 %v2514, 4294901760
        %3342 = vmatpush2.msra.mxu0 %v3341
        %v3343 = vand.u32 %v2513, 4294901760
        %3344 = vmatprep.subr.mxu0 %v3343
        %v3345 = vand.u32 %v2512, 4294901760
        %3346 = vmatpush2.msra.mxu0 %v3345
        %v3347 = vand.u32 %v2511, 4294901760
        %3348 = vmatprep.subr.mxu0 %v3347
        %v3349 = vand.u32 %v2510, 4294901760
        %3350 = vmatpush2.msra.mxu0 %v3349
        %v3351 = vand.u32 %v2509, 4294901760
        %3352 = vmatprep.subr.mxu0 %v3351
        %v3353 = vand.u32 %v2508, 4294901760
        %3354 = vmatpush2.msra.mxu0 %v3353
        %v3355 = vand.u32 %v2507, 4294901760
        %3356 = vmatprep.subr.mxu0 %v3355
        %v3357 = vand.u32 %v2506, 4294901760
        %3358 = vmatpush2.msra.mxu0 %v3357
        %v3359 = vand.u32 %v2505, 4294901760
        %3360 = vmatprep.subr.mxu0 %v3359
        %v3361 = vand.u32 %v2504, 4294901760
        %3362 = vmatpush2.msra.mxu0 %v3361
        %v3363 = vand.u32 %v2503, 4294901760
        %3364 = vmatprep.subr.mxu0 %v3363
        %v3365 = vand.u32 %v2502, 4294901760
        %3366 = vmatpush2.msra.mxu0 %v3365
        %v3367 = vand.u32 %v2501, 4294901760
        %3368 = vmatprep.subr.mxu0 %v3367
        %v3369 = vand.u32 %v2500, 4294901760
        %3370 = vmatpush2.msra.mxu0 %v3369
        %v3371 = vand.u32 %v2499, 4294901760
        %3372 = vmatprep.subr.mxu0 %v3371
        %v3373 = vand.u32 %v2498, 4294901760
        %3374 = vmatpush2.msra.mxu0 %v3373
        %v3375 = vand.u32 %v2497, 4294901760
        %3376 = vmatprep.subr.mxu0 %v3375
        %v3377 = vand.u32 %v2496, 4294901760
        %3378 = vmatpush2.msra.mxu0 %v3377
        %v3379 = vand.u32 %v2495, 4294901760
        %3380 = vmatprep.subr.mxu0 %v3379
        %v3381 = vand.u32 %v2494, 4294901760
        %3382 = vmatpush2.msra.mxu0 %v3381
        %v3383 = vand.u32 %v2493, 4294901760
        %3384 = vmatprep.subr.mxu0 %v3383
        %v3385 = vand.u32 %v2492, 4294901760
        %3386 = vmatpush2.msra.mxu0 %v3385
        %v3387 = vand.u32 %v2491, 4294901760
        %3388 = vmatprep.subr.mxu0 %v3387
        %v3389 = vand.u32 %v2490, 4294901760
        %3390 = vmatpush2.msra.mxu0 %v3389
        %v3391 = vand.u32 %v2489, 4294901760
        %3392 = vmatprep.subr.mxu0 %v3391
        %v3393 = vand.u32 %v2488, 4294901760
        %3394 = vmatpush2.msra.mxu0 %v3393
        %v3395 = vand.u32 %v2487, 4294901760
        %3396 = vmatprep.subr.mxu0 %v3395
        %v3397 = vand.u32 %v2486, 4294901760
        %3398 = vmatpush2.msra.mxu0 %v3397
        %v3399 = vand.u32 %v2452, 4294901760
        %v3400 = vsub.f32 %v2452, %v3399
        %v3401 = vand.u32 %v3400, 4294901760
        %3402 = vmatprep.mubr.f32.mxu0 %v3401
        %v3403 = vand.u32 %v2451, 4294901760
        %v3404 = vsub.f32 %v2451, %v3403
        %v3405 = vand.u32 %v3404, 4294901760
        %3406 = vmatmul.mubr.f32.gmra.mxu0 %v3405
        %v3407 = vpop.f32.mrf.mxu0
        %v3408 = vadd.f32 %v3267, %v3407
        %v3409 = vpop.f32.mrf.mxu0
        %v3410 = vadd.f32 %v3269, %v3409
        %3411 = vdwg.mxu0
        %v3412 = vand.u32 %v2485, 4294901760
        %v3413 = vsub.f32 %v2485, %v3412
        %v3414 = vand.u32 %v3413, 4294901760
        %3415 = vmatprep.subr.mxu0 %v3414
        %v3416 = vand.u32 %v2484, 4294901760
        %v3417 = vsub.f32 %v2484, %v3416
        %v3418 = vand.u32 %v3417, 4294901760
        %3419 = vmatpush1.msra.mxu0 %v3418
        %v3420 = vand.u32 %v2483, 4294901760
        %v3421 = vsub.f32 %v2483, %v3420
        %v3422 = vand.u32 %v3421, 4294901760
        %3423 = vmatprep.subr.mxu0 %v3422
        %v3424 = vand.u32 %v2482, 4294901760
        %v3425 = vsub.f32 %v2482, %v3424
        %v3426 = vand.u32 %v3425, 4294901760
        %3427 = vmatpush1.msra.mxu0 %v3426
        %v3428 = vand.u32 %v2481, 4294901760
        %v3429 = vsub.f32 %v2481, %v3428
        %v3430 = vand.u32 %v3429, 4294901760
        %3431 = vmatprep.subr.mxu0 %v3430
        %v3432 = vand.u32 %v2480, 4294901760
        %v3433 = vsub.f32 %v2480, %v3432
        %v3434 = vand.u32 %v3433, 4294901760
        %3435 = vmatpush1.msra.mxu0 %v3434
        %v3436 = vand.u32 %v2479, 4294901760
        %v3437 = vsub.f32 %v2479, %v3436
        %v3438 = vand.u32 %v3437, 4294901760
        %3439 = vmatprep.subr.mxu0 %v3438
        %v3440 = vand.u32 %v2478, 4294901760
        %v3441 = vsub.f32 %v2478, %v3440
        %v3442 = vand.u32 %v3441, 4294901760
        %3443 = vmatpush1.msra.mxu0 %v3442
        %v3444 = vand.u32 %v2477, 4294901760
        %v3445 = vsub.f32 %v2477, %v3444
        %v3446 = vand.u32 %v3445, 4294901760
        %3447 = vmatprep.subr.mxu0 %v3446
        %v3448 = vand.u32 %v2476, 4294901760
        %v3449 = vsub.f32 %v2476, %v3448
        %v3450 = vand.u32 %v3449, 4294901760
        %3451 = vmatpush1.msra.mxu0 %v3450
        %v3452 = vand.u32 %v2475, 4294901760
        %v3453 = vsub.f32 %v2475, %v3452
        %v3454 = vand.u32 %v3453, 4294901760
        %3455 = vmatprep.subr.mxu0 %v3454
        %v3456 = vand.u32 %v2474, 4294901760
        %v3457 = vsub.f32 %v2474, %v3456
        %v3458 = vand.u32 %v3457, 4294901760
        %3459 = vmatpush1.msra.mxu0 %v3458
        %v3460 = vand.u32 %v2473, 4294901760
        %v3461 = vsub.f32 %v2473, %v3460
        %v3462 = vand.u32 %v3461, 4294901760
        %3463 = vmatprep.subr.mxu0 %v3462
        %v3464 = vand.u32 %v2472, 4294901760
        %v3465 = vsub.f32 %v2472, %v3464
        %v3466 = vand.u32 %v3465, 4294901760
        %3467 = vmatpush1.msra.mxu0 %v3466
        %v3468 = vand.u32 %v2471, 4294901760
        %v3469 = vsub.f32 %v2471, %v3468
        %v3470 = vand.u32 %v3469, 4294901760
        %3471 = vmatprep.subr.mxu0 %v3470
        %v3472 = vand.u32 %v2470, 4294901760
        %v3473 = vsub.f32 %v2470, %v3472
        %v3474 = vand.u32 %v3473, 4294901760
        %3475 = vmatpush1.msra.mxu0 %v3474
        %v3476 = vand.u32 %v2469, 4294901760
        %v3477 = vsub.f32 %v2469, %v3476
        %v3478 = vand.u32 %v3477, 4294901760
        %3479 = vmatprep.subr.mxu0 %v3478
        %v3480 = vand.u32 %v2468, 4294901760
        %v3481 = vsub.f32 %v2468, %v3480
        %v3482 = vand.u32 %v3481, 4294901760
        %3483 = vmatpush1.msra.mxu0 %v3482
        %v3484 = vand.u32 %v2467, 4294901760
        %v3485 = vsub.f32 %v2467, %v3484
        %v3486 = vand.u32 %v3485, 4294901760
        %3487 = vmatprep.subr.mxu0 %v3486
        %v3488 = vand.u32 %v2466, 4294901760
        %v3489 = vsub.f32 %v2466, %v3488
        %v3490 = vand.u32 %v3489, 4294901760
        %3491 = vmatpush1.msra.mxu0 %v3490
        %v3492 = vand.u32 %v2465, 4294901760
        %v3493 = vsub.f32 %v2465, %v3492
        %v3494 = vand.u32 %v3493, 4294901760
        %3495 = vmatprep.subr.mxu0 %v3494
        %v3496 = vand.u32 %v2464, 4294901760
        %v3497 = vsub.f32 %v2464, %v3496
        %v3498 = vand.u32 %v3497, 4294901760
        %3499 = vmatpush1.msra.mxu0 %v3498
        %v3500 = vand.u32 %v2463, 4294901760
        %v3501 = vsub.f32 %v2463, %v3500
        %v3502 = vand.u32 %v3501, 4294901760
        %3503 = vmatprep.subr.mxu0 %v3502
        %v3504 = vand.u32 %v2462, 4294901760
        %v3505 = vsub.f32 %v2462, %v3504
        %v3506 = vand.u32 %v3505, 4294901760
        %3507 = vmatpush1.msra.mxu0 %v3506
        %v3508 = vand.u32 %v2461, 4294901760
        %v3509 = vsub.f32 %v2461, %v3508
        %v3510 = vand.u32 %v3509, 4294901760
        %3511 = vmatprep.subr.mxu0 %v3510
        %v3512 = vand.u32 %v2460, 4294901760
        %v3513 = vsub.f32 %v2460, %v3512
        %v3514 = vand.u32 %v3513, 4294901760
        %3515 = vmatpush1.msra.mxu0 %v3514
        %v3516 = vand.u32 %v2459, 4294901760
        %v3517 = vsub.f32 %v2459, %v3516
        %v3518 = vand.u32 %v3517, 4294901760
        %3519 = vmatprep.subr.mxu0 %v3518
        %v3520 = vand.u32 %v2458, 4294901760
        %v3521 = vsub.f32 %v2458, %v3520
        %v3522 = vand.u32 %v3521, 4294901760
        %3523 = vmatpush1.msra.mxu0 %v3522
        %v3524 = vand.u32 %v2457, 4294901760
        %v3525 = vsub.f32 %v2457, %v3524
        %v3526 = vand.u32 %v3525, 4294901760
        %3527 = vmatprep.subr.mxu0 %v3526
        %v3528 = vand.u32 %v2456, 4294901760
        %v3529 = vsub.f32 %v2456, %v3528
        %v3530 = vand.u32 %v3529, 4294901760
        %3531 = vmatpush1.msra.mxu0 %v3530
        %v3532 = vand.u32 %v2455, 4294901760
        %v3533 = vsub.f32 %v2455, %v3532
        %v3534 = vand.u32 %v3533, 4294901760
        %3535 = vmatprep.subr.mxu0 %v3534
        %v3536 = vand.u32 %v2454, 4294901760
        %v3537 = vsub.f32 %v2454, %v3536
        %v3538 = vand.u32 %v3537, 4294901760
        %3539 = vmatpush1.msra.mxu0 %v3538
        %v3540 = vand.u32 %v2517, 4294901760
        %v3541 = vsub.f32 %v2517, %v3540
        %v3542 = vand.u32 %v3541, 4294901760
        %3543 = vmatprep.subr.mxu0 %v3542
        %v3544 = vand.u32 %v2516, 4294901760
        %v3545 = vsub.f32 %v2516, %v3544
        %v3546 = vand.u32 %v3545, 4294901760
        %3547 = vmatpush2.msra.mxu0 %v3546
        %v3548 = vand.u32 %v2515, 4294901760
        %v3549 = vsub.f32 %v2515, %v3548
        %v3550 = vand.u32 %v3549, 4294901760
        %3551 = vmatprep.subr.mxu0 %v3550
        %v3552 = vand.u32 %v2514, 4294901760
        %v3553 = vsub.f32 %v2514, %v3552
        %v3554 = vand.u32 %v3553, 4294901760
        %3555 = vmatpush2.msra.mxu0 %v3554
        %v3556 = vand.u32 %v2513, 4294901760
        %v3557 = vsub.f32 %v2513, %v3556
        %v3558 = vand.u32 %v3557, 4294901760
        %3559 = vmatprep.subr.mxu0 %v3558
        %v3560 = vand.u32 %v2512, 4294901760
        %v3561 = vsub.f32 %v2512, %v3560
        %v3562 = vand.u32 %v3561, 4294901760
        %3563 = vmatpush2.msra.mxu0 %v3562
        %v3564 = vand.u32 %v2511, 4294901760
        %v3565 = vsub.f32 %v2511, %v3564
        %v3566 = vand.u32 %v3565, 4294901760
        %3567 = vmatprep.subr.mxu0 %v3566
        %v3568 = vand.u32 %v2510, 4294901760
        %v3569 = vsub.f32 %v2510, %v3568
        %v3570 = vand.u32 %v3569, 4294901760
        %3571 = vmatpush2.msra.mxu0 %v3570
        %v3572 = vand.u32 %v2509, 4294901760
        %v3573 = vsub.f32 %v2509, %v3572
        %v3574 = vand.u32 %v3573, 4294901760
        %3575 = vmatprep.subr.mxu0 %v3574
        %v3576 = vand.u32 %v2508, 4294901760
        %v3577 = vsub.f32 %v2508, %v3576
        %v3578 = vand.u32 %v3577, 4294901760
        %3579 = vmatpush2.msra.mxu0 %v3578
        %v3580 = vand.u32 %v2507, 4294901760
        %v3581 = vsub.f32 %v2507, %v3580
        %v3582 = vand.u32 %v3581, 4294901760
        %3583 = vmatprep.subr.mxu0 %v3582
        %v3584 = vand.u32 %v2506, 4294901760
        %v3585 = vsub.f32 %v2506, %v3584
        %v3586 = vand.u32 %v3585, 4294901760
        %3587 = vmatpush2.msra.mxu0 %v3586
        %v3588 = vand.u32 %v2505, 4294901760
        %v3589 = vsub.f32 %v2505, %v3588
        %v3590 = vand.u32 %v3589, 4294901760
        %3591 = vmatprep.subr.mxu0 %v3590
        %v3592 = vand.u32 %v2504, 4294901760
        %v3593 = vsub.f32 %v2504, %v3592
        %v3594 = vand.u32 %v3593, 4294901760
        %3595 = vmatpush2.msra.mxu0 %v3594
        %v3596 = vand.u32 %v2503, 4294901760
        %v3597 = vsub.f32 %v2503, %v3596
        %v3598 = vand.u32 %v3597, 4294901760
        %3599 = vmatprep.subr.mxu0 %v3598
        %v3600 = vand.u32 %v2502, 4294901760
        %v3601 = vsub.f32 %v2502, %v3600
        %v3602 = vand.u32 %v3601, 4294901760
        %3603 = vmatpush2.msra.mxu0 %v3602
        %v3604 = vand.u32 %v2501, 4294901760
        %v3605 = vsub.f32 %v2501, %v3604
        %v3606 = vand.u32 %v3605, 4294901760
        %3607 = vmatprep.subr.mxu0 %v3606
        %v3608 = vand.u32 %v2500, 4294901760
        %v3609 = vsub.f32 %v2500, %v3608
        %v3610 = vand.u32 %v3609, 4294901760
        %3611 = vmatpush2.msra.mxu0 %v3610
        %v3612 = vand.u32 %v2499, 4294901760
        %v3613 = vsub.f32 %v2499, %v3612
        %v3614 = vand.u32 %v3613, 4294901760
        %3615 = vmatprep.subr.mxu0 %v3614
        %v3616 = vand.u32 %v2498, 4294901760
        %v3617 = vsub.f32 %v2498, %v3616
        %v3618 = vand.u32 %v3617, 4294901760
        %3619 = vmatpush2.msra.mxu0 %v3618
        %v3620 = vand.u32 %v2497, 4294901760
        %v3621 = vsub.f32 %v2497, %v3620
        %v3622 = vand.u32 %v3621, 4294901760
        %3623 = vmatprep.subr.mxu0 %v3622
        %v3624 = vand.u32 %v2496, 4294901760
        %v3625 = vsub.f32 %v2496, %v3624
        %v3626 = vand.u32 %v3625, 4294901760
        %3627 = vmatpush2.msra.mxu0 %v3626
        %v3628 = vand.u32 %v2495, 4294901760
        %v3629 = vsub.f32 %v2495, %v3628
        %v3630 = vand.u32 %v3629, 4294901760
        %3631 = vmatprep.subr.mxu0 %v3630
        %v3632 = vand.u32 %v2494, 4294901760
        %v3633 = vsub.f32 %v2494, %v3632
        %v3634 = vand.u32 %v3633, 4294901760
        %3635 = vmatpush2.msra.mxu0 %v3634
        %v3636 = vand.u32 %v2493, 4294901760
        %v3637 = vsub.f32 %v2493, %v3636
        %v3638 = vand.u32 %v3637, 4294901760
        %3639 = vmatprep.subr.mxu0 %v3638
        %v3640 = vand.u32 %v2492, 4294901760
        %v3641 = vsub.f32 %v2492, %v3640
        %v3642 = vand.u32 %v3641, 4294901760
        %3643 = vmatpush2.msra.mxu0 %v3642
        %v3644 = vand.u32 %v2491, 4294901760
        %v3645 = vsub.f32 %v2491, %v3644
        %v3646 = vand.u32 %v3645, 4294901760
        %3647 = vmatprep.subr.mxu0 %v3646
        %v3648 = vand.u32 %v2490, 4294901760
        %v3649 = vsub.f32 %v2490, %v3648
        %v3650 = vand.u32 %v3649, 4294901760
        %3651 = vmatpush2.msra.mxu0 %v3650
        %v3652 = vand.u32 %v2489, 4294901760
        %v3653 = vsub.f32 %v2489, %v3652
        %v3654 = vand.u32 %v3653, 4294901760
        %3655 = vmatprep.subr.mxu0 %v3654
        %v3656 = vand.u32 %v2488, 4294901760
        %v3657 = vsub.f32 %v2488, %v3656
        %v3658 = vand.u32 %v3657, 4294901760
        %3659 = vmatpush2.msra.mxu0 %v3658
        %v3660 = vand.u32 %v2487, 4294901760
        %v3661 = vsub.f32 %v2487, %v3660
        %v3662 = vand.u32 %v3661, 4294901760
        %3663 = vmatprep.subr.mxu0 %v3662
        %v3664 = vand.u32 %v2486, 4294901760
        %v3665 = vsub.f32 %v2486, %v3664
        %v3666 = vand.u32 %v3665, 4294901760
        %3667 = vmatpush2.msra.mxu0 %v3666
        %v3668 = vand.u32 %v2452, 4294901760
        %3669 = vmatprep.mubr.f32.mxu0 %v3668
        %v3670 = vand.u32 %v2451, 4294901760
        %3671 = vmatmul.mubr.f32.gmra.mxu0 %v3670
        %v3672 = vpop.f32.mrf.mxu0
        %v3673 = vadd.f32 %v3408, %v3672
        %v3674 = vpop.f32.mrf.mxu0
        %v3675 = vadd.f32 %v3410, %v3674
        %3676 = vdwg.mxu0
        %v3677 = vand.u32 %v2485, 4294901760
        %3678 = vmatprep.subr.mxu0 %v3677
        %v3679 = vand.u32 %v2484, 4294901760
        %3680 = vmatpush1.msra.mxu0 %v3679
        %v3681 = vand.u32 %v2483, 4294901760
        %3682 = vmatprep.subr.mxu0 %v3681
        %v3683 = vand.u32 %v2482, 4294901760
        %3684 = vmatpush1.msra.mxu0 %v3683
        %v3685 = vand.u32 %v2481, 4294901760
        %3686 = vmatprep.subr.mxu0 %v3685
        %v3687 = vand.u32 %v2480, 4294901760
        %3688 = vmatpush1.msra.mxu0 %v3687
        %v3689 = vand.u32 %v2479, 4294901760
        %3690 = vmatprep.subr.mxu0 %v3689
        %v3691 = vand.u32 %v2478, 4294901760
        %3692 = vmatpush1.msra.mxu0 %v3691
        %v3693 = vand.u32 %v2477, 4294901760
        %3694 = vmatprep.subr.mxu0 %v3693
        %v3695 = vand.u32 %v2476, 4294901760
        %3696 = vmatpush1.msra.mxu0 %v3695
        %v3697 = vand.u32 %v2475, 4294901760
        %3698 = vmatprep.subr.mxu0 %v3697
        %v3699 = vand.u32 %v2474, 4294901760
        %3700 = vmatpush1.msra.mxu0 %v3699
        %v3701 = vand.u32 %v2473, 4294901760
        %3702 = vmatprep.subr.mxu0 %v3701
        %v3703 = vand.u32 %v2472, 4294901760
        %3704 = vmatpush1.msra.mxu0 %v3703
        %v3705 = vand.u32 %v2471, 4294901760
        %3706 = vmatprep.subr.mxu0 %v3705
        %v3707 = vand.u32 %v2470, 4294901760
        %3708 = vmatpush1.msra.mxu0 %v3707
        %v3709 = vand.u32 %v2469, 4294901760
        %3710 = vmatprep.subr.mxu0 %v3709
        %v3711 = vand.u32 %v2468, 4294901760
        %3712 = vmatpush1.msra.mxu0 %v3711
        %v3713 = vand.u32 %v2467, 4294901760
        %3714 = vmatprep.subr.mxu0 %v3713
        %v3715 = vand.u32 %v2466, 4294901760
        %3716 = vmatpush1.msra.mxu0 %v3715
        %v3717 = vand.u32 %v2465, 4294901760
        %3718 = vmatprep.subr.mxu0 %v3717
        %v3719 = vand.u32 %v2464, 4294901760
        %3720 = vmatpush1.msra.mxu0 %v3719
        %v3721 = vand.u32 %v2463, 4294901760
        %3722 = vmatprep.subr.mxu0 %v3721
        %v3723 = vand.u32 %v2462, 4294901760
        %3724 = vmatpush1.msra.mxu0 %v3723
        %v3725 = vand.u32 %v2461, 4294901760
        %3726 = vmatprep.subr.mxu0 %v3725
        %v3727 = vand.u32 %v2460, 4294901760
        %3728 = vmatpush1.msra.mxu0 %v3727
        %v3729 = vand.u32 %v2459, 4294901760
        %3730 = vmatprep.subr.mxu0 %v3729
        %v3731 = vand.u32 %v2458, 4294901760
        %3732 = vmatpush1.msra.mxu0 %v3731
        %v3733 = vand.u32 %v2457, 4294901760
        %3734 = vmatprep.subr.mxu0 %v3733
        %v3735 = vand.u32 %v2456, 4294901760
        %3736 = vmatpush1.msra.mxu0 %v3735
        %v3737 = vand.u32 %v2455, 4294901760
        %3738 = vmatprep.subr.mxu0 %v3737
        %v3739 = vand.u32 %v2454, 4294901760
        %3740 = vmatpush1.msra.mxu0 %v3739
        %v3741 = vand.u32 %v2517, 4294901760
        %3742 = vmatprep.subr.mxu0 %v3741
        %v3743 = vand.u32 %v2516, 4294901760
        %3744 = vmatpush2.msra.mxu0 %v3743
        %v3745 = vand.u32 %v2515, 4294901760
        %3746 = vmatprep.subr.mxu0 %v3745
        %v3747 = vand.u32 %v2514, 4294901760
        %3748 = vmatpush2.msra.mxu0 %v3747
        %v3749 = vand.u32 %v2513, 4294901760
        %3750 = vmatprep.subr.mxu0 %v3749
        %v3751 = vand.u32 %v2512, 4294901760
        %3752 = vmatpush2.msra.mxu0 %v3751
        %v3753 = vand.u32 %v2511, 4294901760
        %3754 = vmatprep.subr.mxu0 %v3753
        %v3755 = vand.u32 %v2510, 4294901760
        %3756 = vmatpush2.msra.mxu0 %v3755
        %v3757 = vand.u32 %v2509, 4294901760
        %3758 = vmatprep.subr.mxu0 %v3757
        %v3759 = vand.u32 %v2508, 4294901760
        %3760 = vmatpush2.msra.mxu0 %v3759
        %v3761 = vand.u32 %v2507, 4294901760
        %3762 = vmatprep.subr.mxu0 %v3761
        %v3763 = vand.u32 %v2506, 4294901760
        %3764 = vmatpush2.msra.mxu0 %v3763
        %v3765 = vand.u32 %v2505, 4294901760
        %3766 = vmatprep.subr.mxu0 %v3765
        %v3767 = vand.u32 %v2504, 4294901760
        %3768 = vmatpush2.msra.mxu0 %v3767
        %v3769 = vand.u32 %v2503, 4294901760
        %3770 = vmatprep.subr.mxu0 %v3769
        %v3771 = vand.u32 %v2502, 4294901760
        %3772 = vmatpush2.msra.mxu0 %v3771
        %v3773 = vand.u32 %v2501, 4294901760
        %3774 = vmatprep.subr.mxu0 %v3773
        %v3775 = vand.u32 %v2500, 4294901760
        %3776 = vmatpush2.msra.mxu0 %v3775
        %v3777 = vand.u32 %v2499, 4294901760
        %3778 = vmatprep.subr.mxu0 %v3777
        %v3779 = vand.u32 %v2498, 4294901760
        %3780 = vmatpush2.msra.mxu0 %v3779
        %v3781 = vand.u32 %v2497, 4294901760
        %3782 = vmatprep.subr.mxu0 %v3781
        %v3783 = vand.u32 %v2496, 4294901760
        %3784 = vmatpush2.msra.mxu0 %v3783
        %v3785 = vand.u32 %v2495, 4294901760
        %3786 = vmatprep.subr.mxu0 %v3785
        %v3787 = vand.u32 %v2494, 4294901760
        %3788 = vmatpush2.msra.mxu0 %v3787
        %v3789 = vand.u32 %v2493, 4294901760
        %3790 = vmatprep.subr.mxu0 %v3789
        %v3791 = vand.u32 %v2492, 4294901760
        %3792 = vmatpush2.msra.mxu0 %v3791
        %v3793 = vand.u32 %v2491, 4294901760
        %3794 = vmatprep.subr.mxu0 %v3793
        %v3795 = vand.u32 %v2490, 4294901760
        %3796 = vmatpush2.msra.mxu0 %v3795
        %v3797 = vand.u32 %v2489, 4294901760
        %3798 = vmatprep.subr.mxu0 %v3797
        %v3799 = vand.u32 %v2488, 4294901760
        %3800 = vmatpush2.msra.mxu0 %v3799
        %v3801 = vand.u32 %v2487, 4294901760
        %3802 = vmatprep.subr.mxu0 %v3801
        %v3803 = vand.u32 %v2486, 4294901760
        %3804 = vmatpush2.msra.mxu0 %v3803
        %v3805 = vand.u32 %v2452, 4294901760
        %3806 = vmatprep.mubr.f32.mxu0 %v3805
        %v3807 = vand.u32 %v2451, 4294901760
        %3808 = vmatmul.mubr.f32.gmra.mxu0 %v3807
        %v3809 = vpop.f32.mrf.mxu0
        %v3810 = vadd.f32 %v3673, %v3809
        %v3811 = vpop.f32.mrf.mxu0
        %v3812 = vadd.f32 %v3675, %v3811
        %3813 = vdwg.mxu0
        %3814 = vmatprep.subr.mxu0 0.0
        %3815 = vmatpush1.msra.mxu0 0.0
        %3816 = vmatprep.subr.mxu0 0.0
        %3817 = vmatpush1.msra.mxu0 0.0
        %3818 = vmatprep.subr.mxu0 0.0
        %3819 = vmatpush1.msra.mxu0 0.0
        %3820 = vmatprep.subr.mxu0 0.0
        %3821 = vmatpush1.msra.mxu0 0.0
        %3822 = vmatprep.subr.mxu0 0.0
        %3823 = vmatpush1.msra.mxu0 0.0
        %3824 = vmatprep.subr.mxu0 0.0
        %3825 = vmatpush1.msra.mxu0 0.0
        %3826 = vmatprep.subr.mxu0 0.0
        %3827 = vmatpush1.msra.mxu0 0.0
        %3828 = vmatprep.subr.mxu0 0.0
        %3829 = vmatpush1.msra.mxu0 0.0
        %3830 = vmatprep.subr.mxu0 0.0
        %3831 = vmatpush1.msra.mxu0 0.0
        %3832 = vmatprep.subr.mxu0 0.0
        %3833 = vmatpush1.msra.mxu0 0.0
        %3834 = vmatprep.subr.mxu0 0.0
        %3835 = vmatpush1.msra.mxu0 0.0
        %3836 = vmatprep.subr.mxu0 0.0
        %3837 = vmatpush1.msra.mxu0 0.0
        %v3838 = vand.u32 %v2525, 4294901760
        %3839 = vmatprep.subr.mxu0 %v3838
        %v3840 = vand.u32 %v2524, 4294901760
        %3841 = vmatpush1.msra.mxu0 %v3840
        %v3842 = vand.u32 %v2523, 4294901760
        %3843 = vmatprep.subr.mxu0 %v3842
        %v3844 = vand.u32 %v2522, 4294901760
        %3845 = vmatpush1.msra.mxu0 %v3844
        %v3846 = vand.u32 %v2521, 4294901760
        %3847 = vmatprep.subr.mxu0 %v3846
        %v3848 = vand.u32 %v2520, 4294901760
        %3849 = vmatpush1.msra.mxu0 %v3848
        %v3850 = vand.u32 %v2519, 4294901760
        %3851 = vmatprep.subr.mxu0 %v3850
        %v3852 = vand.u32 %v2518, 4294901760
        %3853 = vmatpush1.msra.mxu0 %v3852
        %3854 = vmatprep.subr.mxu0 0.0
        %3855 = vmatpush2.msra.mxu0 0.0
        %3856 = vmatprep.subr.mxu0 0.0
        %3857 = vmatpush2.msra.mxu0 0.0
        %3858 = vmatprep.subr.mxu0 0.0
        %3859 = vmatpush2.msra.mxu0 0.0
        %3860 = vmatprep.subr.mxu0 0.0
        %3861 = vmatpush2.msra.mxu0 0.0
        %3862 = vmatprep.subr.mxu0 0.0
        %3863 = vmatpush2.msra.mxu0 0.0
        %3864 = vmatprep.subr.mxu0 0.0
        %3865 = vmatpush2.msra.mxu0 0.0
        %3866 = vmatprep.subr.mxu0 0.0
        %3867 = vmatpush2.msra.mxu0 0.0
        %3868 = vmatprep.subr.mxu0 0.0
        %3869 = vmatpush2.msra.mxu0 0.0
        %3870 = vmatprep.subr.mxu0 0.0
        %3871 = vmatpush2.msra.mxu0 0.0
        %3872 = vmatprep.subr.mxu0 0.0
        %3873 = vmatpush2.msra.mxu0 0.0
        %3874 = vmatprep.subr.mxu0 0.0
        %3875 = vmatpush2.msra.mxu0 0.0
        %3876 = vmatprep.subr.mxu0 0.0
        %3877 = vmatpush2.msra.mxu0 0.0
        %3878 = vmatprep.subr.mxu0 0.0
        %3879 = vmatpush2.msra.mxu0 0.0
        %3880 = vmatprep.subr.mxu0 0.0
        %3881 = vmatpush2.msra.mxu0 0.0
        %3882 = vmatprep.subr.mxu0 0.0
        %3883 = vmatpush2.msra.mxu0 0.0
        %3884 = vmatprep.subr.mxu0 0.0
        %3885 = vmatpush2.msra.mxu0 0.0
        %3886 = vmatprep.mubr.f32.mxu0 0.0
        %v3887 = vand.u32 %v2528, 4294901760
        %v3888 = vsub.f32 %v2528, %v3887
        %v3889 = vand.u32 %v3888, 4294901760
        %v3890 = vsub.f32 %v3888, %v3889
        %v3891 = vand.u32 %v3890, 4294901760
        %3892 = vmatmul.mubr.f32.gmra.mxu0 %v3891
        %v3893 = vpop.f32.mrf.mxu0
        %v3894 = vadd.f32 %v3810, %v3893
        %v3895 = vpop.f32.mrf.mxu0
        %v3896 = vadd.f32 %v3812, %v3895
        %3897 = vdwg.mxu0
        %3898 = vmatprep.subr.mxu0 0.0
        %3899 = vmatpush1.msra.mxu0 0.0
        %3900 = vmatprep.subr.mxu0 0.0
        %3901 = vmatpush1.msra.mxu0 0.0
        %3902 = vmatprep.subr.mxu0 0.0
        %3903 = vmatpush1.msra.mxu0 0.0
        %3904 = vmatprep.subr.mxu0 0.0
        %3905 = vmatpush1.msra.mxu0 0.0
        %3906 = vmatprep.subr.mxu0 0.0
        %3907 = vmatpush1.msra.mxu0 0.0
        %3908 = vmatprep.subr.mxu0 0.0
        %3909 = vmatpush1.msra.mxu0 0.0
        %3910 = vmatprep.subr.mxu0 0.0
        %3911 = vmatpush1.msra.mxu0 0.0
        %3912 = vmatprep.subr.mxu0 0.0
        %3913 = vmatpush1.msra.mxu0 0.0
        %3914 = vmatprep.subr.mxu0 0.0
        %3915 = vmatpush1.msra.mxu0 0.0
        %3916 = vmatprep.subr.mxu0 0.0
        %3917 = vmatpush1.msra.mxu0 0.0
        %3918 = vmatprep.subr.mxu0 0.0
        %3919 = vmatpush1.msra.mxu0 0.0
        %3920 = vmatprep.subr.mxu0 0.0
        %3921 = vmatpush1.msra.mxu0 0.0
        %v3922 = vand.u32 %v2525, 4294901760
        %v3923 = vsub.f32 %v2525, %v3922
        %v3924 = vand.u32 %v3923, 4294901760
        %v3925 = vsub.f32 %v3923, %v3924
        %v3926 = vand.u32 %v3925, 4294901760
        %3927 = vmatprep.subr.mxu0 %v3926
        %v3928 = vand.u32 %v2524, 4294901760
        %v3929 = vsub.f32 %v2524, %v3928
        %v3930 = vand.u32 %v3929, 4294901760
        %v3931 = vsub.f32 %v3929, %v3930
        %v3932 = vand.u32 %v3931, 4294901760
        %3933 = vmatpush1.msra.mxu0 %v3932
        %v3934 = vand.u32 %v2523, 4294901760
        %v3935 = vsub.f32 %v2523, %v3934
        %v3936 = vand.u32 %v3935, 4294901760
        %v3937 = vsub.f32 %v3935, %v3936
        %v3938 = vand.u32 %v3937, 4294901760
        %3939 = vmatprep.subr.mxu0 %v3938
        %v3940 = vand.u32 %v2522, 4294901760
        %v3941 = vsub.f32 %v2522, %v3940
        %v3942 = vand.u32 %v3941, 4294901760
        %v3943 = vsub.f32 %v3941, %v3942
        %v3944 = vand.u32 %v3943, 4294901760
        %3945 = vmatpush1.msra.mxu0 %v3944
        %v3946 = vand.u32 %v2521, 4294901760
        %v3947 = vsub.f32 %v2521, %v3946
        %v3948 = vand.u32 %v3947, 4294901760
        %v3949 = vsub.f32 %v3947, %v3948
        %v3950 = vand.u32 %v3949, 4294901760
        %3951 = vmatprep.subr.mxu0 %v3950
        %v3952 = vand.u32 %v2520, 4294901760
        %v3953 = vsub.f32 %v2520, %v3952
        %v3954 = vand.u32 %v3953, 4294901760
        %v3955 = vsub.f32 %v3953, %v3954
        %v3956 = vand.u32 %v3955, 4294901760
        %3957 = vmatpush1.msra.mxu0 %v3956
        %v3958 = vand.u32 %v2519, 4294901760
        %v3959 = vsub.f32 %v2519, %v3958
        %v3960 = vand.u32 %v3959, 4294901760
        %v3961 = vsub.f32 %v3959, %v3960
        %v3962 = vand.u32 %v3961, 4294901760
        %3963 = vmatprep.subr.mxu0 %v3962
        %v3964 = vand.u32 %v2518, 4294901760
        %v3965 = vsub.f32 %v2518, %v3964
        %v3966 = vand.u32 %v3965, 4294901760
        %v3967 = vsub.f32 %v3965, %v3966
        %v3968 = vand.u32 %v3967, 4294901760
        %3969 = vmatpush1.msra.mxu0 %v3968
        %3970 = vmatprep.subr.mxu0 0.0
        %3971 = vmatpush2.msra.mxu0 0.0
        %3972 = vmatprep.subr.mxu0 0.0
        %3973 = vmatpush2.msra.mxu0 0.0
        %3974 = vmatprep.subr.mxu0 0.0
        %3975 = vmatpush2.msra.mxu0 0.0
        %3976 = vmatprep.subr.mxu0 0.0
        %3977 = vmatpush2.msra.mxu0 0.0
        %3978 = vmatprep.subr.mxu0 0.0
        %3979 = vmatpush2.msra.mxu0 0.0
        %3980 = vmatprep.subr.mxu0 0.0
        %3981 = vmatpush2.msra.mxu0 0.0
        %3982 = vmatprep.subr.mxu0 0.0
        %3983 = vmatpush2.msra.mxu0 0.0
        %3984 = vmatprep.subr.mxu0 0.0
        %3985 = vmatpush2.msra.mxu0 0.0
        %3986 = vmatprep.subr.mxu0 0.0
        %3987 = vmatpush2.msra.mxu0 0.0
        %3988 = vmatprep.subr.mxu0 0.0
        %3989 = vmatpush2.msra.mxu0 0.0
        %3990 = vmatprep.subr.mxu0 0.0
        %3991 = vmatpush2.msra.mxu0 0.0
        %3992 = vmatprep.subr.mxu0 0.0
        %3993 = vmatpush2.msra.mxu0 0.0
        %3994 = vmatprep.subr.mxu0 0.0
        %3995 = vmatpush2.msra.mxu0 0.0
        %3996 = vmatprep.subr.mxu0 0.0
        %3997 = vmatpush2.msra.mxu0 0.0
        %3998 = vmatprep.subr.mxu0 0.0
        %3999 = vmatpush2.msra.mxu0 0.0
        %4000 = vmatprep.subr.mxu0 0.0
        %4001 = vmatpush2.msra.mxu0 0.0
        %4002 = vmatprep.mubr.f32.mxu0 0.0
        %v4003 = vand.u32 %v2528, 4294901760
        %4004 = vmatmul.mubr.f32.gmra.mxu0 %v4003
        %v4005 = vpop.f32.mrf.mxu0
        %v4006 = vadd.f32 %v3894, %v4005
        %v4007 = vpop.f32.mrf.mxu0
        %v4008 = vadd.f32 %v3896, %v4007
        %4009 = vdwg.mxu0
        %4010 = vmatprep.subr.mxu0 0.0
        %4011 = vmatpush1.msra.mxu0 0.0
        %4012 = vmatprep.subr.mxu0 0.0
        %4013 = vmatpush1.msra.mxu0 0.0
        %4014 = vmatprep.subr.mxu0 0.0
        %4015 = vmatpush1.msra.mxu0 0.0
        %4016 = vmatprep.subr.mxu0 0.0
        %4017 = vmatpush1.msra.mxu0 0.0
        %4018 = vmatprep.subr.mxu0 0.0
        %4019 = vmatpush1.msra.mxu0 0.0
        %4020 = vmatprep.subr.mxu0 0.0
        %4021 = vmatpush1.msra.mxu0 0.0
        %4022 = vmatprep.subr.mxu0 0.0
        %4023 = vmatpush1.msra.mxu0 0.0
        %4024 = vmatprep.subr.mxu0 0.0
        %4025 = vmatpush1.msra.mxu0 0.0
        %4026 = vmatprep.subr.mxu0 0.0
        %4027 = vmatpush1.msra.mxu0 0.0
        %4028 = vmatprep.subr.mxu0 0.0
        %4029 = vmatpush1.msra.mxu0 0.0
        %4030 = vmatprep.subr.mxu0 0.0
        %4031 = vmatpush1.msra.mxu0 0.0
        %4032 = vmatprep.subr.mxu0 0.0
        %4033 = vmatpush1.msra.mxu0 0.0
        %v4034 = vand.u32 %v2525, 4294901760
        %v4035 = vsub.f32 %v2525, %v4034
        %4036 = vmatprep.subr.mxu0 %v4035
        %v4037 = vand.u32 %v2524, 4294901760
        %v4038 = vsub.f32 %v2524, %v4037
        %4039 = vmatpush1.msra.mxu0 %v4038
        %v4040 = vand.u32 %v2523, 4294901760
        %v4041 = vsub.f32 %v2523, %v4040
        %4042 = vmatprep.subr.mxu0 %v4041
        %v4043 = vand.u32 %v2522, 4294901760
        %v4044 = vsub.f32 %v2522, %v4043
        %4045 = vmatpush1.msra.mxu0 %v4044
        %v4046 = vand.u32 %v2521, 4294901760
        %v4047 = vsub.f32 %v2521, %v4046
        %4048 = vmatprep.subr.mxu0 %v4047
        %v4049 = vand.u32 %v2520, 4294901760
        %v4050 = vsub.f32 %v2520, %v4049
        %4051 = vmatpush1.msra.mxu0 %v4050
        %v4052 = vand.u32 %v2519, 4294901760
        %v4053 = vsub.f32 %v2519, %v4052
        %4054 = vmatprep.subr.mxu0 %v4053
        %v4055 = vand.u32 %v2518, 4294901760
        %v4056 = vsub.f32 %v2518, %v4055
        %4057 = vmatpush1.msra.mxu0 %v4056
        %4058 = vmatprep.subr.mxu0 0.0
        %4059 = vmatpush2.msra.mxu0 0.0
        %4060 = vmatprep.subr.mxu0 0.0
        %4061 = vmatpush2.msra.mxu0 0.0
        %4062 = vmatprep.subr.mxu0 0.0
        %4063 = vmatpush2.msra.mxu0 0.0
        %4064 = vmatprep.subr.mxu0 0.0
        %4065 = vmatpush2.msra.mxu0 0.0
        %4066 = vmatprep.subr.mxu0 0.0
        %4067 = vmatpush2.msra.mxu0 0.0
        %4068 = vmatprep.subr.mxu0 0.0
        %4069 = vmatpush2.msra.mxu0 0.0
        %4070 = vmatprep.subr.mxu0 0.0
        %4071 = vmatpush2.msra.mxu0 0.0
        %4072 = vmatprep.subr.mxu0 0.0
        %4073 = vmatpush2.msra.mxu0 0.0
        %4074 = vmatprep.subr.mxu0 0.0
        %4075 = vmatpush2.msra.mxu0 0.0
        %4076 = vmatprep.subr.mxu0 0.0
        %4077 = vmatpush2.msra.mxu0 0.0
        %4078 = vmatprep.subr.mxu0 0.0
        %4079 = vmatpush2.msra.mxu0 0.0
        %4080 = vmatprep.subr.mxu0 0.0
        %4081 = vmatpush2.msra.mxu0 0.0
        %4082 = vmatprep.subr.mxu0 0.0
        %4083 = vmatpush2.msra.mxu0 0.0
        %4084 = vmatprep.subr.mxu0 0.0
        %4085 = vmatpush2.msra.mxu0 0.0
        %4086 = vmatprep.subr.mxu0 0.0
        %4087 = vmatpush2.msra.mxu0 0.0
        %4088 = vmatprep.subr.mxu0 0.0
        %4089 = vmatpush2.msra.mxu0 0.0
        %4090 = vmatprep.mubr.f32.mxu0 0.0
        %v4091 = vand.u32 %v2528, 4294901760
        %v4092 = vsub.f32 %v2528, %v4091
        %4093 = vmatmul.mubr.f32.gmra.mxu0 %v4092
        %v4094 = vpop.f32.mrf.mxu0
        %v4095 = vadd.f32 %v4006, %v4094
        %v4096 = vpop.f32.mrf.mxu0
        %v4097 = vadd.f32 %v4008, %v4096
        %4098 = vdwg.mxu0
        %4099 = vmatprep.subr.mxu0 0.0
        %4100 = vmatpush1.msra.mxu0 0.0
        %4101 = vmatprep.subr.mxu0 0.0
        %4102 = vmatpush1.msra.mxu0 0.0
        %4103 = vmatprep.subr.mxu0 0.0
        %4104 = vmatpush1.msra.mxu0 0.0
        %4105 = vmatprep.subr.mxu0 0.0
        %4106 = vmatpush1.msra.mxu0 0.0
        %4107 = vmatprep.subr.mxu0 0.0
        %4108 = vmatpush1.msra.mxu0 0.0
        %4109 = vmatprep.subr.mxu0 0.0
        %4110 = vmatpush1.msra.mxu0 0.0
        %4111 = vmatprep.subr.mxu0 0.0
        %4112 = vmatpush1.msra.mxu0 0.0
        %4113 = vmatprep.subr.mxu0 0.0
        %4114 = vmatpush1.msra.mxu0 0.0
        %4115 = vmatprep.subr.mxu0 0.0
        %4116 = vmatpush1.msra.mxu0 0.0
        %4117 = vmatprep.subr.mxu0 0.0
        %4118 = vmatpush1.msra.mxu0 0.0
        %4119 = vmatprep.subr.mxu0 0.0
        %4120 = vmatpush1.msra.mxu0 0.0
        %4121 = vmatprep.subr.mxu0 0.0
        %4122 = vmatpush1.msra.mxu0 0.0
        %v4123 = vand.u32 %v2525, 4294901760
        %4124 = vmatprep.subr.mxu0 %v4123
        %v4125 = vand.u32 %v2524, 4294901760
        %4126 = vmatpush1.msra.mxu0 %v4125
        %v4127 = vand.u32 %v2523, 4294901760
        %4128 = vmatprep.subr.mxu0 %v4127
        %v4129 = vand.u32 %v2522, 4294901760
        %4130 = vmatpush1.msra.mxu0 %v4129
        %v4131 = vand.u32 %v2521, 4294901760
        %4132 = vmatprep.subr.mxu0 %v4131
        %v4133 = vand.u32 %v2520, 4294901760
        %4134 = vmatpush1.msra.mxu0 %v4133
        %v4135 = vand.u32 %v2519, 4294901760
        %4136 = vmatprep.subr.mxu0 %v4135
        %v4137 = vand.u32 %v2518, 4294901760
        %4138 = vmatpush1.msra.mxu0 %v4137
        %4139 = vmatprep.subr.mxu0 0.0
        %4140 = vmatpush2.msra.mxu0 0.0
        %4141 = vmatprep.subr.mxu0 0.0
        %4142 = vmatpush2.msra.mxu0 0.0
        %4143 = vmatprep.subr.mxu0 0.0
        %4144 = vmatpush2.msra.mxu0 0.0
        %4145 = vmatprep.subr.mxu0 0.0
        %4146 = vmatpush2.msra.mxu0 0.0
        %4147 = vmatprep.subr.mxu0 0.0
        %4148 = vmatpush2.msra.mxu0 0.0
        %4149 = vmatprep.subr.mxu0 0.0
        %4150 = vmatpush2.msra.mxu0 0.0
        %4151 = vmatprep.subr.mxu0 0.0
        %4152 = vmatpush2.msra.mxu0 0.0
        %4153 = vmatprep.subr.mxu0 0.0
        %4154 = vmatpush2.msra.mxu0 0.0
        %4155 = vmatprep.subr.mxu0 0.0
        %4156 = vmatpush2.msra.mxu0 0.0
        %4157 = vmatprep.subr.mxu0 0.0
        %4158 = vmatpush2.msra.mxu0 0.0
        %4159 = vmatprep.subr.mxu0 0.0
        %4160 = vmatpush2.msra.mxu0 0.0
        %4161 = vmatprep.subr.mxu0 0.0
        %4162 = vmatpush2.msra.mxu0 0.0
        %4163 = vmatprep.subr.mxu0 0.0
        %4164 = vmatpush2.msra.mxu0 0.0
        %4165 = vmatprep.subr.mxu0 0.0
        %4166 = vmatpush2.msra.mxu0 0.0
        %4167 = vmatprep.subr.mxu0 0.0
        %4168 = vmatpush2.msra.mxu0 0.0
        %4169 = vmatprep.subr.mxu0 0.0
        %4170 = vmatpush2.msra.mxu0 0.0
        %4171 = vmatprep.mubr.f32.mxu0 0.0
        %v4172 = vand.u32 %v2528, 4294901760
        %v4173 = vsub.f32 %v2528, %v4172
        %v4174 = vand.u32 %v4173, 4294901760
        %4175 = vmatmul.mubr.f32.gmra.mxu0 %v4174
        %v4176 = vpop.f32.mrf.mxu0
        %v4177 = vadd.f32 %v4095, %v4176
        %v4178 = vpop.f32.mrf.mxu0
        %v4179 = vadd.f32 %v4097, %v4178
        %4180 = vdwg.mxu0
        %4181 = vmatprep.subr.mxu0 0.0
        %4182 = vmatpush1.msra.mxu0 0.0
        %4183 = vmatprep.subr.mxu0 0.0
        %4184 = vmatpush1.msra.mxu0 0.0
        %4185 = vmatprep.subr.mxu0 0.0
        %4186 = vmatpush1.msra.mxu0 0.0
        %4187 = vmatprep.subr.mxu0 0.0
        %4188 = vmatpush1.msra.mxu0 0.0
        %4189 = vmatprep.subr.mxu0 0.0
        %4190 = vmatpush1.msra.mxu0 0.0
        %4191 = vmatprep.subr.mxu0 0.0
        %4192 = vmatpush1.msra.mxu0 0.0
        %4193 = vmatprep.subr.mxu0 0.0
        %4194 = vmatpush1.msra.mxu0 0.0
        %4195 = vmatprep.subr.mxu0 0.0
        %4196 = vmatpush1.msra.mxu0 0.0
        %4197 = vmatprep.subr.mxu0 0.0
        %4198 = vmatpush1.msra.mxu0 0.0
        %4199 = vmatprep.subr.mxu0 0.0
        %4200 = vmatpush1.msra.mxu0 0.0
        %4201 = vmatprep.subr.mxu0 0.0
        %4202 = vmatpush1.msra.mxu0 0.0
        %4203 = vmatprep.subr.mxu0 0.0
        %4204 = vmatpush1.msra.mxu0 0.0
        %v4205 = vand.u32 %v2525, 4294901760
        %v4206 = vsub.f32 %v2525, %v4205
        %v4207 = vand.u32 %v4206, 4294901760
        %4208 = vmatprep.subr.mxu0 %v4207
        %v4209 = vand.u32 %v2524, 4294901760
        %v4210 = vsub.f32 %v2524, %v4209
        %v4211 = vand.u32 %v4210, 4294901760
        %4212 = vmatpush1.msra.mxu0 %v4211
        %v4213 = vand.u32 %v2523, 4294901760
        %v4214 = vsub.f32 %v2523, %v4213
        %v4215 = vand.u32 %v4214, 4294901760
        %4216 = vmatprep.subr.mxu0 %v4215
        %v4217 = vand.u32 %v2522, 4294901760
        %v4218 = vsub.f32 %v2522, %v4217
        %v4219 = vand.u32 %v4218, 4294901760
        %4220 = vmatpush1.msra.mxu0 %v4219
        %v4221 = vand.u32 %v2521, 4294901760
        %v4222 = vsub.f32 %v2521, %v4221
        %v4223 = vand.u32 %v4222, 4294901760
        %4224 = vmatprep.subr.mxu0 %v4223
        %v4225 = vand.u32 %v2520, 4294901760
        %v4226 = vsub.f32 %v2520, %v4225
        %v4227 = vand.u32 %v4226, 4294901760
        %4228 = vmatpush1.msra.mxu0 %v4227
        %v4229 = vand.u32 %v2519, 4294901760
        %v4230 = vsub.f32 %v2519, %v4229
        %v4231 = vand.u32 %v4230, 4294901760
        %4232 = vmatprep.subr.mxu0 %v4231
        %v4233 = vand.u32 %v2518, 4294901760
        %v4234 = vsub.f32 %v2518, %v4233
        %v4235 = vand.u32 %v4234, 4294901760
        %4236 = vmatpush1.msra.mxu0 %v4235
        %4237 = vmatprep.subr.mxu0 0.0
        %4238 = vmatpush2.msra.mxu0 0.0
        %4239 = vmatprep.subr.mxu0 0.0
        %4240 = vmatpush2.msra.mxu0 0.0
        %4241 = vmatprep.subr.mxu0 0.0
        %4242 = vmatpush2.msra.mxu0 0.0
        %4243 = vmatprep.subr.mxu0 0.0
        %4244 = vmatpush2.msra.mxu0 0.0
        %4245 = vmatprep.subr.mxu0 0.0
        %4246 = vmatpush2.msra.mxu0 0.0
        %4247 = vmatprep.subr.mxu0 0.0
        %4248 = vmatpush2.msra.mxu0 0.0
        %4249 = vmatprep.subr.mxu0 0.0
        %4250 = vmatpush2.msra.mxu0 0.0
        %4251 = vmatprep.subr.mxu0 0.0
        %4252 = vmatpush2.msra.mxu0 0.0
        %4253 = vmatprep.subr.mxu0 0.0
        %4254 = vmatpush2.msra.mxu0 0.0
        %4255 = vmatprep.subr.mxu0 0.0
        %4256 = vmatpush2.msra.mxu0 0.0
        %4257 = vmatprep.subr.mxu0 0.0
        %4258 = vmatpush2.msra.mxu0 0.0
        %4259 = vmatprep.subr.mxu0 0.0
        %4260 = vmatpush2.msra.mxu0 0.0
        %4261 = vmatprep.subr.mxu0 0.0
        %4262 = vmatpush2.msra.mxu0 0.0
        %4263 = vmatprep.subr.mxu0 0.0
        %4264 = vmatpush2.msra.mxu0 0.0
        %4265 = vmatprep.subr.mxu0 0.0
        %4266 = vmatpush2.msra.mxu0 0.0
        %4267 = vmatprep.subr.mxu0 0.0
        %4268 = vmatpush2.msra.mxu0 0.0
        %4269 = vmatprep.mubr.f32.mxu0 0.0
        %v4270 = vand.u32 %v2528, 4294901760
        %4271 = vmatmul.mubr.f32.gmra.mxu0 %v4270
        %v4272 = vpop.f32.mrf.mxu0
        %v4273 = vadd.f32 %v4177, %v4272
        %v4274 = vpop.f32.mrf.mxu0
        %v4275 = vadd.f32 %v4179, %v4274
        %4276 = vdwg.mxu0
        %4277 = vmatprep.subr.mxu0 0.0
        %4278 = vmatpush1.msra.mxu0 0.0
        %4279 = vmatprep.subr.mxu0 0.0
        %4280 = vmatpush1.msra.mxu0 0.0
        %4281 = vmatprep.subr.mxu0 0.0
        %4282 = vmatpush1.msra.mxu0 0.0
        %4283 = vmatprep.subr.mxu0 0.0
        %4284 = vmatpush1.msra.mxu0 0.0
        %4285 = vmatprep.subr.mxu0 0.0
        %4286 = vmatpush1.msra.mxu0 0.0
        %4287 = vmatprep.subr.mxu0 0.0
        %4288 = vmatpush1.msra.mxu0 0.0
        %4289 = vmatprep.subr.mxu0 0.0
        %4290 = vmatpush1.msra.mxu0 0.0
        %4291 = vmatprep.subr.mxu0 0.0
        %4292 = vmatpush1.msra.mxu0 0.0
        %4293 = vmatprep.subr.mxu0 0.0
        %4294 = vmatpush1.msra.mxu0 0.0
        %4295 = vmatprep.subr.mxu0 0.0
        %4296 = vmatpush1.msra.mxu0 0.0
        %4297 = vmatprep.subr.mxu0 0.0
        %4298 = vmatpush1.msra.mxu0 0.0
        %4299 = vmatprep.subr.mxu0 0.0
        %4300 = vmatpush1.msra.mxu0 0.0
        %v4301 = vand.u32 %v2525, 4294901760
        %4302 = vmatprep.subr.mxu0 %v4301
        %v4303 = vand.u32 %v2524, 4294901760
        %4304 = vmatpush1.msra.mxu0 %v4303
        %v4305 = vand.u32 %v2523, 4294901760
        %4306 = vmatprep.subr.mxu0 %v4305
        %v4307 = vand.u32 %v2522, 4294901760
        %4308 = vmatpush1.msra.mxu0 %v4307
        %v4309 = vand.u32 %v2521, 4294901760
        %4310 = vmatprep.subr.mxu0 %v4309
        %v4311 = vand.u32 %v2520, 4294901760
        %4312 = vmatpush1.msra.mxu0 %v4311
        %v4313 = vand.u32 %v2519, 4294901760
        %4314 = vmatprep.subr.mxu0 %v4313
        %v4315 = vand.u32 %v2518, 4294901760
        %4316 = vmatpush1.msra.mxu0 %v4315
        %4317 = vmatprep.subr.mxu0 0.0
        %4318 = vmatpush2.msra.mxu0 0.0
        %4319 = vmatprep.subr.mxu0 0.0
        %4320 = vmatpush2.msra.mxu0 0.0
        %4321 = vmatprep.subr.mxu0 0.0
        %4322 = vmatpush2.msra.mxu0 0.0
        %4323 = vmatprep.subr.mxu0 0.0
        %4324 = vmatpush2.msra.mxu0 0.0
        %4325 = vmatprep.subr.mxu0 0.0
        %4326 = vmatpush2.msra.mxu0 0.0
        %4327 = vmatprep.subr.mxu0 0.0
        %4328 = vmatpush2.msra.mxu0 0.0
        %4329 = vmatprep.subr.mxu0 0.0
        %4330 = vmatpush2.msra.mxu0 0.0
        %4331 = vmatprep.subr.mxu0 0.0
        %4332 = vmatpush2.msra.mxu0 0.0
        %4333 = vmatprep.subr.mxu0 0.0
        %4334 = vmatpush2.msra.mxu0 0.0
        %4335 = vmatprep.subr.mxu0 0.0
        %4336 = vmatpush2.msra.mxu0 0.0
        %4337 = vmatprep.subr.mxu0 0.0
        %4338 = vmatpush2.msra.mxu0 0.0
        %4339 = vmatprep.subr.mxu0 0.0
        %4340 = vmatpush2.msra.mxu0 0.0
        %4341 = vmatprep.subr.mxu0 0.0
        %4342 = vmatpush2.msra.mxu0 0.0
        %4343 = vmatprep.subr.mxu0 0.0
        %4344 = vmatpush2.msra.mxu0 0.0
        %4345 = vmatprep.subr.mxu0 0.0
        %4346 = vmatpush2.msra.mxu0 0.0
        %4347 = vmatprep.subr.mxu0 0.0
        %4348 = vmatpush2.msra.mxu0 0.0
        %4349 = vmatprep.mubr.f32.mxu0 0.0
        %v4350 = vand.u32 %v2528, 4294901760
        %4351 = vmatmul.mubr.f32.gmra.mxu0 %v4350
        %v4352 = vpop.f32.mrf.mxu0
        %v4353 = vadd.f32 %v4273, %v4352
        %v4354 = vpop.f32.mrf.mxu0
        %v4355 = vadd.f32 %v4275, %v4354
        %4356 = vdwg.mxu0
        %4357 = vst [vmem:[%s367] sm:$0xff] %v4353
        %4358 = vst [vmem:[%s367 + $0x8] sm:$0xff] %v4355
        %s4359 = sand.u32 %s252, 1
        %s4360 = scalar_lea.sflag [#allocation5], %s4359
        %s4361 = sand.u32 %s252, 1
        %s4362 = smul.addr %s4361, 16
        %s4363 = scalar_lea.vmem [#allocation4], %s4362
        // Predicated region
        $region61: #{tpu_custom_call.1} parent=59 // pred_check
          %p4364 = pneg %p262
        $region62: #{tpu_custom_call.1} parent=59 // pred_check_branch
          %4366 = sbr.rel (%p4364) target = $region64
        $region63: #{tpu_custom_call.1} parent=59 // pred_region
          %s4368 = ssub.s32 256, 256
          %4369 = vsyncadd %s4360, %s4368
          %s4370 = smul.addr %s24, 2
          %s4371 = smul.addr %s4370, 128
          %s4372 = scalar_lea.hbm %s10, %s4371
          %s4374 = sshll.u32 %s4363, 4
          %s4375 = int_to_ptr.vmem [resolvable:$true] %s4374
          %4377 = dma.vmem_to_hbm [thread:$0]  %s4375, 256, %s4372, %s4360
        $region64: #{tpu_custom_call.1} parent=59 // pred_fallthru
          _
      $region60: #{tpu_custom_call.1} parent=5 // pred_fallthru
        _
      %p4378 = scmp.le.s32.totalorder 2, %s19
      // Predicated region
      $region65: #{tpu_custom_call.1} parent=5 // pred_check
        %p4379 = pneg %p4378
      $region66: #{tpu_custom_call.1} parent=5 // pred_check_branch
        %4381 = sbr.rel (%p4379) target = $region68
      $region67: #{tpu_custom_call.1} parent=5 // pred_region
        %s4382 = ssub.s32 %s19, 2
        // Predicated region
        $region69: #{tpu_custom_call.1} parent=67 // pred_check
          %p4383 = pneg %p268
        $region70: #{tpu_custom_call.1} parent=67 // pred_check_branch
          %4385 = sbr.rel (%p4383) target = $region72
        $region71: #{tpu_custom_call.1} parent=67 // pred_region
          %s4386 = sand.u32 %s253, 1
          %s4387 = scalar_lea.sflag [#allocation5], %s4386
          %s4388 = sand.u32 %s253, 1
          %s4389 = smul.addr %s4388, 16
          %s4390 = scalar_lea.vmem [#allocation4], %s4389
          %4391 = dma.done %s4387, 256
        $region72: #{tpu_custom_call.1} parent=67 // pred_fallthru
          _
      $region68: #{tpu_custom_call.1} parent=5 // pred_fallthru
        _
    $region6: #{tpu_custom_call.1} parent=1 // loop_footer
      %s23 = sadd.s32 1, %s19
    $region7: #{tpu_custom_call.1} parent=1 // loop_footer_branch
      %18 = sbr.rel target = $region3
    $region8: #{tpu_custom_call.1} parent=1 // loop_exit
      _
    %4392 = vsyncpa [#allocation5], 1
    %s4393 = scalar_lea.sflag [#allocation5], 1
    %4394 = vsyncpa %s4393, 1

</llo_original>
